<compile_context>
chip_gen: v5e
topology: v5e:2x2
jax: 0.10.0
libtpu: 0.0.40
codegen_flags: <defaults>
</compile_context>

<pallas_src>
import numpy as np
import jax
import jax.numpy as jnp
from jax.experimental import pallas as pl
from jax.experimental.pallas import tpu as pltpu

# ----------------------------- hyperparameters ------------------------------
INPUT_DIM = 4
OUTPUT_DIM = 3
HIDDEN_DIM = 32
LATENT_DIM = 10
U_DIM = LATENT_DIM // 5          # int(latent_dim / 5)
NUM_SAMPLES = 2
POST_TX_LEN = 8                  # len(time_out)
THETA, MU, SIGMA = 1.0, 0.0, 0.1

TREAT_HID, TREAT_DEPTH = 20, 4   # treatment_fun MLP
DRIFT_HID, DRIFT_DEPTH = 4 * LATENT_DIM, 4   # sde_drift MLP
OUT_DEPTH = 3                    # output_fun MLP depth

BATCH = 2
SEQ_IN = 6

# ----------------------------- TPU layout knobs ------------------------------
GATE = 128                       # one full 128-lane vreg block per GRU gate
B_PAD = 8                        # encoder rows padded to sublane granularity
N_PAD = 8                        # SDE path rows padded to sublane granularity
MXU_DTYPE = jnp.bfloat16         # matmul operand dtype (accumulate in f32)


def _full_spec(shape):
    zeros = (0,) * len(shape)
    return pl.BlockSpec(shape, lambda *_: zeros)


# ------------------------------ fused kernel --------------------------------
def _make_fused_kernel(T_in, B, Tout):
    G, L = GATE, LATENT_DIM
    N = B * NUM_SAMPLES

    def kernel(dts_ref, xt_ref, tstep_ref, txcol_ref, dw_ref,
               Wi, Wh, bi, bh, Wlat, blat,
               Wt0, bt0, WtH, btH, Wto, bto,
               Wd0a, Wd0b, bd0, WdH, bdH, Wdo, bdo,
               W0, b0, WH, bH, Wo, bo,
               z_ref, lat_ref, logq_ref, pred_ref,
               gi_scr):

        def lin(x, W, b):
            # bf16 MXU operands, f32 accumulation, f32 bias add / activations
            return jnp.dot(x.astype(W.dtype), W,
                           preferred_element_type=jnp.float32) + b

        # ---------------- RNNEncoder: GRU + hid2lat ----------------
        # Input-path matmul hoisted out of the recurrence:
        # one (T_in*B_PAD, Dx) @ (Dx, 3*G); gates [r | z | n] at lane offsets 0/G/2G.
        gi_scr[...] = lin(xt_ref[...], Wi[...], bi[...])
        Wh_v, bh_v = Wh[...], bh[...]
        h = jnp.zeros((B_PAD, G), jnp.float32)
        for t in range(T_in):
            gi = gi_scr[pl.ds(t * B_PAD, B_PAD), :]            # 8-aligned sublane view
            gh = jnp.dot(h.astype(Wh_v.dtype), Wh_v,
                         preferred_element_type=jnp.float32) + bh_v
            r = jax.nn.sigmoid(gi[:, 0:G] + gh[:, 0:G])        # whole-vreg lane slices
            zg = jax.nn.sigmoid(gi[:, G:2 * G] + gh[:, G:2 * G])
            n = jnp.tanh(gi[:, 2 * G:3 * G] + r * gh[:, 2 * G:3 * G])
            h = (1.0 - zg) * n + zg * h
        z0 = lin(h, Wlat[...], blat[...])                      # (B_PAD, L); rows >= B junk
        z_ref[...] = z0

        # -------- treatment MLP hoisted over all Euler step times --------
        # Linear(1, 20) is just a broadcast multiply (no K=1 matmul needed).
        ht = jnp.maximum(tstep_ref[...] * Wt0[...] + bt0[...], 0.0)    # (Tout-1, 20)
        for i in range(TREAT_DEPTH):
            ht = jnp.maximum(lin(ht, WtH[i], btH[i]), 0.0)
        u_all = lin(ht, Wto[...], bto[...])                            # (Tout-1, U_DIM)
        # u_t @ Wd0b == Tx_col * (u @ Wd0b): precompute per-step contributions.
        Wd0b_v = Wd0b[...]
        v_all = jnp.dot(u_all.astype(Wd0b_v.dtype), Wd0b_v,
                        preferred_element_type=jnp.float32)            # (Tout-1, DRIFT_HID)
        T_col = txcol_ref[...]                                         # (N_PAD, 1)
        tv = [T_col * v_all[k:k + 1, :] for k in range(Tout - 1)]      # (N_PAD, DRIFT_HID) each

        # ---------------- Euler-Maruyama on the augmented SDE ----------------
        # sample-repeat z0 rows (b-major) via sublane concat, zero-pad to N_PAD rows
        rows = [z0[b:b + 1, :] for b in range(B) for _ in range(NUM_SAMPLES)]
        rows.append(jnp.zeros((N_PAD - N, L), jnp.float32))
        y_lat = jnp.concatenate(rows, axis=0)                          # (N_PAD, L)
        logqp = jnp.zeros((N_PAD, 1), jnp.float32)

        # drift-MLP weights loaded ONCE before the unrolled step loop
        Wd0a_v, bd0_v = Wd0a[...], bd0[...]
        Wdo_v, bdo_v = Wdo[...], bdo[...]
        WdH_l = [WdH[i] for i in range(DRIFT_DEPTH)]
        bdH_l = [bdH[i] for i in range(DRIFT_DEPTH)]

        lat_ref[0] = y_lat
        logq_ref[0] = logqp
        lat_list = [y_lat]
        for k in range(Tout - 1):
            dt = dts_ref[k]
            hd = jnp.maximum(
                jnp.dot(y_lat.astype(Wd0a_v.dtype), Wd0a_v,
                        preferred_element_type=jnp.float32) + tv[k] + bd0_v, 0.0)
            for Wl, bl in zip(WdH_l, bdH_l):
                hd = jnp.tanh(lin(hd, Wl, bl))
            drift = jnp.dot(hd.astype(Wdo_v.dtype), Wdo_v,
                            preferred_element_type=jnp.float32) + bdo_v
            h_ou = THETA * (MU - y_lat)                                # h(t, y)
            f = drift - h_ou                                           # f(t, y, T)
            u_sd = (f - h_ou) * (1.0 / SIGMA)                          # literal torch: (f - h)/g
            f_logqp = 0.5 * jnp.sum(u_sd * u_sd, axis=1, keepdims=True)
            y_lat = y_lat + f * dt + SIGMA * dw_ref[k]                 # diagonal noise
            logqp = logqp + f_logqp * dt
            lat_ref[k + 1] = y_lat                                     # leading-axis store
            logq_ref[k + 1] = logqp
            lat_list.append(y_lat)

        # ---------------- output MLP on all latent states ----------------
        lat2d = jnp.concatenate(lat_list, axis=0)                      # (Tout*N_PAD, L)
        ho = jnp.maximum(lin(lat2d, W0[...], b0[...]), 0.0)
        for i in range(OUT_DEPTH):
            # nn.Dropout(0.5) is identity in eval mode
            ho = jnp.maximum(lin(ho, WH[i], bH[i]), 0.0)
        pred_ref[...] = lin(ho, Wo[...], bo[...])

    return kernel


# ------------------------------ full forward ---------------------------------
def sde_vae_forward(params, x, Tx, time_in, time_out, noise_key):
    B, T_in, Din = x.shape
    Dx = Din + 1
    S = NUM_SAMPLES
    N = B * S

    # Neural_SDE_integrator time handling
    t = time_out[0] if time_out.ndim > 1 else time_out
    t = t.reshape(-1).astype(jnp.float32)
    Tout = int(t.shape[0])
    dts = t[1:] - t[:-1]                                           # (Tout-1,)

    # RNNEncoder input: append time deltas, time-major, batch rows padded to B_PAD
    t_diff = jnp.concatenate(
        [jnp.zeros((B, 1), jnp.float32), time_in[:, 1:] - time_in[:, :-1]], axis=1)
    xt = jnp.concatenate([x, t_diff[..., None]], axis=-1)          # (B, T_in, Dx)
    xt = jnp.transpose(xt, (1, 0, 2))                              # (T_in, B, Dx)
    xt = jnp.zeros((T_in, B_PAD, Dx), jnp.float32).at[:, :B, :].set(xt)
    xt = xt.reshape(T_in * B_PAD, Dx)

    Tx_col = jnp.zeros((N_PAD, 1), jnp.float32).at[:N, 0].set(
        jnp.repeat(Tx.astype(jnp.float32), S))                     # (N_PAD, 1)

    # TODO(synk): torchsde BrownianInterval RNG not reproducible; dW ~ N(0, dt) via jax PRNG.
    dW = (jax.random.normal(noise_key, (Tout - 1, N_PAD, LATENT_DIM), jnp.float32)
          * jnp.sqrt(dts)[:, None, None])
    t_steps = t[:-1][:, None]                                      # (Tout-1, 1)

    pe, ps, po = params["enc"], params["sde"], params["out"]
    arrs = (dts, xt, t_steps, Tx_col, dW,
            pe["Wi"], pe["Wh"], pe["bi"], pe["bh"], pe["Wlat"], pe["blat"],
            ps["Wt0"], ps["bt0"], ps["WtH"], ps["btH"], ps["Wto"], ps["bto"],
            ps["Wd0a"], ps["Wd0b"], ps["bd0"], ps["WdH"], ps["bdH"],
            ps["Wdo"], ps["bdo"],
            po["W0"], po["b0"], po["WH"], po["bH"], po["Wo"], po["bo"])

    in_specs = [pl.BlockSpec(memory_space=pltpu.MemorySpace.SMEM)]  # dts -> SMEM scalars
    in_specs += [_full_spec(a.shape) for a in arrs[1:]]

    kernel = _make_fused_kernel(T_in, B, Tout)
    z_pad, lat_traj, logq_traj, pred_flat = pl.pallas_call(
        kernel,
        out_shape=(jax.ShapeDtypeStruct((B_PAD, LATENT_DIM), jnp.float32),
                   jax.ShapeDtypeStruct((Tout, N_PAD, LATENT_DIM), jnp.float32),
                   jax.ShapeDtypeStruct((Tout, N_PAD, 1), jnp.float32),
                   jax.ShapeDtypeStruct((Tout * N_PAD, OUTPUT_DIM), jnp.float32)),
        grid_spec=pltpu.PrefetchScalarGridSpec(
            num_scalar_prefetch=0,
            grid=(1,),
            in_specs=in_specs,
            out_specs=(_full_spec((B_PAD, LATENT_DIM)),
                       _full_spec((Tout, N_PAD, LATENT_DIM)),
                       _full_spec((Tout, N_PAD, 1)),
                       _full_spec((Tout * N_PAD, OUTPUT_DIM))),
            scratch_shapes=[
                pltpu.VMEM((T_in * B_PAD, 3 * GATE), jnp.float32),  # hoisted x@Wi gates
            ]),
        compiler_params=pltpu.CompilerParams(dimension_semantics=("arbitrary",)),
    )(*arrs)

    # glue exactly mirroring the PyTorch module (incl. its literal raw reshapes)
    z_mean = z_pad[:B]                                             # (B, L)
    z = jnp.repeat(z_mean[:, None, :], S, axis=1)                  # (B, S, L)
    lat = lat_traj[:, :N, :]                                       # time-major (Tout, N, L)
    latent_traj = lat.reshape(B, S, Tout, LATENT_DIM)              # literal raw reshape
    logq_path = logq_traj[:, :N, 0].reshape(B, S, Tout)            # literal raw reshape
    logqp = logq_path[:, :, -1]
    predicted_traj = (pred_flat.reshape(Tout, N_PAD, OUTPUT_DIM)[:, :N, :]
                      .reshape(B, S, Tout, OUTPUT_DIM))
    return z, latent_traj, logqp, predicted_traj


# ------------------------------ parameters -----------------------------------
def init_params():
    key = jax.random.PRNGKey(42)
    it = iter(jax.random.split(key, 32))

    def U(shape, bound):
        return jax.random.uniform(next(it), shape, jnp.float32, -bound, bound)

    Dx, H = INPUT_DIM + 1, HIDDEN_DIM
    gb = 1.0 / np.sqrt(H)
    enc = dict(
        # fused GRU layout: gates [r | z | n] stacked along the output dim
        Wi=U((Dx, 3 * H), gb), Wh=U((H, 3 * H), gb),
        bi=U((1, 3 * H), gb), bh=U((1, 3 * H), gb),
        Wlat=U((H, LATENT_DIM), gb), blat=U((1, LATENT_DIM), gb),
    )
    tb_in, tb_h = 1.0, 1.0 / np.sqrt(TREAT_HID)
    db_in, db_h = 1.0 / np.sqrt(LATENT_DIM + U_DIM), 1.0 / np.sqrt(DRIFT_HID)
    sde = dict(
        Wt0=U((1, TREAT_HID), tb_in), bt0=U((1, TREAT_HID), tb_in),
        WtH=U((TREAT_DEPTH, TREAT_HID, TREAT_HID), tb_h),
        btH=U((TREAT_DEPTH, 1, TREAT_HID), tb_h),
        Wto=U((TREAT_HID, U_DIM), tb_h), bto=U((1, U_DIM), tb_h),
        Wd0a=U((LATENT_DIM, DRIFT_HID), db_in),
        Wd0b=U((U_DIM, DRIFT_HID), db_in),
        bd0=U((1, DRIFT_HID), db_in),
        WdH=U((DRIFT_DEPTH, DRIFT_HID, DRIFT_HID), db_h),
        bdH=U((DRIFT_DEPTH, 1, DRIFT_HID), db_h),
        Wdo=U((DRIFT_HID, LATENT_DIM), db_h), bdo=U((1, LATENT_DIM), db_h),
    )
    ob_in, ob_h = 1.0 / np.sqrt(LATENT_DIM), 1.0 / np.sqrt(HIDDEN_DIM)
    out = dict(
        W0=U((LATENT_DIM, HIDDEN_DIM), ob_in), b0=U((1, HIDDEN_DIM), ob_in),
        WH=U((OUT_DEPTH, HIDDEN_DIM, HIDDEN_DIM), ob_h),
        bH=U((OUT_DEPTH, 1, HIDDEN_DIM), ob_h),
        Wo=U((HIDDEN_DIM, OUTPUT_DIM), ob_h), bo=U((1, OUTPUT_DIM), ob_h),
    )
    return dict(enc=enc, sde=sde, out=out)


def pack_params(p):
    """TPU layout packing: 128-lane-per-gate GRU weights, bf16 matmul operands."""
    e, s, o = p["enc"], p["sde"], p["out"]
    H, L = HIDDEN_DIM, LATENT_DIM

    def pad_gates(W, rows_out):
        rows_in = W.shape[0]
        Wp = jnp.zeros((rows_out, 3 * GATE), jnp.float32)
        for g in range(3):
            Wp = Wp.at[:rows_in, g * GATE:g * GATE + H].set(W[:, g * H:(g + 1) * H])
        return Wp

    enc = dict(
        Wi=pad_gates(e["Wi"], e["Wi"].shape[0]).astype(MXU_DTYPE),
        Wh=pad_gates(e["Wh"], GATE).astype(MXU_DTYPE),
        bi=pad_gates(e["bi"], 1),                       # biases stay f32
        bh=pad_gates(e["bh"], 1),
        Wlat=jnp.zeros((GATE, L), jnp.float32).at[:H].set(e["Wlat"]).astype(MXU_DTYPE),
        blat=e["blat"],
    )
    sde = dict(
        Wt0=s["Wt0"], bt0=s["bt0"],                     # elementwise first layer: f32
        WtH=s["WtH"].astype(MXU_DTYPE), btH=s["btH"],
        Wto=s["Wto"].astype(MXU_DTYPE), bto=s["bto"],
        Wd0a=s["Wd0a"].astype(MXU_DTYPE),
        Wd0b=s["Wd0b"].astype(MXU_DTYPE), bd0=s["bd0"],
        WdH=s["WdH"].astype(MXU_DTYPE), bdH=s["bdH"],
        Wdo=s["Wdo"].astype(MXU_DTYPE), bdo=s["bdo"],
    )
    out = dict(
        W0=o["W0"].astype(MXU_DTYPE), b0=o["b0"],
        WH=o["WH"].astype(MXU_DTYPE), bH=o["bH"],
        Wo=o["Wo"].astype(MXU_DTYPE), bo=o["bo"],
    )
    return dict(enc=enc, sde=sde, out=out)


# --------------------------------- main ---------------------------------------
if __name__ == "__main__":
    params = pack_params(init_params())

    key = jax.random.PRNGKey(0)
    kx, kt, ktx, kn = jax.random.split(key, 4)
    x = jax.random.normal(kx, (BATCH, SEQ_IN, INPUT_DIM), jnp.float32)
    time_in = jnp.cumsum(
        jax.random.uniform(kt, (BATCH, SEQ_IN), jnp.float32, 0.05, 0.15), axis=1)
    time_out = jnp.arange(POST_TX_LEN, dtype=jnp.float32) * 0.05
    Tx = (jax.random.uniform(ktx, (BATCH,), jnp.float32) > 0.5).astype(jnp.float32)

    fwd = jax.jit(sde_vae_forward)
    z, latent_traj, logqp, pred = fwd(params, x, Tx, time_in, time_out, kn)
    jax.block_until_ready((z, latent_traj, logqp, pred))

    assert z.shape == (BATCH, NUM_SAMPLES, LATENT_DIM)
    assert latent_traj.shape == (BATCH, NUM_SAMPLES, POST_TX_LEN, LATENT_DIM)
    assert logqp.shape == (BATCH, NUM_SAMPLES)
    assert pred.shape == (BATCH, NUM_SAMPLES, POST_TX_LEN, OUTPUT_DIM)
    assert bool(jnp.all(jnp.isfinite(latent_traj))) and bool(jnp.all(jnp.isfinite(pred)))
    print("KERNEL_OK")
</pallas_src>

<mosaic_0001>
module attributes {stable_mosaic.version = 11 : i64} {
  func.func @kernel(%arg0: i32, %arg1: memref<7xf32, #tpu.memory_space<smem>>, %arg2: memref<48x5xf32, #tpu.memory_space<vmem>>, %arg3: memref<7x1xf32, #tpu.memory_space<vmem>>, %arg4: memref<8x1xf32, #tpu.memory_space<vmem>>, %arg5: memref<7x8x10xf32, #tpu.memory_space<vmem>>, %arg6: memref<5x384xbf16, #tpu.memory_space<vmem>>, %arg7: memref<128x384xbf16, #tpu.memory_space<vmem>>, %arg8: memref<1x384xf32, #tpu.memory_space<vmem>>, %arg9: memref<1x384xf32, #tpu.memory_space<vmem>>, %arg10: memref<128x10xbf16, #tpu.memory_space<vmem>>, %arg11: memref<1x10xf32, #tpu.memory_space<vmem>>, %arg12: memref<1x20xf32, #tpu.memory_space<vmem>>, %arg13: memref<1x20xf32, #tpu.memory_space<vmem>>, %arg14: memref<4x20x20xbf16, #tpu.memory_space<vmem>>, %arg15: memref<4x1x20xf32, #tpu.memory_space<vmem>>, %arg16: memref<20x2xbf16, #tpu.memory_space<vmem>>, %arg17: memref<1x2xf32, #tpu.memory_space<vmem>>, %arg18: memref<10x40xbf16, #tpu.memory_space<vmem>>, %arg19: memref<2x40xbf16, #tpu.memory_space<vmem>>, %arg20: memref<1x40xf32, #tpu.memory_space<vmem>>, %arg21: memref<4x40x40xbf16, #tpu.memory_space<vmem>>, %arg22: memref<4x1x40xf32, #tpu.memory_space<vmem>>, %arg23: memref<40x10xbf16, #tpu.memory_space<vmem>>, %arg24: memref<1x10xf32, #tpu.memory_space<vmem>>, %arg25: memref<10x32xbf16, #tpu.memory_space<vmem>>, %arg26: memref<1x32xf32, #tpu.memory_space<vmem>>, %arg27: memref<3x32x32xbf16, #tpu.memory_space<vmem>>, %arg28: memref<3x1x32xf32, #tpu.memory_space<vmem>>, %arg29: memref<32x3xbf16, #tpu.memory_space<vmem>>, %arg30: memref<1x3xf32, #tpu.memory_space<vmem>>, %arg31: memref<8x10xf32, #tpu.memory_space<vmem>>, %arg32: memref<8x8x10xf32, #tpu.memory_space<vmem>>, %arg33: memref<8x8x1xf32, #tpu.memory_space<vmem>>, %arg34: memref<64x3xf32, #tpu.memory_space<vmem>>, %arg35: memref<48x384xf32, #tpu.memory_space<vmem>>) attributes {dimension_semantics = [#tpu.dimension_semantics<arbitrary>], iteration_bounds = array<i64: 1>, scalar_prefetch = 0 : i64, scratch_operands = 1 : i64, tpu.core_type = #tpu.core_type<tc>, window_params = [{transform_indices = @transform_0, window_bounds = array<i64: 7>}, {pipeline_mode = #tpu.pipeline_mode<synchronous>, transform_indices = @transform_1, window_bounds = array<i64: 48, 5>}, {pipeline_mode = #tpu.pipeline_mode<synchronous>, transform_indices = @transform_2, window_bounds = array<i64: 7, 1>}, {pipeline_mode = #tpu.pipeline_mode<synchronous>, transform_indices = @transform_3, window_bounds = array<i64: 8, 1>}, {pipeline_mode = #tpu.pipeline_mode<synchronous>, transform_indices = @transform_4, window_bounds = array<i64: 7, 8, 10>}, {pipeline_mode = #tpu.pipeline_mode<synchronous>, transform_indices = @transform_5, window_bounds = array<i64: 5, 384>}, {pipeline_mode = #tpu.pipeline_mode<synchronous>, transform_indices = @transform_6, window_bounds = array<i64: 128, 384>}, {pipeline_mode = #tpu.pipeline_mode<synchronous>, transform_indices = @transform_7, window_bounds = array<i64: 1, 384>}, {pipeline_mode = #tpu.pipeline_mode<synchronous>, transform_indices = @transform_8, window_bounds = array<i64: 1, 384>}, {pipeline_mode = #tpu.pipeline_mode<synchronous>, transform_indices = @transform_9, window_bounds = array<i64: 128, 10>}, {pipeline_mode = #tpu.pipeline_mode<synchronous>, transform_indices = @transform_10, window_bounds = array<i64: 1, 10>}, {pipeline_mode = #tpu.pipeline_mode<synchronous>, transform_indices = @transform_11, window_bounds = array<i64: 1, 20>}, {pipeline_mode = #tpu.pipeline_mode<synchronous>, transform_indices = @transform_12, window_bounds = array<i64: 1, 20>}, {pipeline_mode = #tpu.pipeline_mode<synchronous>, transform_indices = @transform_13, window_bounds = array<i64: 4, 20, 20>}, {pipeline_mode = #tpu.pipeline_mode<synchronous>, transform_indices = @transform_14, window_bounds = array<i64: 4, 1, 20>}, {pipeline_mode = #tpu.pipeline_mode<synchronous>, transform_indices = @transform_15, window_bounds = array<i64: 20, 2>}, {pipeline_mode = #tpu.pipeline_mode<synchronous>, transform_indices = @transform_16, window_bounds = array<i64: 1, 2>}, {pipeline_mode = #tpu.pipeline_mode<synchronous>, transform_indices = @transform_17, window_bounds = array<i64: 10, 40>}, {pipeline_mode = #tpu.pipeline_mode<synchronous>, transform_indices = @transform_18, window_bounds = array<i64: 2, 40>}, {pipeline_mode = #tpu.pipeline_mode<synchronous>, transform_indices = @transform_19, window_bounds = array<i64: 1, 40>}, {pipeline_mode = #tpu.pipeline_mode<synchronous>, transform_indices = @transform_20, window_bounds = array<i64: 4, 40, 40>}, {pipeline_mode = #tpu.pipeline_mode<synchronous>, transform_indices = @transform_21, window_bounds = array<i64: 4, 1, 40>}, {pipeline_mode = #tpu.pipeline_mode<synchronous>, transform_indices = @transform_22, window_bounds = array<i64: 40, 10>}, {pipeline_mode = #tpu.pipeline_mode<synchronous>, transform_indices = @transform_23, window_bounds = array<i64: 1, 10>}, {pipeline_mode = #tpu.pipeline_mode<synchronous>, transform_indices = @transform_24, window_bounds = array<i64: 10, 32>}, {pipeline_mode = #tpu.pipeline_mode<synchronous>, transform_indices = @transform_25, window_bounds = array<i64: 1, 32>}, {pipeline_mode = #tpu.pipeline_mode<synchronous>, transform_indices = @transform_26, window_bounds = array<i64: 3, 32, 32>}, {pipeline_mode = #tpu.pipeline_mode<synchronous>, transform_indices = @transform_27, window_bounds = array<i64: 3, 1, 32>}, {pipeline_mode = #tpu.pipeline_mode<synchronous>, transform_indices = @transform_28, window_bounds = array<i64: 32, 3>}, {pipeline_mode = #tpu.pipeline_mode<synchronous>, transform_indices = @transform_29, window_bounds = array<i64: 1, 3>}, {pipeline_mode = #tpu.pipeline_mode<synchronous>, transform_indices = @transform_30, window_bounds = array<i64: 8, 10>}, {pipeline_mode = #tpu.pipeline_mode<synchronous>, transform_indices = @transform_31, window_bounds = array<i64: 8, 8, 10>}, {pipeline_mode = #tpu.pipeline_mode<synchronous>, transform_indices = @transform_32, window_bounds = array<i64: 8, 8, 1>}, {pipeline_mode = #tpu.pipeline_mode<synchronous>, transform_indices = @transform_33, window_bounds = array<i64: 64, 3>}]} {
    %c0 = arith.constant 0 : index
    %c0_0 = arith.constant 0 : index
    %0 = vector.load %arg2[%c0, %c0_0] : memref<48x5xf32, #tpu.memory_space<vmem>>, vector<48x5xf32>
    %c0_1 = arith.constant 0 : index
    %c0_2 = arith.constant 0 : index
    %1 = vector.load %arg6[%c0_1, %c0_2] : memref<5x384xbf16, #tpu.memory_space<vmem>>, vector<5x384xbf16>
    %c0_3 = arith.constant 0 : index
    %c0_4 = arith.constant 0 : index
    %2 = vector.load %arg8[%c0_3, %c0_4] : memref<1x384xf32, #tpu.memory_space<vmem>>, vector<1x384xf32>
    %3 = arith.truncf %0 : vector<48x5xf32> to vector<48x5xbf16>
    %cst = arith.constant dense<0.000000e+00> : vector<48x384xf32>
    %4 = tpu.matmul %3, %1, %cst {dimension_numbers = #tpu.dot_dimension_numbers<[1], [0], [0], [1], [0, 0, 1, 1], [], []>} : vector<48x5xbf16>, vector<5x384xbf16>, vector<48x384xf32> -> vector<48x384xf32>
    %5 = vector.broadcast %2 : vector<1x384xf32> to vector<48x384xf32>
    %6 = arith.addf %4, %5 : vector<48x384xf32>
    %c0_5 = arith.constant 0 : index
    %c0_6 = arith.constant 0 : index
    %7 = vector.load %arg35[%c0_5, %c0_6] : memref<48x384xf32, #tpu.memory_space<vmem>>, vector<48x384xf32>
    tpu.vector_store %arg35[%c0_5, %c0_6], %6 {strides = array<i32>} : memref<48x384xf32, #tpu.memory_space<vmem>>, vector<48x384xf32>,
    %c0_7 = arith.constant 0 : index
    %c0_8 = arith.constant 0 : index
    %8 = vector.load %arg7[%c0_7, %c0_8] : memref<128x384xbf16, #tpu.memory_space<vmem>>, vector<128x384xbf16>
    %c0_9 = arith.constant 0 : index
    %c0_10 = arith.constant 0 : index
    %9 = vector.load %arg9[%c0_9, %c0_10] : memref<1x384xf32, #tpu.memory_space<vmem>>, vector<1x384xf32>
    %cst_11 = arith.constant 0.000000e+00 : f32
    %10 = vector.broadcast %cst_11 : f32 to vector<8x128xf32>
    %c0_12 = arith.constant 0 : index
    %c0_13 = arith.constant 0 : index
    %11 = vector.load %arg35[%c0_12, %c0_13] : memref<48x384xf32, #tpu.memory_space<vmem>>, vector<8x384xf32>
    %12 = arith.truncf %10 : vector<8x128xf32> to vector<8x128xbf16>
    %cst_14 = arith.constant dense<0.000000e+00> : vector<8x384xf32>
    %13 = tpu.matmul %12, %8, %cst_14 {dimension_numbers = #tpu.dot_dimension_numbers<[1], [0], [0], [1], [0, 0, 1, 1], [], []>} : vector<8x128xbf16>, vector<128x384xbf16>, vector<8x384xf32> -> vector<8x384xf32>
    %14 = vector.broadcast %9 : vector<1x384xf32> to vector<8x384xf32>
    %15 = arith.addf %13, %14 : vector<8x384xf32>
    %16 = vector.extract_strided_slice %11 {offsets = [0, 0], sizes = [8, 128], strides = [1, 1]} : vector<8x384xf32> to vector<8x128xf32>
    %17 = vector.extract_strided_slice %15 {offsets = [0, 0], sizes = [8, 128], strides = [1, 1]} : vector<8x384xf32> to vector<8x128xf32>
    %18 = arith.addf %16, %17 : vector<8x128xf32>
    %19 = arith.negf %18 : vector<8x128xf32>
    %20 = math.exp %19 : vector<8x128xf32>
    %cst_15 = arith.constant 1.000000e+00 : f32
    %21 = vector.broadcast %cst_15 : f32 to vector<8x128xf32>
    %22 = arith.addf %21, %20 : vector<8x128xf32>
    %23 = arith.divf %21, %22 : vector<8x128xf32>
    %24 = vector.extract_strided_slice %11 {offsets = [0, 128], sizes = [8, 128], strides = [1, 1]} : vector<8x384xf32> to vector<8x128xf32>
    %25 = vector.extract_strided_slice %15 {offsets = [0, 128], sizes = [8, 128], strides = [1, 1]} : vector<8x384xf32> to vector<8x128xf32>
    %26 = arith.addf %24, %25 : vector<8x128xf32>
    %27 = arith.negf %26 : vector<8x128xf32>
    %28 = math.exp %27 : vector<8x128xf32>
    %cst_16 = arith.constant 1.000000e+00 : f32
    %29 = vector.broadcast %cst_16 : f32 to vector<8x128xf32>
    %30 = arith.addf %29, %28 : vector<8x128xf32>
    %31 = arith.divf %29, %30 : vector<8x128xf32>
    %32 = vector.extract_strided_slice %11 {offsets = [0, 256], sizes = [8, 128], strides = [1, 1]} : vector<8x384xf32> to vector<8x128xf32>
    %33 = vector.extract_strided_slice %15 {offsets = [0, 256], sizes = [8, 128], strides = [1, 1]} : vector<8x384xf32> to vector<8x128xf32>
    %34 = arith.mulf %23, %33 : vector<8x128xf32>
    %35 = arith.addf %32, %34 : vector<8x128xf32>
    %36 = math.tanh %35 : vector<8x128xf32>
    %cst_17 = arith.constant 1.000000e+00 : f32
    %37 = vector.broadcast %cst_17 : f32 to vector<8x128xf32>
    %38 = arith.subf %37, %31 : vector<8x128xf32>
    %39 = arith.mulf %38, %36 : vector<8x128xf32>
    %40 = arith.mulf %31, %10 : vector<8x128xf32>
    %41 = arith.addf %39, %40 : vector<8x128xf32>
    %c8 = arith.constant 8 : index
    %c0_18 = arith.constant 0 : index
    %42 = vector.load %arg35[%c8, %c0_18] : memref<48x384xf32, #tpu.memory_space<vmem>>, vector<8x384xf32>
    %43 = arith.truncf %41 : vector<8x128xf32> to vector<8x128xbf16>
    %cst_19 = arith.constant dense<0.000000e+00> : vector<8x384xf32>
    %44 = tpu.matmul %43, %8, %cst_19 {dimension_numbers = #tpu.dot_dimension_numbers<[1], [0], [0], [1], [0, 0, 1, 1], [], []>} : vector<8x128xbf16>, vector<128x384xbf16>, vector<8x384xf32> -> vector<8x384xf32>
    %45 = vector.broadcast %9 : vector<1x384xf32> to vector<8x384xf32>
    %46 = arith.addf %44, %45 : vector<8x384xf32>
    %47 = vector.extract_strided_slice %42 {offsets = [0, 0], sizes = [8, 128], strides = [1, 1]} : vector<8x384xf32> to vector<8x128xf32>
    %48 = vector.extract_strided_slice %46 {offsets = [0, 0], sizes = [8, 128], strides = [1, 1]} : vector<8x384xf32> to vector<8x128xf32>
    %49 = arith.addf %47, %48 : vector<8x128xf32>
    %50 = arith.negf %49 : vector<8x128xf32>
    %51 = math.exp %50 : vector<8x128xf32>
    %cst_20 = arith.constant 1.000000e+00 : f32
    %52 = vector.broadcast %cst_20 : f32 to vector<8x128xf32>
    %53 = arith.addf %52, %51 : vector<8x128xf32>
    %54 = arith.divf %52, %53 : vector<8x128xf32>
    %55 = vector.extract_strided_slice %42 {offsets = [0, 128], sizes = [8, 128], strides = [1, 1]} : vector<8x384xf32> to vector<8x128xf32>
    %56 = vector.extract_strided_slice %46 {offsets = [0, 128], sizes = [8, 128], strides = [1, 1]} : vector<8x384xf32> to vector<8x128xf32>
    %57 = arith.addf %55, %56 : vector<8x128xf32>
    %58 = arith.negf %57 : vector<8x128xf32>
    %59 = math.exp %58 : vector<8x128xf32>
    %cst_21 = arith.constant 1.000000e+00 : f32
    %60 = vector.broadcast %cst_21 : f32 to vector<8x128xf32>
    %61 = arith.addf %60, %59 : vector<8x128xf32>
    %62 = arith.divf %60, %61 : vector<8x128xf32>
    %63 = vector.extract_strided_slice %42 {offsets = [0, 256], sizes = [8, 128], strides = [1, 1]} : vector<8x384xf32> to vector<8x128xf32>
    %64 = vector.extract_strided_slice %46 {offsets = [0, 256], sizes = [8, 128], strides = [1, 1]} : vector<8x384xf32> to vector<8x128xf32>
    %65 = arith.mulf %54, %64 : vector<8x128xf32>
    %66 = arith.addf %63, %65 : vector<8x128xf32>
    %67 = math.tanh %66 : vector<8x128xf32>
    %cst_22 = arith.constant 1.000000e+00 : f32
    %68 = vector.broadcast %cst_22 : f32 to vector<8x128xf32>
    %69 = arith.subf %68, %62 : vector<8x128xf32>
    %70 = arith.mulf %69, %67 : vector<8x128xf32>
    %71 = arith.mulf %62, %41 : vector<8x128xf32>
    %72 = arith.addf %70, %71 : vector<8x128xf32>
    %c16 = arith.constant 16 : index
    %c0_23 = arith.constant 0 : index
    %73 = vector.load %arg35[%c16, %c0_23] : memref<48x384xf32, #tpu.memory_space<vmem>>, vector<8x384xf32>
    %74 = arith.truncf %72 : vector<8x128xf32> to vector<8x128xbf16>
    %cst_24 = arith.constant dense<0.000000e+00> : vector<8x384xf32>
    %75 = tpu.matmul %74, %8, %cst_24 {dimension_numbers = #tpu.dot_dimension_numbers<[1], [0], [0], [1], [0, 0, 1, 1], [], []>} : vector<8x128xbf16>, vector<128x384xbf16>, vector<8x384xf32> -> vector<8x384xf32>
    %76 = vector.broadcast %9 : vector<1x384xf32> to vector<8x384xf32>
    %77 = arith.addf %75, %76 : vector<8x384xf32>
    %78 = vector.extract_strided_slice %73 {offsets = [0, 0], sizes = [8, 128], strides = [1, 1]} : vector<8x384xf32> to vector<8x128xf32>
    %79 = vector.extract_strided_slice %77 {offsets = [0, 0], sizes = [8, 128], strides = [1, 1]} : vector<8x384xf32> to vector<8x128xf32>
    %80 = arith.addf %78, %79 : vector<8x128xf32>
    %81 = arith.negf %80 : vector<8x128xf32>
    %82 = math.exp %81 : vector<8x128xf32>
    %cst_25 = arith.constant 1.000000e+00 : f32
    %83 = vector.broadcast %cst_25 : f32 to vector<8x128xf32>
    %84 = arith.addf %83, %82 : vector<8x128xf32>
    %85 = arith.divf %83, %84 : vector<8x128xf32>
    %86 = vector.extract_strided_slice %73 {offsets = [0, 128], sizes = [8, 128], strides = [1, 1]} : vector<8x384xf32> to vector<8x128xf32>
    %87 = vector.extract_strided_slice %77 {offsets = [0, 128], sizes = [8, 128], strides = [1, 1]} : vector<8x384xf32> to vector<8x128xf32>
    %88 = arith.addf %86, %87 : vector<8x128xf32>
    %89 = arith.negf %88 : vector<8x128xf32>
    %90 = math.exp %89 : vector<8x128xf32>
    %cst_26 = arith.constant 1.000000e+00 : f32
    %91 = vector.broadcast %cst_26 : f32 to vector<8x128xf32>
    %92 = arith.addf %91, %90 : vector<8x128xf32>
    %93 = arith.divf %91, %92 : vector<8x128xf32>
    %94 = vector.extract_strided_slice %73 {offsets = [0, 256], sizes = [8, 128], strides = [1, 1]} : vector<8x384xf32> to vector<8x128xf32>
    %95 = vector.extract_strided_slice %77 {offsets = [0, 256], sizes = [8, 128], strides = [1, 1]} : vector<8x384xf32> to vector<8x128xf32>
    %96 = arith.mulf %85, %95 : vector<8x128xf32>
    %97 = arith.addf %94, %96 : vector<8x128xf32>
    %98 = math.tanh %97 : vector<8x128xf32>
    %cst_27 = arith.constant 1.000000e+00 : f32
    %99 = vector.broadcast %cst_27 : f32 to vector<8x128xf32>
    %100 = arith.subf %99, %93 : vector<8x128xf32>
    %101 = arith.mulf %100, %98 : vector<8x128xf32>
    %102 = arith.mulf %93, %72 : vector<8x128xf32>
    %103 = arith.addf %101, %102 : vector<8x128xf32>
    %c24 = arith.constant 24 : index
    %c0_28 = arith.constant 0 : index
    %104 = vector.load %arg35[%c24, %c0_28] : memref<48x384xf32, #tpu.memory_space<vmem>>, vector<8x384xf32>
    %105 = arith.truncf %103 : vector<8x128xf32> to vector<8x128xbf16>
    %cst_29 = arith.constant dense<0.000000e+00> : vector<8x384xf32>
    %106 = tpu.matmul %105, %8, %cst_29 {dimension_numbers = #tpu.dot_dimension_numbers<[1], [0], [0], [1], [0, 0, 1, 1], [], []>} : vector<8x128xbf16>, vector<128x384xbf16>, vector<8x384xf32> -> vector<8x384xf32>
    %107 = vector.broadcast %9 : vector<1x384xf32> to vector<8x384xf32>
    %108 = arith.addf %106, %107 : vector<8x384xf32>
    %109 = vector.extract_strided_slice %104 {offsets = [0, 0], sizes = [8, 128], strides = [1, 1]} : vector<8x384xf32> to vector<8x128xf32>
    %110 = vector.extract_strided_slice %108 {offsets = [0, 0], sizes = [8, 128], strides = [1, 1]} : vector<8x384xf32> to vector<8x128xf32>
    %111 = arith.addf %109, %110 : vector<8x128xf32>
    %112 = arith.negf %111 : vector<8x128xf32>
    %113 = math.exp %112 : vector<8x128xf32>
    %cst_30 = arith.constant 1.000000e+00 : f32
    %114 = vector.broadcast %cst_30 : f32 to vector<8x128xf32>
    %115 = arith.addf %114, %113 : vector<8x128xf32>
    %116 = arith.divf %114, %115 : vector<8x128xf32>
    %117 = vector.extract_strided_slice %104 {offsets = [0, 128], sizes = [8, 128], strides = [1, 1]} : vector<8x384xf32> to vector<8x128xf32>
    %118 = vector.extract_strided_slice %108 {offsets = [0, 128], sizes = [8, 128], strides = [1, 1]} : vector<8x384xf32> to vector<8x128xf32>
    %119 = arith.addf %117, %118 : vector<8x128xf32>
    %120 = arith.negf %119 : vector<8x128xf32>
    %121 = math.exp %120 : vector<8x128xf32>
    %cst_31 = arith.constant 1.000000e+00 : f32
    %122 = vector.broadcast %cst_31 : f32 to vector<8x128xf32>
    %123 = arith.addf %122, %121 : vector<8x128xf32>
    %124 = arith.divf %122, %123 : vector<8x128xf32>
    %125 = vector.extract_strided_slice %104 {offsets = [0, 256], sizes = [8, 128], strides = [1, 1]} : vector<8x384xf32> to vector<8x128xf32>
    %126 = vector.extract_strided_slice %108 {offsets = [0, 256], sizes = [8, 128], strides = [1, 1]} : vector<8x384xf32> to vector<8x128xf32>
    %127 = arith.mulf %116, %126 : vector<8x128xf32>
    %128 = arith.addf %125, %127 : vector<8x128xf32>
    %129 = math.tanh %128 : vector<8x128xf32>
    %cst_32 = arith.constant 1.000000e+00 : f32
    %130 = vector.broadcast %cst_32 : f32 to vector<8x128xf32>
    %131 = arith.subf %130, %124 : vector<8x128xf32>
    %132 = arith.mulf %131, %129 : vector<8x128xf32>
    %133 = arith.mulf %124, %103 : vector<8x128xf32>
    %134 = arith.addf %132, %133 : vector<8x128xf32>
    %c32 = arith.constant 32 : index
    %c0_33 = arith.constant 0 : index
    %135 = vector.load %arg35[%c32, %c0_33] : memref<48x384xf32, #tpu.memory_space<vmem>>, vector<8x384xf32>
    %136 = arith.truncf %134 : vector<8x128xf32> to vector<8x128xbf16>
    %cst_34 = arith.constant dense<0.000000e+00> : vector<8x384xf32>
    %137 = tpu.matmul %136, %8, %cst_34 {dimension_numbers = #tpu.dot_dimension_numbers<[1], [0], [0], [1], [0, 0, 1, 1], [], []>} : vector<8x128xbf16>, vector<128x384xbf16>, vector<8x384xf32> -> vector<8x384xf32>
    %138 = vector.broadcast %9 : vector<1x384xf32> to vector<8x384xf32>
    %139 = arith.addf %137, %138 : vector<8x384xf32>
    %140 = vector.extract_strided_slice %135 {offsets = [0, 0], sizes = [8, 128], strides = [1, 1]} : vector<8x384xf32> to vector<8x128xf32>
    %141 = vector.extract_strided_slice %139 {offsets = [0, 0], sizes = [8, 128], strides = [1, 1]} : vector<8x384xf32> to vector<8x128xf32>
    %142 = arith.addf %140, %141 : vector<8x128xf32>
    %143 = arith.negf %142 : vector<8x128xf32>
    %144 = math.exp %143 : vector<8x128xf32>
    %cst_35 = arith.constant 1.000000e+00 : f32
    %145 = vector.broadcast %cst_35 : f32 to vector<8x128xf32>
    %146 = arith.addf %145, %144 : vector<8x128xf32>
    %147 = arith.divf %145, %146 : vector<8x128xf32>
    %148 = vector.extract_strided_slice %135 {offsets = [0, 128], sizes = [8, 128], strides = [1, 1]} : vector<8x384xf32> to vector<8x128xf32>
    %149 = vector.extract_strided_slice %139 {offsets = [0, 128], sizes = [8, 128], strides = [1, 1]} : vector<8x384xf32> to vector<8x128xf32>
    %150 = arith.addf %148, %149 : vector<8x128xf32>
    %151 = arith.negf %150 : vector<8x128xf32>
    %152 = math.exp %151 : vector<8x128xf32>
    %cst_36 = arith.constant 1.000000e+00 : f32
    %153 = vector.broadcast %cst_36 : f32 to vector<8x128xf32>
    %154 = arith.addf %153, %152 : vector<8x128xf32>
    %155 = arith.divf %153, %154 : vector<8x128xf32>
    %156 = vector.extract_strided_slice %135 {offsets = [0, 256], sizes = [8, 128], strides = [1, 1]} : vector<8x384xf32> to vector<8x128xf32>
    %157 = vector.extract_strided_slice %139 {offsets = [0, 256], sizes = [8, 128], strides = [1, 1]} : vector<8x384xf32> to vector<8x128xf32>
    %158 = arith.mulf %147, %157 : vector<8x128xf32>
    %159 = arith.addf %156, %158 : vector<8x128xf32>
    %160 = math.tanh %159 : vector<8x128xf32>
    %cst_37 = arith.constant 1.000000e+00 : f32
    %161 = vector.broadcast %cst_37 : f32 to vector<8x128xf32>
    %162 = arith.subf %161, %155 : vector<8x128xf32>
    %163 = arith.mulf %162, %160 : vector<8x128xf32>
    %164 = arith.mulf %155, %134 : vector<8x128xf32>
    %165 = arith.addf %163, %164 : vector<8x128xf32>
    %c40 = arith.constant 40 : index
    %c0_38 = arith.constant 0 : index
    %166 = vector.load %arg35[%c40, %c0_38] : memref<48x384xf32, #tpu.memory_space<vmem>>, vector<8x384xf32>
    %167 = arith.truncf %165 : vector<8x128xf32> to vector<8x128xbf16>
    %cst_39 = arith.constant dense<0.000000e+00> : vector<8x384xf32>
    %168 = tpu.matmul %167, %8, %cst_39 {dimension_numbers = #tpu.dot_dimension_numbers<[1], [0], [0], [1], [0, 0, 1, 1], [], []>} : vector<8x128xbf16>, vector<128x384xbf16>, vector<8x384xf32> -> vector<8x384xf32>
    %169 = vector.broadcast %9 : vector<1x384xf32> to vector<8x384xf32>
    %170 = arith.addf %168, %169 : vector<8x384xf32>
    %171 = vector.extract_strided_slice %166 {offsets = [0, 0], sizes = [8, 128], strides = [1, 1]} : vector<8x384xf32> to vector<8x128xf32>
    %172 = vector.extract_strided_slice %170 {offsets = [0, 0], sizes = [8, 128], strides = [1, 1]} : vector<8x384xf32> to vector<8x128xf32>
    %173 = arith.addf %171, %172 : vector<8x128xf32>
    %174 = arith.negf %173 : vector<8x128xf32>
    %175 = math.exp %174 : vector<8x128xf32>
    %cst_40 = arith.constant 1.000000e+00 : f32
    %176 = vector.broadcast %cst_40 : f32 to vector<8x128xf32>
    %177 = arith.addf %176, %175 : vector<8x128xf32>
    %178 = arith.divf %176, %177 : vector<8x128xf32>
    %179 = vector.extract_strided_slice %166 {offsets = [0, 128], sizes = [8, 128], strides = [1, 1]} : vector<8x384xf32> to vector<8x128xf32>
    %180 = vector.extract_strided_slice %170 {offsets = [0, 128], sizes = [8, 128], strides = [1, 1]} : vector<8x384xf32> to vector<8x128xf32>
    %181 = arith.addf %179, %180 : vector<8x128xf32>
    %182 = arith.negf %181 : vector<8x128xf32>
    %183 = math.exp %182 : vector<8x128xf32>
    %cst_41 = arith.constant 1.000000e+00 : f32
    %184 = vector.broadcast %cst_41 : f32 to vector<8x128xf32>
    %185 = arith.addf %184, %183 : vector<8x128xf32>
    %186 = arith.divf %184, %185 : vector<8x128xf32>
    %187 = vector.extract_strided_slice %166 {offsets = [0, 256], sizes = [8, 128], strides = [1, 1]} : vector<8x384xf32> to vector<8x128xf32>
    %188 = vector.extract_strided_slice %170 {offsets = [0, 256], sizes = [8, 128], strides = [1, 1]} : vector<8x384xf32> to vector<8x128xf32>
    %189 = arith.mulf %178, %188 : vector<8x128xf32>
    %190 = arith.addf %187, %189 : vector<8x128xf32>
    %191 = math.tanh %190 : vector<8x128xf32>
    %cst_42 = arith.constant 1.000000e+00 : f32
    %192 = vector.broadcast %cst_42 : f32 to vector<8x128xf32>
    %193 = arith.subf %192, %186 : vector<8x128xf32>
    %194 = arith.mulf %193, %191 : vector<8x128xf32>
    %195 = arith.mulf %186, %165 : vector<8x128xf32>
    %196 = arith.addf %194, %195 : vector<8x128xf32>
    %c0_43 = arith.constant 0 : index
    %c0_44 = arith.constant 0 : index
    %197 = vector.load %arg10[%c0_43, %c0_44] : memref<128x10xbf16, #tpu.memory_space<vmem>>, vector<128x10xbf16>
    %c0_45 = arith.constant 0 : index
    %c0_46 = arith.constant 0 : index
    %198 = vector.load %arg11[%c0_45, %c0_46] : memref<1x10xf32, #tpu.memory_space<vmem>>, vector<1x10xf32>
    %199 = arith.truncf %196 : vector<8x128xf32> to vector<8x128xbf16>
    %cst_47 = arith.constant dense<0.000000e+00> : vector<8x10xf32>
    %200 = tpu.matmul %199, %197, %cst_47 {dimension_numbers = #tpu.dot_dimension_numbers<[1], [0], [0], [1], [0, 0, 1, 1], [], []>} : vector<8x128xbf16>, vector<128x10xbf16>, vector<8x10xf32> -> vector<8x10xf32>
    %201 = vector.broadcast %198 : vector<1x10xf32> to vector<8x10xf32>
    %202 = arith.addf %200, %201 : vector<8x10xf32>
    %c0_48 = arith.constant 0 : index
    %c0_49 = arith.constant 0 : index
    %203 = vector.load %arg31[%c0_48, %c0_49] : memref<8x10xf32, #tpu.memory_space<vmem>>, vector<8x10xf32>
    tpu.vector_store %arg31[%c0_48, %c0_49], %202 {strides = array<i32>} : memref<8x10xf32, #tpu.memory_space<vmem>>, vector<8x10xf32>,
    %c0_50 = arith.constant 0 : index
    %c0_51 = arith.constant 0 : index
    %204 = vector.load %arg3[%c0_50, %c0_51] : memref<7x1xf32, #tpu.memory_space<vmem>>, vector<7x1xf32>
    %c0_52 = arith.constant 0 : index
    %c0_53 = arith.constant 0 : index
    %205 = vector.load %arg12[%c0_52, %c0_53] : memref<1x20xf32, #tpu.memory_space<vmem>>, vector<1x20xf32>
    %206 = vector.broadcast %204 : vector<7x1xf32> to vector<7x20xf32>
    %207 = vector.broadcast %205 : vector<1x20xf32> to vector<7x20xf32>
    %208 = arith.mulf %206, %207 : vector<7x20xf32>
    %c0_54 = arith.constant 0 : index
    %c0_55 = arith.constant 0 : index
    %209 = vector.load %arg13[%c0_54, %c0_55] : memref<1x20xf32, #tpu.memory_space<vmem>>, vector<1x20xf32>
    %210 = vector.broadcast %209 : vector<1x20xf32> to vector<7x20xf32>
    %211 = arith.addf %208, %210 : vector<7x20xf32>
    %cst_56 = arith.constant 0.000000e+00 : f32
    %212 = vector.broadcast %cst_56 : f32 to vector<7x20xf32>
    %213 = arith.maximumf %211, %212 : vector<7x20xf32>
    %c0_57 = arith.constant 0 : index
    %c0_58 = arith.constant 0 : index
    %c0_59 = arith.constant 0 : index
    %214 = vector.load %arg14[%c0_57, %c0_58, %c0_59] : memref<4x20x20xbf16, #tpu.memory_space<vmem>>, vector<1x20x20xbf16>
    %215 = vector.shape_cast %214 : vector<1x20x20xbf16> to vector<20x20xbf16>
    %c0_60 = arith.constant 0 : index
    %c0_61 = arith.constant 0 : index
    %c0_62 = arith.constant 0 : index
    %216 = vector.load %arg15[%c0_60, %c0_61, %c0_62] : memref<4x1x20xf32, #tpu.memory_space<vmem>>, vector<1x1x20xf32>
    %217 = vector.shape_cast %216 : vector<1x1x20xf32> to vector<1x20xf32>
    %218 = arith.truncf %213 : vector<7x20xf32> to vector<7x20xbf16>
    %cst_63 = arith.constant dense<0.000000e+00> : vector<7x20xf32>
    %219 = tpu.matmul %218, %215, %cst_63 {dimension_numbers = #tpu.dot_dimension_numbers<[1], [0], [0], [1], [0, 0, 1, 1], [], []>} : vector<7x20xbf16>, vector<20x20xbf16>, vector<7x20xf32> -> vector<7x20xf32>
    %220 = vector.broadcast %217 : vector<1x20xf32> to vector<7x20xf32>
    %221 = arith.addf %219, %220 : vector<7x20xf32>
    %cst_64 = arith.constant 0.000000e+00 : f32
    %222 = vector.broadcast %cst_64 : f32 to vector<7x20xf32>
    %223 = arith.maximumf %221, %222 : vector<7x20xf32>
    %c1 = arith.constant 1 : index
    %c0_65 = arith.constant 0 : index
    %c0_66 = arith.constant 0 : index
    %224 = vector.load %arg14[%c1, %c0_65, %c0_66] : memref<4x20x20xbf16, #tpu.memory_space<vmem>>, vector<1x20x20xbf16>
    %225 = vector.shape_cast %224 : vector<1x20x20xbf16> to vector<20x20xbf16>
    %c1_67 = arith.constant 1 : index
    %c0_68 = arith.constant 0 : index
    %c0_69 = arith.constant 0 : index
    %226 = vector.load %arg15[%c1_67, %c0_68, %c0_69] : memref<4x1x20xf32, #tpu.memory_space<vmem>>, vector<1x1x20xf32>
    %227 = vector.shape_cast %226 : vector<1x1x20xf32> to vector<1x20xf32>
    %228 = arith.truncf %223 : vector<7x20xf32> to vector<7x20xbf16>
    %cst_70 = arith.constant dense<0.000000e+00> : vector<7x20xf32>
    %229 = tpu.matmul %228, %225, %cst_70 {dimension_numbers = #tpu.dot_dimension_numbers<[1], [0], [0], [1], [0, 0, 1, 1], [], []>} : vector<7x20xbf16>, vector<20x20xbf16>, vector<7x20xf32> -> vector<7x20xf32>
    %230 = vector.broadcast %227 : vector<1x20xf32> to vector<7x20xf32>
    %231 = arith.addf %229, %230 : vector<7x20xf32>
    %cst_71 = arith.constant 0.000000e+00 : f32
    %232 = vector.broadcast %cst_71 : f32 to vector<7x20xf32>
    %233 = arith.maximumf %231, %232 : vector<7x20xf32>
    %c2 = arith.constant 2 : index
    %c0_72 = arith.constant 0 : index
    %c0_73 = arith.constant 0 : index
    %234 = vector.load %arg14[%c2, %c0_72, %c0_73] : memref<4x20x20xbf16, #tpu.memory_space<vmem>>, vector<1x20x20xbf16>
    %235 = vector.shape_cast %234 : vector<1x20x20xbf16> to vector<20x20xbf16>
    %c2_74 = arith.constant 2 : index
    %c0_75 = arith.constant 0 : index
    %c0_76 = arith.constant 0 : index
    %236 = vector.load %arg15[%c2_74, %c0_75, %c0_76] : memref<4x1x20xf32, #tpu.memory_space<vmem>>, vector<1x1x20xf32>
    %237 = vector.shape_cast %236 : vector<1x1x20xf32> to vector<1x20xf32>
    %238 = arith.truncf %233 : vector<7x20xf32> to vector<7x20xbf16>
    %cst_77 = arith.constant dense<0.000000e+00> : vector<7x20xf32>
    %239 = tpu.matmul %238, %235, %cst_77 {dimension_numbers = #tpu.dot_dimension_numbers<[1], [0], [0], [1], [0, 0, 1, 1], [], []>} : vector<7x20xbf16>, vector<20x20xbf16>, vector<7x20xf32> -> vector<7x20xf32>
    %240 = vector.broadcast %237 : vector<1x20xf32> to vector<7x20xf32>
    %241 = arith.addf %239, %240 : vector<7x20xf32>
    %cst_78 = arith.constant 0.000000e+00 : f32
    %242 = vector.broadcast %cst_78 : f32 to vector<7x20xf32>
    %243 = arith.maximumf %241, %242 : vector<7x20xf32>
    %c3 = arith.constant 3 : index
    %c0_79 = arith.constant 0 : index
    %c0_80 = arith.constant 0 : index
    %244 = vector.load %arg14[%c3, %c0_79, %c0_80] : memref<4x20x20xbf16, #tpu.memory_space<vmem>>, vector<1x20x20xbf16>
    %245 = vector.shape_cast %244 : vector<1x20x20xbf16> to vector<20x20xbf16>
    %c3_81 = arith.constant 3 : index
    %c0_82 = arith.constant 0 : index
    %c0_83 = arith.constant 0 : index
    %246 = vector.load %arg15[%c3_81, %c0_82, %c0_83] : memref<4x1x20xf32, #tpu.memory_space<vmem>>, vector<1x1x20xf32>
    %247 = vector.shape_cast %246 : vector<1x1x20xf32> to vector<1x20xf32>
    %248 = arith.truncf %243 : vector<7x20xf32> to vector<7x20xbf16>
    %cst_84 = arith.constant dense<0.000000e+00> : vector<7x20xf32>
    %249 = tpu.matmul %248, %245, %cst_84 {dimension_numbers = #tpu.dot_dimension_numbers<[1], [0], [0], [1], [0, 0, 1, 1], [], []>} : vector<7x20xbf16>, vector<20x20xbf16>, vector<7x20xf32> -> vector<7x20xf32>
    %250 = vector.broadcast %247 : vector<1x20xf32> to vector<7x20xf32>
    %251 = arith.addf %249, %250 : vector<7x20xf32>
    %cst_85 = arith.constant 0.000000e+00 : f32
    %252 = vector.broadcast %cst_85 : f32 to vector<7x20xf32>
    %253 = arith.maximumf %251, %252 : vector<7x20xf32>
    %c0_86 = arith.constant 0 : index
    %c0_87 = arith.constant 0 : index
    %254 = vector.load %arg16[%c0_86, %c0_87] : memref<20x2xbf16, #tpu.memory_space<vmem>>, vector<20x2xbf16>
    %c0_88 = arith.constant 0 : index
    %c0_89 = arith.constant 0 : index
    %255 = vector.load %arg17[%c0_88, %c0_89] : memref<1x2xf32, #tpu.memory_space<vmem>>, vector<1x2xf32>
    %256 = arith.truncf %253 : vector<7x20xf32> to vector<7x20xbf16>
    %cst_90 = arith.constant dense<0.000000e+00> : vector<7x2xf32>
    %257 = tpu.matmul %256, %254, %cst_90 {dimension_numbers = #tpu.dot_dimension_numbers<[1], [0], [0], [1], [0, 0, 1, 1], [], []>} : vector<7x20xbf16>, vector<20x2xbf16>, vector<7x2xf32> -> vector<7x2xf32>
    %258 = vector.broadcast %255 : vector<1x2xf32> to vector<7x2xf32>
    %259 = arith.addf %257, %258 : vector<7x2xf32>
    %c0_91 = arith.constant 0 : index
    %c0_92 = arith.constant 0 : index
    %260 = vector.load %arg19[%c0_91, %c0_92] : memref<2x40xbf16, #tpu.memory_space<vmem>>, vector<2x40xbf16>
    %261 = arith.truncf %259 : vector<7x2xf32> to vector<7x2xbf16>
    %cst_93 = arith.constant dense<0.000000e+00> : vector<7x40xf32>
    %262 = tpu.matmul %261, %260, %cst_93 {dimension_numbers = #tpu.dot_dimension_numbers<[1], [0], [0], [1], [0, 0, 1, 1], [], []>} : vector<7x2xbf16>, vector<2x40xbf16>, vector<7x40xf32> -> vector<7x40xf32>
    %c0_94 = arith.constant 0 : index
    %c0_95 = arith.constant 0 : index
    %263 = vector.load %arg4[%c0_94, %c0_95] : memref<8x1xf32, #tpu.memory_space<vmem>>, vector<8x1xf32>
    %264 = vector.extract_strided_slice %262 {offsets = [0, 0], sizes = [1, 40], strides = [1, 1]} : vector<7x40xf32> to vector<1x40xf32>
    %265 = vector.broadcast %263 : vector<8x1xf32> to vector<8x40xf32>
    %266 = vector.broadcast %264 : vector<1x40xf32> to vector<8x40xf32>
    %267 = arith.mulf %265, %266 : vector<8x40xf32>
    %268 = vector.extract_strided_slice %262 {offsets = [1, 0], sizes = [1, 40], strides = [1, 1]} : vector<7x40xf32> to vector<1x40xf32>
    %269 = vector.broadcast %263 : vector<8x1xf32> to vector<8x40xf32>
    %270 = vector.broadcast %268 : vector<1x40xf32> to vector<8x40xf32>
    %271 = arith.mulf %269, %270 : vector<8x40xf32>
    %272 = vector.extract_strided_slice %262 {offsets = [2, 0], sizes = [1, 40], strides = [1, 1]} : vector<7x40xf32> to vector<1x40xf32>
    %273 = vector.broadcast %263 : vector<8x1xf32> to vector<8x40xf32>
    %274 = vector.broadcast %272 : vector<1x40xf32> to vector<8x40xf32>
    %275 = arith.mulf %273, %274 : vector<8x40xf32>
    %276 = vector.extract_strided_slice %262 {offsets = [3, 0], sizes = [1, 40], strides = [1, 1]} : vector<7x40xf32> to vector<1x40xf32>
    %277 = vector.broadcast %263 : vector<8x1xf32> to vector<8x40xf32>
    %278 = vector.broadcast %276 : vector<1x40xf32> to vector<8x40xf32>
    %279 = arith.mulf %277, %278 : vector<8x40xf32>
    %280 = vector.extract_strided_slice %262 {offsets = [4, 0], sizes = [1, 40], strides = [1, 1]} : vector<7x40xf32> to vector<1x40xf32>
    %281 = vector.broadcast %263 : vector<8x1xf32> to vector<8x40xf32>
    %282 = vector.broadcast %280 : vector<1x40xf32> to vector<8x40xf32>
    %283 = arith.mulf %281, %282 : vector<8x40xf32>
    %284 = vector.extract_strided_slice %262 {offsets = [5, 0], sizes = [1, 40], strides = [1, 1]} : vector<7x40xf32> to vector<1x40xf32>
    %285 = vector.broadcast %263 : vector<8x1xf32> to vector<8x40xf32>
    %286 = vector.broadcast %284 : vector<1x40xf32> to vector<8x40xf32>
    %287 = arith.mulf %285, %286 : vector<8x40xf32>
    %288 = vector.extract_strided_slice %262 {offsets = [6, 0], sizes = [1, 40], strides = [1, 1]} : vector<7x40xf32> to vector<1x40xf32>
    %289 = vector.broadcast %263 : vector<8x1xf32> to vector<8x40xf32>
    %290 = vector.broadcast %288 : vector<1x40xf32> to vector<8x40xf32>
    %291 = arith.mulf %289, %290 : vector<8x40xf32>
    %292 = vector.extract_strided_slice %202 {offsets = [0, 0], sizes = [1, 10], strides = [1, 1]} : vector<8x10xf32> to vector<1x10xf32>
    %293 = vector.extract_strided_slice %202 {offsets = [0, 0], sizes = [1, 10], strides = [1, 1]} : vector<8x10xf32> to vector<1x10xf32>
    %294 = vector.extract_strided_slice %202 {offsets = [1, 0], sizes = [1, 10], strides = [1, 1]} : vector<8x10xf32> to vector<1x10xf32>
    %295 = vector.extract_strided_slice %202 {offsets = [1, 0], sizes = [1, 10], strides = [1, 1]} : vector<8x10xf32> to vector<1x10xf32>
    %cst_96 = arith.constant 0.000000e+00 : f32
    %296 = vector.broadcast %cst_96 : f32 to vector<4x10xf32>
    %297 = tpu.concatenate %292, %293, %294, %295, %296 in 0 : vector<1x10xf32>, vector<1x10xf32>, vector<1x10xf32>, vector<1x10xf32>, vector<4x10xf32> -> vector<8x10xf32>
    %cst_97 = arith.constant 0.000000e+00 : f32
    %298 = vector.broadcast %cst_97 : f32 to vector<8x1xf32>
    %c0_98 = arith.constant 0 : index
    %c0_99 = arith.constant 0 : index
    %299 = vector.load %arg18[%c0_98, %c0_99] : memref<10x40xbf16, #tpu.memory_space<vmem>>, vector<10x40xbf16>
    %c0_100 = arith.constant 0 : index
    %c0_101 = arith.constant 0 : index
    %300 = vector.load %arg20[%c0_100, %c0_101] : memref<1x40xf32, #tpu.memory_space<vmem>>, vector<1x40xf32>
    %c0_102 = arith.constant 0 : index
    %c0_103 = arith.constant 0 : index
    %301 = vector.load %arg23[%c0_102, %c0_103] : memref<40x10xbf16, #tpu.memory_space<vmem>>, vector<40x10xbf16>
    %c0_104 = arith.constant 0 : index
    %c0_105 = arith.constant 0 : index
    %302 = vector.load %arg24[%c0_104, %c0_105] : memref<1x10xf32, #tpu.memory_space<vmem>>, vector<1x10xf32>
    %c0_106 = arith.constant 0 : index
    %c0_107 = arith.constant 0 : index
    %c0_108 = arith.constant 0 : index
    %303 = vector.load %arg21[%c0_106, %c0_107, %c0_108] : memref<4x40x40xbf16, #tpu.memory_space<vmem>>, vector<1x40x40xbf16>
    %304 = vector.shape_cast %303 : vector<1x40x40xbf16> to vector<40x40xbf16>
    %c1_109 = arith.constant 1 : index
    %c0_110 = arith.constant 0 : index
    %c0_111 = arith.constant 0 : index
    %305 = vector.load %arg21[%c1_109, %c0_110, %c0_111] : memref<4x40x40xbf16, #tpu.memory_space<vmem>>, vector<1x40x40xbf16>
    %306 = vector.shape_cast %305 : vector<1x40x40xbf16> to vector<40x40xbf16>
    %c2_112 = arith.constant 2 : index
    %c0_113 = arith.constant 0 : index
    %c0_114 = arith.constant 0 : index
    %307 = vector.load %arg21[%c2_112, %c0_113, %c0_114] : memref<4x40x40xbf16, #tpu.memory_space<vmem>>, vector<1x40x40xbf16>
    %308 = vector.shape_cast %307 : vector<1x40x40xbf16> to vector<40x40xbf16>
    %c3_115 = arith.constant 3 : index
    %c0_116 = arith.constant 0 : index
    %c0_117 = arith.constant 0 : index
    %309 = vector.load %arg21[%c3_115, %c0_116, %c0_117] : memref<4x40x40xbf16, #tpu.memory_space<vmem>>, vector<1x40x40xbf16>
    %310 = vector.shape_cast %309 : vector<1x40x40xbf16> to vector<40x40xbf16>
    %c0_118 = arith.constant 0 : index
    %c0_119 = arith.constant 0 : index
    %c0_120 = arith.constant 0 : index
    %311 = vector.load %arg22[%c0_118, %c0_119, %c0_120] : memref<4x1x40xf32, #tpu.memory_space<vmem>>, vector<1x1x40xf32>
    %312 = vector.shape_cast %311 : vector<1x1x40xf32> to vector<1x40xf32>
    %c1_121 = arith.constant 1 : index
    %c0_122 = arith.constant 0 : index
    %c0_123 = arith.constant 0 : index
    %313 = vector.load %arg22[%c1_121, %c0_122, %c0_123] : memref<4x1x40xf32, #tpu.memory_space<vmem>>, vector<1x1x40xf32>
    %314 = vector.shape_cast %313 : vector<1x1x40xf32> to vector<1x40xf32>
    %c2_124 = arith.constant 2 : index
    %c0_125 = arith.constant 0 : index
    %c0_126 = arith.constant 0 : index
    %315 = vector.load %arg22[%c2_124, %c0_125, %c0_126] : memref<4x1x40xf32, #tpu.memory_space<vmem>>, vector<1x1x40xf32>
    %316 = vector.shape_cast %315 : vector<1x1x40xf32> to vector<1x40xf32>
    %c3_127 = arith.constant 3 : index
    %c0_128 = arith.constant 0 : index
    %c0_129 = arith.constant 0 : index
    %317 = vector.load %arg22[%c3_127, %c0_128, %c0_129] : memref<4x1x40xf32, #tpu.memory_space<vmem>>, vector<1x1x40xf32>
    %318 = vector.shape_cast %317 : vector<1x1x40xf32> to vector<1x40xf32>
    %c0_130 = arith.constant 0 : index
    %c0_131 = arith.constant 0 : index
    %c0_132 = arith.constant 0 : index
    %319 = vector.load %arg32[%c0_130, %c0_131, %c0_132] : memref<8x8x10xf32, #tpu.memory_space<vmem>>, vector<1x8x10xf32>
    %320 = vector.shape_cast %319 : vector<1x8x10xf32> to vector<8x10xf32>
    %321 = vector.shape_cast %297 : vector<8x10xf32> to vector<1x8x10xf32>
    tpu.vector_store %arg32[%c0_130, %c0_131, %c0_132], %321 {strides = array<i32>} : memref<8x8x10xf32, #tpu.memory_space<vmem>>, vector<1x8x10xf32>,
    %c0_133 = arith.constant 0 : index
    %c0_134 = arith.constant 0 : index
    %c0_135 = arith.constant 0 : index
    %322 = vector.load %arg33[%c0_133, %c0_134, %c0_135] : memref<8x8x1xf32, #tpu.memory_space<vmem>>, vector<1x8x1xf32>
    %323 = vector.shape_cast %322 : vector<1x8x1xf32> to vector<8x1xf32>
    %324 = vector.shape_cast %298 : vector<8x1xf32> to vector<1x8x1xf32>
    tpu.vector_store %arg33[%c0_133, %c0_134, %c0_135], %324 {strides = array<i32>} : memref<8x8x1xf32, #tpu.memory_space<vmem>>, vector<1x8x1xf32>,
    %c0_136 = arith.constant 0 : index
    %325 = memref.load %arg1[%c0_136] : memref<7xf32, #tpu.memory_space<smem>>
    %326 = arith.truncf %297 : vector<8x10xf32> to vector<8x10xbf16>
    %cst_137 = arith.constant dense<0.000000e+00> : vector<8x40xf32>
    %327 = tpu.matmul %326, %299, %cst_137 {dimension_numbers = #tpu.dot_dimension_numbers<[1], [0], [0], [1], [0, 0, 1, 1], [], []>} : vector<8x10xbf16>, vector<10x40xbf16>, vector<8x40xf32> -> vector<8x40xf32>
    %328 = arith.addf %327, %267 : vector<8x40xf32>
    %329 = vector.broadcast %300 : vector<1x40xf32> to vector<8x40xf32>
    %330 = arith.addf %328, %329 : vector<8x40xf32>
    %cst_138 = arith.constant 0.000000e+00 : f32
    %331 = vector.broadcast %cst_138 : f32 to vector<8x40xf32>
    %332 = arith.maximumf %330, %331 : vector<8x40xf32>
    %333 = arith.truncf %332 : vector<8x40xf32> to vector<8x40xbf16>
    %cst_139 = arith.constant dense<0.000000e+00> : vector<8x40xf32>
    %334 = tpu.matmul %333, %304, %cst_139 {dimension_numbers = #tpu.dot_dimension_numbers<[1], [0], [0], [1], [0, 0, 1, 1], [], []>} : vector<8x40xbf16>, vector<40x40xbf16>, vector<8x40xf32> -> vector<8x40xf32>
    %335 = vector.broadcast %312 : vector<1x40xf32> to vector<8x40xf32>
    %336 = arith.addf %334, %335 : vector<8x40xf32>
    %337 = math.tanh %336 : vector<8x40xf32>
    %338 = arith.truncf %337 : vector<8x40xf32> to vector<8x40xbf16>
    %cst_140 = arith.constant dense<0.000000e+00> : vector<8x40xf32>
    %339 = tpu.matmul %338, %306, %cst_140 {dimension_numbers = #tpu.dot_dimension_numbers<[1], [0], [0], [1], [0, 0, 1, 1], [], []>} : vector<8x40xbf16>, vector<40x40xbf16>, vector<8x40xf32> -> vector<8x40xf32>
    %340 = vector.broadcast %314 : vector<1x40xf32> to vector<8x40xf32>
    %341 = arith.addf %339, %340 : vector<8x40xf32>
    %342 = math.tanh %341 : vector<8x40xf32>
    %343 = arith.truncf %342 : vector<8x40xf32> to vector<8x40xbf16>
    %cst_141 = arith.constant dense<0.000000e+00> : vector<8x40xf32>
    %344 = tpu.matmul %343, %308, %cst_141 {dimension_numbers = #tpu.dot_dimension_numbers<[1], [0], [0], [1], [0, 0, 1, 1], [], []>} : vector<8x40xbf16>, vector<40x40xbf16>, vector<8x40xf32> -> vector<8x40xf32>
    %345 = vector.broadcast %316 : vector<1x40xf32> to vector<8x40xf32>
    %346 = arith.addf %344, %345 : vector<8x40xf32>
    %347 = math.tanh %346 : vector<8x40xf32>
    %348 = arith.truncf %347 : vector<8x40xf32> to vector<8x40xbf16>
    %cst_142 = arith.constant dense<0.000000e+00> : vector<8x40xf32>
    %349 = tpu.matmul %348, %310, %cst_142 {dimension_numbers = #tpu.dot_dimension_numbers<[1], [0], [0], [1], [0, 0, 1, 1], [], []>} : vector<8x40xbf16>, vector<40x40xbf16>, vector<8x40xf32> -> vector<8x40xf32>
    %350 = vector.broadcast %318 : vector<1x40xf32> to vector<8x40xf32>
    %351 = arith.addf %349, %350 : vector<8x40xf32>
    %352 = math.tanh %351 : vector<8x40xf32>
    %353 = arith.truncf %352 : vector<8x40xf32> to vector<8x40xbf16>
    %cst_143 = arith.constant dense<0.000000e+00> : vector<8x10xf32>
    %354 = tpu.matmul %353, %301, %cst_143 {dimension_numbers = #tpu.dot_dimension_numbers<[1], [0], [0], [1], [0, 0, 1, 1], [], []>} : vector<8x40xbf16>, vector<40x10xbf16>, vector<8x10xf32> -> vector<8x10xf32>
    %355 = vector.broadcast %302 : vector<1x10xf32> to vector<8x10xf32>
    %356 = arith.addf %354, %355 : vector<8x10xf32>
    %cst_144 = arith.constant 0.000000e+00 : f32
    %357 = vector.broadcast %cst_144 : f32 to vector<8x10xf32>
    %358 = arith.subf %357, %297 : vector<8x10xf32>
    %cst_145 = arith.constant 1.000000e+00 : f32
    %359 = vector.broadcast %cst_145 : f32 to vector<8x10xf32>
    %360 = arith.mulf %359, %358 : vector<8x10xf32>
    %361 = arith.subf %356, %360 : vector<8x10xf32>
    %362 = arith.subf %361, %360 : vector<8x10xf32>
    %cst_146 = arith.constant 1.000000e+01 : f32
    %363 = vector.broadcast %cst_146 : f32 to vector<8x10xf32>
    %364 = arith.mulf %362, %363 : vector<8x10xf32>
    %365 = arith.mulf %364, %364 : vector<8x10xf32>
    %cst_147 = arith.constant dense<0.000000e+00> : vector<8xf32>
    %366 = vector.multi_reduction <add>, %365, %cst_147 [1] : vector<8x10xf32> to vector<8xf32>
    %367 = vector.shape_cast %366 : vector<8xf32> to vector<8x1xf32>
    %cst_148 = arith.constant 5.000000e-01 : f32
    %368 = vector.broadcast %cst_148 : f32 to vector<8x1xf32>
    %369 = arith.mulf %368, %367 : vector<8x1xf32>
    %370 = vector.broadcast %325 : f32 to vector<8x10xf32>
    %371 = arith.mulf %361, %370 : vector<8x10xf32>
    %372 = arith.addf %297, %371 : vector<8x10xf32>
    %c0_149 = arith.constant 0 : index
    %c0_150 = arith.constant 0 : index
    %c0_151 = arith.constant 0 : index
    %373 = vector.load %arg5[%c0_149, %c0_150, %c0_151] : memref<7x8x10xf32, #tpu.memory_space<vmem>>, vector<1x8x10xf32>
    %374 = vector.shape_cast %373 : vector<1x8x10xf32> to vector<8x10xf32>
    %cst_152 = arith.constant 1.000000e-01 : f32
    %375 = vector.broadcast %cst_152 : f32 to vector<8x10xf32>
    %376 = arith.mulf %375, %374 : vector<8x10xf32>
    %377 = arith.addf %372, %376 : vector<8x10xf32>
    %378 = vector.broadcast %325 : f32 to vector<8x1xf32>
    %379 = arith.mulf %369, %378 : vector<8x1xf32>
    %380 = arith.addf %298, %379 : vector<8x1xf32>
    %c1_153 = arith.constant 1 : index
    %c0_154 = arith.constant 0 : index
    %c0_155 = arith.constant 0 : index
    %381 = vector.load %arg32[%c1_153, %c0_154, %c0_155] : memref<8x8x10xf32, #tpu.memory_space<vmem>>, vector<1x8x10xf32>
    %382 = vector.shape_cast %381 : vector<1x8x10xf32> to vector<8x10xf32>
    %383 = vector.shape_cast %377 : vector<8x10xf32> to vector<1x8x10xf32>
    tpu.vector_store %arg32[%c1_153, %c0_154, %c0_155], %383 {strides = array<i32>} : memref<8x8x10xf32, #tpu.memory_space<vmem>>, vector<1x8x10xf32>,
    %c1_156 = arith.constant 1 : index
    %c0_157 = arith.constant 0 : index
    %c0_158 = arith.constant 0 : index
    %384 = vector.load %arg33[%c1_156, %c0_157, %c0_158] : memref<8x8x1xf32, #tpu.memory_space<vmem>>, vector<1x8x1xf32>
    %385 = vector.shape_cast %384 : vector<1x8x1xf32> to vector<8x1xf32>
    %386 = vector.shape_cast %380 : vector<8x1xf32> to vector<1x8x1xf32>
    tpu.vector_store %arg33[%c1_156, %c0_157, %c0_158], %386 {strides = array<i32>} : memref<8x8x1xf32, #tpu.memory_space<vmem>>, vector<1x8x1xf32>,
    %c1_159 = arith.constant 1 : index
    %387 = memref.load %arg1[%c1_159] : memref<7xf32, #tpu.memory_space<smem>>
    %388 = arith.truncf %377 : vector<8x10xf32> to vector<8x10xbf16>
    %cst_160 = arith.constant dense<0.000000e+00> : vector<8x40xf32>
    %389 = tpu.matmul %388, %299, %cst_160 {dimension_numbers = #tpu.dot_dimension_numbers<[1], [0], [0], [1], [0, 0, 1, 1], [], []>} : vector<8x10xbf16>, vector<10x40xbf16>, vector<8x40xf32> -> vector<8x40xf32>
    %390 = arith.addf %389, %271 : vector<8x40xf32>
    %391 = vector.broadcast %300 : vector<1x40xf32> to vector<8x40xf32>
    %392 = arith.addf %390, %391 : vector<8x40xf32>
    %cst_161 = arith.constant 0.000000e+00 : f32
    %393 = vector.broadcast %cst_161 : f32 to vector<8x40xf32>
    %394 = arith.maximumf %392, %393 : vector<8x40xf32>
    %395 = arith.truncf %394 : vector<8x40xf32> to vector<8x40xbf16>
    %cst_162 = arith.constant dense<0.000000e+00> : vector<8x40xf32>
    %396 = tpu.matmul %395, %304, %cst_162 {dimension_numbers = #tpu.dot_dimension_numbers<[1], [0], [0], [1], [0, 0, 1, 1], [], []>} : vector<8x40xbf16>, vector<40x40xbf16>, vector<8x40xf32> -> vector<8x40xf32>
    %397 = vector.broadcast %312 : vector<1x40xf32> to vector<8x40xf32>
    %398 = arith.addf %396, %397 : vector<8x40xf32>
    %399 = math.tanh %398 : vector<8x40xf32>
    %400 = arith.truncf %399 : vector<8x40xf32> to vector<8x40xbf16>
    %cst_163 = arith.constant dense<0.000000e+00> : vector<8x40xf32>
    %401 = tpu.matmul %400, %306, %cst_163 {dimension_numbers = #tpu.dot_dimension_numbers<[1], [0], [0], [1], [0, 0, 1, 1], [], []>} : vector<8x40xbf16>, vector<40x40xbf16>, vector<8x40xf32> -> vector<8x40xf32>
    %402 = vector.broadcast %314 : vector<1x40xf32> to vector<8x40xf32>
    %403 = arith.addf %401, %402 : vector<8x40xf32>
    %404 = math.tanh %403 : vector<8x40xf32>
    %405 = arith.truncf %404 : vector<8x40xf32> to vector<8x40xbf16>
    %cst_164 = arith.constant dense<0.000000e+00> : vector<8x40xf32>
    %406 = tpu.matmul %405, %308, %cst_164 {dimension_numbers = #tpu.dot_dimension_numbers<[1], [0], [0], [1], [0, 0, 1, 1], [], []>} : vector<8x40xbf16>, vector<40x40xbf16>, vector<8x40xf32> -> vector<8x40xf32>
    %407 = vector.broadcast %316 : vector<1x40xf32> to vector<8x40xf32>
    %408 = arith.addf %406, %407 : vector<8x40xf32>
    %409 = math.tanh %408 : vector<8x40xf32>
    %410 = arith.truncf %409 : vector<8x40xf32> to vector<8x40xbf16>
    %cst_165 = arith.constant dense<0.000000e+00> : vector<8x40xf32>
    %411 = tpu.matmul %410, %310, %cst_165 {dimension_numbers = #tpu.dot_dimension_numbers<[1], [0], [0], [1], [0, 0, 1, 1], [], []>} : vector<8x40xbf16>, vector<40x40xbf16>, vector<8x40xf32> -> vector<8x40xf32>
    %412 = vector.broadcast %318 : vector<1x40xf32> to vector<8x40xf32>
    %413 = arith.addf %411, %412 : vector<8x40xf32>
    %414 = math.tanh %413 : vector<8x40xf32>
    %415 = arith.truncf %414 : vector<8x40xf32> to vector<8x40xbf16>
    %cst_166 = arith.constant dense<0.000000e+00> : vector<8x10xf32>
    %416 = tpu.matmul %415, %301, %cst_166 {dimension_numbers = #tpu.dot_dimension_numbers<[1], [0], [0], [1], [0, 0, 1, 1], [], []>} : vector<8x40xbf16>, vector<40x10xbf16>, vector<8x10xf32> -> vector<8x10xf32>
    %417 = vector.broadcast %302 : vector<1x10xf32> to vector<8x10xf32>
    %418 = arith.addf %416, %417 : vector<8x10xf32>
    %cst_167 = arith.constant 0.000000e+00 : f32
    %419 = vector.broadcast %cst_167 : f32 to vector<8x10xf32>
    %420 = arith.subf %419, %377 : vector<8x10xf32>
    %cst_168 = arith.constant 1.000000e+00 : f32
    %421 = vector.broadcast %cst_168 : f32 to vector<8x10xf32>
    %422 = arith.mulf %421, %420 : vector<8x10xf32>
    %423 = arith.subf %418, %422 : vector<8x10xf32>
    %424 = arith.subf %423, %422 : vector<8x10xf32>
    %cst_169 = arith.constant 1.000000e+01 : f32
    %425 = vector.broadcast %cst_169 : f32 to vector<8x10xf32>
    %426 = arith.mulf %424, %425 : vector<8x10xf32>
    %427 = arith.mulf %426, %426 : vector<8x10xf32>
    %cst_170 = arith.constant dense<0.000000e+00> : vector<8xf32>
    %428 = vector.multi_reduction <add>, %427, %cst_170 [1] : vector<8x10xf32> to vector<8xf32>
    %429 = vector.shape_cast %428 : vector<8xf32> to vector<8x1xf32>
    %cst_171 = arith.constant 5.000000e-01 : f32
    %430 = vector.broadcast %cst_171 : f32 to vector<8x1xf32>
    %431 = arith.mulf %430, %429 : vector<8x1xf32>
    %432 = vector.broadcast %387 : f32 to vector<8x10xf32>
    %433 = arith.mulf %423, %432 : vector<8x10xf32>
    %434 = arith.addf %377, %433 : vector<8x10xf32>
    %c1_172 = arith.constant 1 : index
    %c0_173 = arith.constant 0 : index
    %c0_174 = arith.constant 0 : index
    %435 = vector.load %arg5[%c1_172, %c0_173, %c0_174] : memref<7x8x10xf32, #tpu.memory_space<vmem>>, vector<1x8x10xf32>
    %436 = vector.shape_cast %435 : vector<1x8x10xf32> to vector<8x10xf32>
    %cst_175 = arith.constant 1.000000e-01 : f32
    %437 = vector.broadcast %cst_175 : f32 to vector<8x10xf32>
    %438 = arith.mulf %437, %436 : vector<8x10xf32>
    %439 = arith.addf %434, %438 : vector<8x10xf32>
    %440 = vector.broadcast %387 : f32 to vector<8x1xf32>
    %441 = arith.mulf %431, %440 : vector<8x1xf32>
    %442 = arith.addf %380, %441 : vector<8x1xf32>
    %c2_176 = arith.constant 2 : index
    %c0_177 = arith.constant 0 : index
    %c0_178 = arith.constant 0 : index
    %443 = vector.load %arg32[%c2_176, %c0_177, %c0_178] : memref<8x8x10xf32, #tpu.memory_space<vmem>>, vector<1x8x10xf32>
    %444 = vector.shape_cast %443 : vector<1x8x10xf32> to vector<8x10xf32>
    %445 = vector.shape_cast %439 : vector<8x10xf32> to vector<1x8x10xf32>
    tpu.vector_store %arg32[%c2_176, %c0_177, %c0_178], %445 {strides = array<i32>} : memref<8x8x10xf32, #tpu.memory_space<vmem>>, vector<1x8x10xf32>,
    %c2_179 = arith.constant 2 : index
    %c0_180 = arith.constant 0 : index
    %c0_181 = arith.constant 0 : index
    %446 = vector.load %arg33[%c2_179, %c0_180, %c0_181] : memref<8x8x1xf32, #tpu.memory_space<vmem>>, vector<1x8x1xf32>
    %447 = vector.shape_cast %446 : vector<1x8x1xf32> to vector<8x1xf32>
    %448 = vector.shape_cast %442 : vector<8x1xf32> to vector<1x8x1xf32>
    tpu.vector_store %arg33[%c2_179, %c0_180, %c0_181], %448 {strides = array<i32>} : memref<8x8x1xf32, #tpu.memory_space<vmem>>, vector<1x8x1xf32>,
    %c2_182 = arith.constant 2 : index
    %449 = memref.load %arg1[%c2_182] : memref<7xf32, #tpu.memory_space<smem>>
    %450 = arith.truncf %439 : vector<8x10xf32> to vector<8x10xbf16>
    %cst_183 = arith.constant dense<0.000000e+00> : vector<8x40xf32>
    %451 = tpu.matmul %450, %299, %cst_183 {dimension_numbers = #tpu.dot_dimension_numbers<[1], [0], [0], [1], [0, 0, 1, 1], [], []>} : vector<8x10xbf16>, vector<10x40xbf16>, vector<8x40xf32> -> vector<8x40xf32>
    %452 = arith.addf %451, %275 : vector<8x40xf32>
    %453 = vector.broadcast %300 : vector<1x40xf32> to vector<8x40xf32>
    %454 = arith.addf %452, %453 : vector<8x40xf32>
    %cst_184 = arith.constant 0.000000e+00 : f32
    %455 = vector.broadcast %cst_184 : f32 to vector<8x40xf32>
    %456 = arith.maximumf %454, %455 : vector<8x40xf32>
    %457 = arith.truncf %456 : vector<8x40xf32> to vector<8x40xbf16>
    %cst_185 = arith.constant dense<0.000000e+00> : vector<8x40xf32>
    %458 = tpu.matmul %457, %304, %cst_185 {dimension_numbers = #tpu.dot_dimension_numbers<[1], [0], [0], [1], [0, 0, 1, 1], [], []>} : vector<8x40xbf16>, vector<40x40xbf16>, vector<8x40xf32> -> vector<8x40xf32>
    %459 = vector.broadcast %312 : vector<1x40xf32> to vector<8x40xf32>
    %460 = arith.addf %458, %459 : vector<8x40xf32>
    %461 = math.tanh %460 : vector<8x40xf32>
    %462 = arith.truncf %461 : vector<8x40xf32> to vector<8x40xbf16>
    %cst_186 = arith.constant dense<0.000000e+00> : vector<8x40xf32>
    %463 = tpu.matmul %462, %306, %cst_186 {dimension_numbers = #tpu.dot_dimension_numbers<[1], [0], [0], [1], [0, 0, 1, 1], [], []>} : vector<8x40xbf16>, vector<40x40xbf16>, vector<8x40xf32> -> vector<8x40xf32>
    %464 = vector.broadcast %314 : vector<1x40xf32> to vector<8x40xf32>
    %465 = arith.addf %463, %464 : vector<8x40xf32>
    %466 = math.tanh %465 : vector<8x40xf32>
    %467 = arith.truncf %466 : vector<8x40xf32> to vector<8x40xbf16>
    %cst_187 = arith.constant dense<0.000000e+00> : vector<8x40xf32>
    %468 = tpu.matmul %467, %308, %cst_187 {dimension_numbers = #tpu.dot_dimension_numbers<[1], [0], [0], [1], [0, 0, 1, 1], [], []>} : vector<8x40xbf16>, vector<40x40xbf16>, vector<8x40xf32> -> vector<8x40xf32>
    %469 = vector.broadcast %316 : vector<1x40xf32> to vector<8x40xf32>
    %470 = arith.addf %468, %469 : vector<8x40xf32>
    %471 = math.tanh %470 : vector<8x40xf32>
    %472 = arith.truncf %471 : vector<8x40xf32> to vector<8x40xbf16>
    %cst_188 = arith.constant dense<0.000000e+00> : vector<8x40xf32>
    %473 = tpu.matmul %472, %310, %cst_188 {dimension_numbers = #tpu.dot_dimension_numbers<[1], [0], [0], [1], [0, 0, 1, 1], [], []>} : vector<8x40xbf16>, vector<40x40xbf16>, vector<8x40xf32> -> vector<8x40xf32>
    %474 = vector.broadcast %318 : vector<1x40xf32> to vector<8x40xf32>
    %475 = arith.addf %473, %474 : vector<8x40xf32>
    %476 = math.tanh %475 : vector<8x40xf32>
    %477 = arith.truncf %476 : vector<8x40xf32> to vector<8x40xbf16>
    %cst_189 = arith.constant dense<0.000000e+00> : vector<8x10xf32>
    %478 = tpu.matmul %477, %301, %cst_189 {dimension_numbers = #tpu.dot_dimension_numbers<[1], [0], [0], [1], [0, 0, 1, 1], [], []>} : vector<8x40xbf16>, vector<40x10xbf16>, vector<8x10xf32> -> vector<8x10xf32>
    %479 = vector.broadcast %302 : vector<1x10xf32> to vector<8x10xf32>
    %480 = arith.addf %478, %479 : vector<8x10xf32>
    %cst_190 = arith.constant 0.000000e+00 : f32
    %481 = vector.broadcast %cst_190 : f32 to vector<8x10xf32>
    %482 = arith.subf %481, %439 : vector<8x10xf32>
    %cst_191 = arith.constant 1.000000e+00 : f32
    %483 = vector.broadcast %cst_191 : f32 to vector<8x10xf32>
    %484 = arith.mulf %483, %482 : vector<8x10xf32>
    %485 = arith.subf %480, %484 : vector<8x10xf32>
    %486 = arith.subf %485, %484 : vector<8x10xf32>
    %cst_192 = arith.constant 1.000000e+01 : f32
    %487 = vector.broadcast %cst_192 : f32 to vector<8x10xf32>
    %488 = arith.mulf %486, %487 : vector<8x10xf32>
    %489 = arith.mulf %488, %488 : vector<8x10xf32>
    %cst_193 = arith.constant dense<0.000000e+00> : vector<8xf32>
    %490 = vector.multi_reduction <add>, %489, %cst_193 [1] : vector<8x10xf32> to vector<8xf32>
    %491 = vector.shape_cast %490 : vector<8xf32> to vector<8x1xf32>
    %cst_194 = arith.constant 5.000000e-01 : f32
    %492 = vector.broadcast %cst_194 : f32 to vector<8x1xf32>
    %493 = arith.mulf %492, %491 : vector<8x1xf32>
    %494 = vector.broadcast %449 : f32 to vector<8x10xf32>
    %495 = arith.mulf %485, %494 : vector<8x10xf32>
    %496 = arith.addf %439, %495 : vector<8x10xf32>
    %c2_195 = arith.constant 2 : index
    %c0_196 = arith.constant 0 : index
    %c0_197 = arith.constant 0 : index
    %497 = vector.load %arg5[%c2_195, %c0_196, %c0_197] : memref<7x8x10xf32, #tpu.memory_space<vmem>>, vector<1x8x10xf32>
    %498 = vector.shape_cast %497 : vector<1x8x10xf32> to vector<8x10xf32>
    %cst_198 = arith.constant 1.000000e-01 : f32
    %499 = vector.broadcast %cst_198 : f32 to vector<8x10xf32>
    %500 = arith.mulf %499, %498 : vector<8x10xf32>
    %501 = arith.addf %496, %500 : vector<8x10xf32>
    %502 = vector.broadcast %449 : f32 to vector<8x1xf32>
    %503 = arith.mulf %493, %502 : vector<8x1xf32>
    %504 = arith.addf %442, %503 : vector<8x1xf32>
    %c3_199 = arith.constant 3 : index
    %c0_200 = arith.constant 0 : index
    %c0_201 = arith.constant 0 : index
    %505 = vector.load %arg32[%c3_199, %c0_200, %c0_201] : memref<8x8x10xf32, #tpu.memory_space<vmem>>, vector<1x8x10xf32>
    %506 = vector.shape_cast %505 : vector<1x8x10xf32> to vector<8x10xf32>
    %507 = vector.shape_cast %501 : vector<8x10xf32> to vector<1x8x10xf32>
    tpu.vector_store %arg32[%c3_199, %c0_200, %c0_201], %507 {strides = array<i32>} : memref<8x8x10xf32, #tpu.memory_space<vmem>>, vector<1x8x10xf32>,
    %c3_202 = arith.constant 3 : index
    %c0_203 = arith.constant 0 : index
    %c0_204 = arith.constant 0 : index
    %508 = vector.load %arg33[%c3_202, %c0_203, %c0_204] : memref<8x8x1xf32, #tpu.memory_space<vmem>>, vector<1x8x1xf32>
    %509 = vector.shape_cast %508 : vector<1x8x1xf32> to vector<8x1xf32>
    %510 = vector.shape_cast %504 : vector<8x1xf32> to vector<1x8x1xf32>
    tpu.vector_store %arg33[%c3_202, %c0_203, %c0_204], %510 {strides = array<i32>} : memref<8x8x1xf32, #tpu.memory_space<vmem>>, vector<1x8x1xf32>,
    %c3_205 = arith.constant 3 : index
    %511 = memref.load %arg1[%c3_205] : memref<7xf32, #tpu.memory_space<smem>>
    %512 = arith.truncf %501 : vector<8x10xf32> to vector<8x10xbf16>
    %cst_206 = arith.constant dense<0.000000e+00> : vector<8x40xf32>
    %513 = tpu.matmul %512, %299, %cst_206 {dimension_numbers = #tpu.dot_dimension_numbers<[1], [0], [0], [1], [0, 0, 1, 1], [], []>} : vector<8x10xbf16>, vector<10x40xbf16>, vector<8x40xf32> -> vector<8x40xf32>
    %514 = arith.addf %513, %279 : vector<8x40xf32>
    %515 = vector.broadcast %300 : vector<1x40xf32> to vector<8x40xf32>
    %516 = arith.addf %514, %515 : vector<8x40xf32>
    %cst_207 = arith.constant 0.000000e+00 : f32
    %517 = vector.broadcast %cst_207 : f32 to vector<8x40xf32>
    %518 = arith.maximumf %516, %517 : vector<8x40xf32>
    %519 = arith.truncf %518 : vector<8x40xf32> to vector<8x40xbf16>
    %cst_208 = arith.constant dense<0.000000e+00> : vector<8x40xf32>
    %520 = tpu.matmul %519, %304, %cst_208 {dimension_numbers = #tpu.dot_dimension_numbers<[1], [0], [0], [1], [0, 0, 1, 1], [], []>} : vector<8x40xbf16>, vector<40x40xbf16>, vector<8x40xf32> -> vector<8x40xf32>
    %521 = vector.broadcast %312 : vector<1x40xf32> to vector<8x40xf32>
    %522 = arith.addf %520, %521 : vector<8x40xf32>
    %523 = math.tanh %522 : vector<8x40xf32>
    %524 = arith.truncf %523 : vector<8x40xf32> to vector<8x40xbf16>
    %cst_209 = arith.constant dense<0.000000e+00> : vector<8x40xf32>
    %525 = tpu.matmul %524, %306, %cst_209 {dimension_numbers = #tpu.dot_dimension_numbers<[1], [0], [0], [1], [0, 0, 1, 1], [], []>} : vector<8x40xbf16>, vector<40x40xbf16>, vector<8x40xf32> -> vector<8x40xf32>
    %526 = vector.broadcast %314 : vector<1x40xf32> to vector<8x40xf32>
    %527 = arith.addf %525, %526 : vector<8x40xf32>
    %528 = math.tanh %527 : vector<8x40xf32>
    %529 = arith.truncf %528 : vector<8x40xf32> to vector<8x40xbf16>
    %cst_210 = arith.constant dense<0.000000e+00> : vector<8x40xf32>
    %530 = tpu.matmul %529, %308, %cst_210 {dimension_numbers = #tpu.dot_dimension_numbers<[1], [0], [0], [1], [0, 0, 1, 1], [], []>} : vector<8x40xbf16>, vector<40x40xbf16>, vector<8x40xf32> -> vector<8x40xf32>
    %531 = vector.broadcast %316 : vector<1x40xf32> to vector<8x40xf32>
    %532 = arith.addf %530, %531 : vector<8x40xf32>
    %533 = math.tanh %532 : vector<8x40xf32>
    %534 = arith.truncf %533 : vector<8x40xf32> to vector<8x40xbf16>
    %cst_211 = arith.constant dense<0.000000e+00> : vector<8x40xf32>
    %535 = tpu.matmul %534, %310, %cst_211 {dimension_numbers = #tpu.dot_dimension_numbers<[1], [0], [0], [1], [0, 0, 1, 1], [], []>} : vector<8x40xbf16>, vector<40x40xbf16>, vector<8x40xf32> -> vector<8x40xf32>
    %536 = vector.broadcast %318 : vector<1x40xf32> to vector<8x40xf32>
    %537 = arith.addf %535, %536 : vector<8x40xf32>
    %538 = math.tanh %537 : vector<8x40xf32>
    %539 = arith.truncf %538 : vector<8x40xf32> to vector<8x40xbf16>
    %cst_212 = arith.constant dense<0.000000e+00> : vector<8x10xf32>
    %540 = tpu.matmul %539, %301, %cst_212 {dimension_numbers = #tpu.dot_dimension_numbers<[1], [0], [0], [1], [0, 0, 1, 1], [], []>} : vector<8x40xbf16>, vector<40x10xbf16>, vector<8x10xf32> -> vector<8x10xf32>
    %541 = vector.broadcast %302 : vector<1x10xf32> to vector<8x10xf32>
    %542 = arith.addf %540, %541 : vector<8x10xf32>
    %cst_213 = arith.constant 0.000000e+00 : f32
    %543 = vector.broadcast %cst_213 : f32 to vector<8x10xf32>
    %544 = arith.subf %543, %501 : vector<8x10xf32>
    %cst_214 = arith.constant 1.000000e+00 : f32
    %545 = vector.broadcast %cst_214 : f32 to vector<8x10xf32>
    %546 = arith.mulf %545, %544 : vector<8x10xf32>
    %547 = arith.subf %542, %546 : vector<8x10xf32>
    %548 = arith.subf %547, %546 : vector<8x10xf32>
    %cst_215 = arith.constant 1.000000e+01 : f32
    %549 = vector.broadcast %cst_215 : f32 to vector<8x10xf32>
    %550 = arith.mulf %548, %549 : vector<8x10xf32>
    %551 = arith.mulf %550, %550 : vector<8x10xf32>
    %cst_216 = arith.constant dense<0.000000e+00> : vector<8xf32>
    %552 = vector.multi_reduction <add>, %551, %cst_216 [1] : vector<8x10xf32> to vector<8xf32>
    %553 = vector.shape_cast %552 : vector<8xf32> to vector<8x1xf32>
    %cst_217 = arith.constant 5.000000e-01 : f32
    %554 = vector.broadcast %cst_217 : f32 to vector<8x1xf32>
    %555 = arith.mulf %554, %553 : vector<8x1xf32>
    %556 = vector.broadcast %511 : f32 to vector<8x10xf32>
    %557 = arith.mulf %547, %556 : vector<8x10xf32>
    %558 = arith.addf %501, %557 : vector<8x10xf32>
    %c3_218 = arith.constant 3 : index
    %c0_219 = arith.constant 0 : index
    %c0_220 = arith.constant 0 : index
    %559 = vector.load %arg5[%c3_218, %c0_219, %c0_220] : memref<7x8x10xf32, #tpu.memory_space<vmem>>, vector<1x8x10xf32>
    %560 = vector.shape_cast %559 : vector<1x8x10xf32> to vector<8x10xf32>
    %cst_221 = arith.constant 1.000000e-01 : f32
    %561 = vector.broadcast %cst_221 : f32 to vector<8x10xf32>
    %562 = arith.mulf %561, %560 : vector<8x10xf32>
    %563 = arith.addf %558, %562 : vector<8x10xf32>
    %564 = vector.broadcast %511 : f32 to vector<8x1xf32>
    %565 = arith.mulf %555, %564 : vector<8x1xf32>
    %566 = arith.addf %504, %565 : vector<8x1xf32>
    %c4 = arith.constant 4 : index
    %c0_222 = arith.constant 0 : index
    %c0_223 = arith.constant 0 : index
    %567 = vector.load %arg32[%c4, %c0_222, %c0_223] : memref<8x8x10xf32, #tpu.memory_space<vmem>>, vector<1x8x10xf32>
    %568 = vector.shape_cast %567 : vector<1x8x10xf32> to vector<8x10xf32>
    %569 = vector.shape_cast %563 : vector<8x10xf32> to vector<1x8x10xf32>
    tpu.vector_store %arg32[%c4, %c0_222, %c0_223], %569 {strides = array<i32>} : memref<8x8x10xf32, #tpu.memory_space<vmem>>, vector<1x8x10xf32>,
    %c4_224 = arith.constant 4 : index
    %c0_225 = arith.constant 0 : index
    %c0_226 = arith.constant 0 : index
    %570 = vector.load %arg33[%c4_224, %c0_225, %c0_226] : memref<8x8x1xf32, #tpu.memory_space<vmem>>, vector<1x8x1xf32>
    %571 = vector.shape_cast %570 : vector<1x8x1xf32> to vector<8x1xf32>
    %572 = vector.shape_cast %566 : vector<8x1xf32> to vector<1x8x1xf32>
    tpu.vector_store %arg33[%c4_224, %c0_225, %c0_226], %572 {strides = array<i32>} : memref<8x8x1xf32, #tpu.memory_space<vmem>>, vector<1x8x1xf32>,
    %c4_227 = arith.constant 4 : index
    %573 = memref.load %arg1[%c4_227] : memref<7xf32, #tpu.memory_space<smem>>
    %574 = arith.truncf %563 : vector<8x10xf32> to vector<8x10xbf16>
    %cst_228 = arith.constant dense<0.000000e+00> : vector<8x40xf32>
    %575 = tpu.matmul %574, %299, %cst_228 {dimension_numbers = #tpu.dot_dimension_numbers<[1], [0], [0], [1], [0, 0, 1, 1], [], []>} : vector<8x10xbf16>, vector<10x40xbf16>, vector<8x40xf32> -> vector<8x40xf32>
    %576 = arith.addf %575, %283 : vector<8x40xf32>
    %577 = vector.broadcast %300 : vector<1x40xf32> to vector<8x40xf32>
    %578 = arith.addf %576, %577 : vector<8x40xf32>
    %cst_229 = arith.constant 0.000000e+00 : f32
    %579 = vector.broadcast %cst_229 : f32 to vector<8x40xf32>
    %580 = arith.maximumf %578, %579 : vector<8x40xf32>
    %581 = arith.truncf %580 : vector<8x40xf32> to vector<8x40xbf16>
    %cst_230 = arith.constant dense<0.000000e+00> : vector<8x40xf32>
    %582 = tpu.matmul %581, %304, %cst_230 {dimension_numbers = #tpu.dot_dimension_numbers<[1], [0], [0], [1], [0, 0, 1, 1], [], []>} : vector<8x40xbf16>, vector<40x40xbf16>, vector<8x40xf32> -> vector<8x40xf32>
    %583 = vector.broadcast %312 : vector<1x40xf32> to vector<8x40xf32>
    %584 = arith.addf %582, %583 : vector<8x40xf32>
    %585 = math.tanh %584 : vector<8x40xf32>
    %586 = arith.truncf %585 : vector<8x40xf32> to vector<8x40xbf16>
    %cst_231 = arith.constant dense<0.000000e+00> : vector<8x40xf32>
    %587 = tpu.matmul %586, %306, %cst_231 {dimension_numbers = #tpu.dot_dimension_numbers<[1], [0], [0], [1], [0, 0, 1, 1], [], []>} : vector<8x40xbf16>, vector<40x40xbf16>, vector<8x40xf32> -> vector<8x40xf32>
    %588 = vector.broadcast %314 : vector<1x40xf32> to vector<8x40xf32>
    %589 = arith.addf %587, %588 : vector<8x40xf32>
    %590 = math.tanh %589 : vector<8x40xf32>
    %591 = arith.truncf %590 : vector<8x40xf32> to vector<8x40xbf16>
    %cst_232 = arith.constant dense<0.000000e+00> : vector<8x40xf32>
    %592 = tpu.matmul %591, %308, %cst_232 {dimension_numbers = #tpu.dot_dimension_numbers<[1], [0], [0], [1], [0, 0, 1, 1], [], []>} : vector<8x40xbf16>, vector<40x40xbf16>, vector<8x40xf32> -> vector<8x40xf32>
    %593 = vector.broadcast %316 : vector<1x40xf32> to vector<8x40xf32>
    %594 = arith.addf %592, %593 : vector<8x40xf32>
    %595 = math.tanh %594 : vector<8x40xf32>
    %596 = arith.truncf %595 : vector<8x40xf32> to vector<8x40xbf16>
    %cst_233 = arith.constant dense<0.000000e+00> : vector<8x40xf32>
    %597 = tpu.matmul %596, %310, %cst_233 {dimension_numbers = #tpu.dot_dimension_numbers<[1], [0], [0], [1], [0, 0, 1, 1], [], []>} : vector<8x40xbf16>, vector<40x40xbf16>, vector<8x40xf32> -> vector<8x40xf32>
    %598 = vector.broadcast %318 : vector<1x40xf32> to vector<8x40xf32>
    %599 = arith.addf %597, %598 : vector<8x40xf32>
    %600 = math.tanh %599 : vector<8x40xf32>
    %601 = arith.truncf %600 : vector<8x40xf32> to vector<8x40xbf16>
    %cst_234 = arith.constant dense<0.000000e+00> : vector<8x10xf32>
    %602 = tpu.matmul %601, %301, %cst_234 {dimension_numbers = #tpu.dot_dimension_numbers<[1], [0], [0], [1], [0, 0, 1, 1], [], []>} : vector<8x40xbf16>, vector<40x10xbf16>, vector<8x10xf32> -> vector<8x10xf32>
    %603 = vector.broadcast %302 : vector<1x10xf32> to vector<8x10xf32>
    %604 = arith.addf %602, %603 : vector<8x10xf32>
    %cst_235 = arith.constant 0.000000e+00 : f32
    %605 = vector.broadcast %cst_235 : f32 to vector<8x10xf32>
    %606 = arith.subf %605, %563 : vector<8x10xf32>
    %cst_236 = arith.constant 1.000000e+00 : f32
    %607 = vector.broadcast %cst_236 : f32 to vector<8x10xf32>
    %608 = arith.mulf %607, %606 : vector<8x10xf32>
    %609 = arith.subf %604, %608 : vector<8x10xf32>
    %610 = arith.subf %609, %608 : vector<8x10xf32>
    %cst_237 = arith.constant 1.000000e+01 : f32
    %611 = vector.broadcast %cst_237 : f32 to vector<8x10xf32>
    %612 = arith.mulf %610, %611 : vector<8x10xf32>
    %613 = arith.mulf %612, %612 : vector<8x10xf32>
    %cst_238 = arith.constant dense<0.000000e+00> : vector<8xf32>
    %614 = vector.multi_reduction <add>, %613, %cst_238 [1] : vector<8x10xf32> to vector<8xf32>
    %615 = vector.shape_cast %614 : vector<8xf32> to vector<8x1xf32>
    %cst_239 = arith.constant 5.000000e-01 : f32
    %616 = vector.broadcast %cst_239 : f32 to vector<8x1xf32>
    %617 = arith.mulf %616, %615 : vector<8x1xf32>
    %618 = vector.broadcast %573 : f32 to vector<8x10xf32>
    %619 = arith.mulf %609, %618 : vector<8x10xf32>
    %620 = arith.addf %563, %619 : vector<8x10xf32>
    %c4_240 = arith.constant 4 : index
    %c0_241 = arith.constant 0 : index
    %c0_242 = arith.constant 0 : index
    %621 = vector.load %arg5[%c4_240, %c0_241, %c0_242] : memref<7x8x10xf32, #tpu.memory_space<vmem>>, vector<1x8x10xf32>
    %622 = vector.shape_cast %621 : vector<1x8x10xf32> to vector<8x10xf32>
    %cst_243 = arith.constant 1.000000e-01 : f32
    %623 = vector.broadcast %cst_243 : f32 to vector<8x10xf32>
    %624 = arith.mulf %623, %622 : vector<8x10xf32>
    %625 = arith.addf %620, %624 : vector<8x10xf32>
    %626 = vector.broadcast %573 : f32 to vector<8x1xf32>
    %627 = arith.mulf %617, %626 : vector<8x1xf32>
    %628 = arith.addf %566, %627 : vector<8x1xf32>
    %c5 = arith.constant 5 : index
    %c0_244 = arith.constant 0 : index
    %c0_245 = arith.constant 0 : index
    %629 = vector.load %arg32[%c5, %c0_244, %c0_245] : memref<8x8x10xf32, #tpu.memory_space<vmem>>, vector<1x8x10xf32>
    %630 = vector.shape_cast %629 : vector<1x8x10xf32> to vector<8x10xf32>
    %631 = vector.shape_cast %625 : vector<8x10xf32> to vector<1x8x10xf32>
    tpu.vector_store %arg32[%c5, %c0_244, %c0_245], %631 {strides = array<i32>} : memref<8x8x10xf32, #tpu.memory_space<vmem>>, vector<1x8x10xf32>,
    %c5_246 = arith.constant 5 : index
    %c0_247 = arith.constant 0 : index
    %c0_248 = arith.constant 0 : index
    %632 = vector.load %arg33[%c5_246, %c0_247, %c0_248] : memref<8x8x1xf32, #tpu.memory_space<vmem>>, vector<1x8x1xf32>
    %633 = vector.shape_cast %632 : vector<1x8x1xf32> to vector<8x1xf32>
    %634 = vector.shape_cast %628 : vector<8x1xf32> to vector<1x8x1xf32>
    tpu.vector_store %arg33[%c5_246, %c0_247, %c0_248], %634 {strides = array<i32>} : memref<8x8x1xf32, #tpu.memory_space<vmem>>, vector<1x8x1xf32>,
    %c5_249 = arith.constant 5 : index
    %635 = memref.load %arg1[%c5_249] : memref<7xf32, #tpu.memory_space<smem>>
    %636 = arith.truncf %625 : vector<8x10xf32> to vector<8x10xbf16>
    %cst_250 = arith.constant dense<0.000000e+00> : vector<8x40xf32>
    %637 = tpu.matmul %636, %299, %cst_250 {dimension_numbers = #tpu.dot_dimension_numbers<[1], [0], [0], [1], [0, 0, 1, 1], [], []>} : vector<8x10xbf16>, vector<10x40xbf16>, vector<8x40xf32> -> vector<8x40xf32>
    %638 = arith.addf %637, %287 : vector<8x40xf32>
    %639 = vector.broadcast %300 : vector<1x40xf32> to vector<8x40xf32>
    %640 = arith.addf %638, %639 : vector<8x40xf32>
    %cst_251 = arith.constant 0.000000e+00 : f32
    %641 = vector.broadcast %cst_251 : f32 to vector<8x40xf32>
    %642 = arith.maximumf %640, %641 : vector<8x40xf32>
    %643 = arith.truncf %642 : vector<8x40xf32> to vector<8x40xbf16>
    %cst_252 = arith.constant dense<0.000000e+00> : vector<8x40xf32>
    %644 = tpu.matmul %643, %304, %cst_252 {dimension_numbers = #tpu.dot_dimension_numbers<[1], [0], [0], [1], [0, 0, 1, 1], [], []>} : vector<8x40xbf16>, vector<40x40xbf16>, vector<8x40xf32> -> vector<8x40xf32>
    %645 = vector.broadcast %312 : vector<1x40xf32> to vector<8x40xf32>
    %646 = arith.addf %644, %645 : vector<8x40xf32>
    %647 = math.tanh %646 : vector<8x40xf32>
    %648 = arith.truncf %647 : vector<8x40xf32> to vector<8x40xbf16>
    %cst_253 = arith.constant dense<0.000000e+00> : vector<8x40xf32>
    %649 = tpu.matmul %648, %306, %cst_253 {dimension_numbers = #tpu.dot_dimension_numbers<[1], [0], [0], [1], [0, 0, 1, 1], [], []>} : vector<8x40xbf16>, vector<40x40xbf16>, vector<8x40xf32> -> vector<8x40xf32>
    %650 = vector.broadcast %314 : vector<1x40xf32> to vector<8x40xf32>
    %651 = arith.addf %649, %650 : vector<8x40xf32>
    %652 = math.tanh %651 : vector<8x40xf32>
    %653 = arith.truncf %652 : vector<8x40xf32> to vector<8x40xbf16>
    %cst_254 = arith.constant dense<0.000000e+00> : vector<8x40xf32>
    %654 = tpu.matmul %653, %308, %cst_254 {dimension_numbers = #tpu.dot_dimension_numbers<[1], [0], [0], [1], [0, 0, 1, 1], [], []>} : vector<8x40xbf16>, vector<40x40xbf16>, vector<8x40xf32> -> vector<8x40xf32>
    %655 = vector.broadcast %316 : vector<1x40xf32> to vector<8x40xf32>
    %656 = arith.addf %654, %655 : vector<8x40xf32>
    %657 = math.tanh %656 : vector<8x40xf32>
    %658 = arith.truncf %657 : vector<8x40xf32> to vector<8x40xbf16>
    %cst_255 = arith.constant dense<0.000000e+00> : vector<8x40xf32>
    %659 = tpu.matmul %658, %310, %cst_255 {dimension_numbers = #tpu.dot_dimension_numbers<[1], [0], [0], [1], [0, 0, 1, 1], [], []>} : vector<8x40xbf16>, vector<40x40xbf16>, vector<8x40xf32> -> vector<8x40xf32>
    %660 = vector.broadcast %318 : vector<1x40xf32> to vector<8x40xf32>
    %661 = arith.addf %659, %660 : vector<8x40xf32>
    %662 = math.tanh %661 : vector<8x40xf32>
    %663 = arith.truncf %662 : vector<8x40xf32> to vector<8x40xbf16>
    %cst_256 = arith.constant dense<0.000000e+00> : vector<8x10xf32>
    %664 = tpu.matmul %663, %301, %cst_256 {dimension_numbers = #tpu.dot_dimension_numbers<[1], [0], [0], [1], [0, 0, 1, 1], [], []>} : vector<8x40xbf16>, vector<40x10xbf16>, vector<8x10xf32> -> vector<8x10xf32>
    %665 = vector.broadcast %302 : vector<1x10xf32> to vector<8x10xf32>
    %666 = arith.addf %664, %665 : vector<8x10xf32>
    %cst_257 = arith.constant 0.000000e+00 : f32
    %667 = vector.broadcast %cst_257 : f32 to vector<8x10xf32>
    %668 = arith.subf %667, %625 : vector<8x10xf32>
    %cst_258 = arith.constant 1.000000e+00 : f32
    %669 = vector.broadcast %cst_258 : f32 to vector<8x10xf32>
    %670 = arith.mulf %669, %668 : vector<8x10xf32>
    %671 = arith.subf %666, %670 : vector<8x10xf32>
    %672 = arith.subf %671, %670 : vector<8x10xf32>
    %cst_259 = arith.constant 1.000000e+01 : f32
    %673 = vector.broadcast %cst_259 : f32 to vector<8x10xf32>
    %674 = arith.mulf %672, %673 : vector<8x10xf32>
    %675 = arith.mulf %674, %674 : vector<8x10xf32>
    %cst_260 = arith.constant dense<0.000000e+00> : vector<8xf32>
    %676 = vector.multi_reduction <add>, %675, %cst_260 [1] : vector<8x10xf32> to vector<8xf32>
    %677 = vector.shape_cast %676 : vector<8xf32> to vector<8x1xf32>
    %cst_261 = arith.constant 5.000000e-01 : f32
    %678 = vector.broadcast %cst_261 : f32 to vector<8x1xf32>
    %679 = arith.mulf %678, %677 : vector<8x1xf32>
    %680 = vector.broadcast %635 : f32 to vector<8x10xf32>
    %681 = arith.mulf %671, %680 : vector<8x10xf32>
    %682 = arith.addf %625, %681 : vector<8x10xf32>
    %c5_262 = arith.constant 5 : index
    %c0_263 = arith.constant 0 : index
    %c0_264 = arith.constant 0 : index
    %683 = vector.load %arg5[%c5_262, %c0_263, %c0_264] : memref<7x8x10xf32, #tpu.memory_space<vmem>>, vector<1x8x10xf32>
    %684 = vector.shape_cast %683 : vector<1x8x10xf32> to vector<8x10xf32>
    %cst_265 = arith.constant 1.000000e-01 : f32
    %685 = vector.broadcast %cst_265 : f32 to vector<8x10xf32>
    %686 = arith.mulf %685, %684 : vector<8x10xf32>
    %687 = arith.addf %682, %686 : vector<8x10xf32>
    %688 = vector.broadcast %635 : f32 to vector<8x1xf32>
    %689 = arith.mulf %679, %688 : vector<8x1xf32>
    %690 = arith.addf %628, %689 : vector<8x1xf32>
    %c6 = arith.constant 6 : index
    %c0_266 = arith.constant 0 : index
    %c0_267 = arith.constant 0 : index
    %691 = vector.load %arg32[%c6, %c0_266, %c0_267] : memref<8x8x10xf32, #tpu.memory_space<vmem>>, vector<1x8x10xf32>
    %692 = vector.shape_cast %691 : vector<1x8x10xf32> to vector<8x10xf32>
    %693 = vector.shape_cast %687 : vector<8x10xf32> to vector<1x8x10xf32>
    tpu.vector_store %arg32[%c6, %c0_266, %c0_267], %693 {strides = array<i32>} : memref<8x8x10xf32, #tpu.memory_space<vmem>>, vector<1x8x10xf32>,
    %c6_268 = arith.constant 6 : index
    %c0_269 = arith.constant 0 : index
    %c0_270 = arith.constant 0 : index
    %694 = vector.load %arg33[%c6_268, %c0_269, %c0_270] : memref<8x8x1xf32, #tpu.memory_space<vmem>>, vector<1x8x1xf32>
    %695 = vector.shape_cast %694 : vector<1x8x1xf32> to vector<8x1xf32>
    %696 = vector.shape_cast %690 : vector<8x1xf32> to vector<1x8x1xf32>
    tpu.vector_store %arg33[%c6_268, %c0_269, %c0_270], %696 {strides = array<i32>} : memref<8x8x1xf32, #tpu.memory_space<vmem>>, vector<1x8x1xf32>,
    %c6_271 = arith.constant 6 : index
    %697 = memref.load %arg1[%c6_271] : memref<7xf32, #tpu.memory_space<smem>>
    %698 = arith.truncf %687 : vector<8x10xf32> to vector<8x10xbf16>
    %cst_272 = arith.constant dense<0.000000e+00> : vector<8x40xf32>
    %699 = tpu.matmul %698, %299, %cst_272 {dimension_numbers = #tpu.dot_dimension_numbers<[1], [0], [0], [1], [0, 0, 1, 1], [], []>} : vector<8x10xbf16>, vector<10x40xbf16>, vector<8x40xf32> -> vector<8x40xf32>
    %700 = arith.addf %699, %291 : vector<8x40xf32>
    %701 = vector.broadcast %300 : vector<1x40xf32> to vector<8x40xf32>
    %702 = arith.addf %700, %701 : vector<8x40xf32>
    %cst_273 = arith.constant 0.000000e+00 : f32
    %703 = vector.broadcast %cst_273 : f32 to vector<8x40xf32>
    %704 = arith.maximumf %702, %703 : vector<8x40xf32>
    %705 = arith.truncf %704 : vector<8x40xf32> to vector<8x40xbf16>
    %cst_274 = arith.constant dense<0.000000e+00> : vector<8x40xf32>
    %706 = tpu.matmul %705, %304, %cst_274 {dimension_numbers = #tpu.dot_dimension_numbers<[1], [0], [0], [1], [0, 0, 1, 1], [], []>} : vector<8x40xbf16>, vector<40x40xbf16>, vector<8x40xf32> -> vector<8x40xf32>
    %707 = vector.broadcast %312 : vector<1x40xf32> to vector<8x40xf32>
    %708 = arith.addf %706, %707 : vector<8x40xf32>
    %709 = math.tanh %708 : vector<8x40xf32>
    %710 = arith.truncf %709 : vector<8x40xf32> to vector<8x40xbf16>
    %cst_275 = arith.constant dense<0.000000e+00> : vector<8x40xf32>
    %711 = tpu.matmul %710, %306, %cst_275 {dimension_numbers = #tpu.dot_dimension_numbers<[1], [0], [0], [1], [0, 0, 1, 1], [], []>} : vector<8x40xbf16>, vector<40x40xbf16>, vector<8x40xf32> -> vector<8x40xf32>
    %712 = vector.broadcast %314 : vector<1x40xf32> to vector<8x40xf32>
    %713 = arith.addf %711, %712 : vector<8x40xf32>
    %714 = math.tanh %713 : vector<8x40xf32>
    %715 = arith.truncf %714 : vector<8x40xf32> to vector<8x40xbf16>
    %cst_276 = arith.constant dense<0.000000e+00> : vector<8x40xf32>
    %716 = tpu.matmul %715, %308, %cst_276 {dimension_numbers = #tpu.dot_dimension_numbers<[1], [0], [0], [1], [0, 0, 1, 1], [], []>} : vector<8x40xbf16>, vector<40x40xbf16>, vector<8x40xf32> -> vector<8x40xf32>
    %717 = vector.broadcast %316 : vector<1x40xf32> to vector<8x40xf32>
    %718 = arith.addf %716, %717 : vector<8x40xf32>
    %719 = math.tanh %718 : vector<8x40xf32>
    %720 = arith.truncf %719 : vector<8x40xf32> to vector<8x40xbf16>
    %cst_277 = arith.constant dense<0.000000e+00> : vector<8x40xf32>
    %721 = tpu.matmul %720, %310, %cst_277 {dimension_numbers = #tpu.dot_dimension_numbers<[1], [0], [0], [1], [0, 0, 1, 1], [], []>} : vector<8x40xbf16>, vector<40x40xbf16>, vector<8x40xf32> -> vector<8x40xf32>
    %722 = vector.broadcast %318 : vector<1x40xf32> to vector<8x40xf32>
    %723 = arith.addf %721, %722 : vector<8x40xf32>
    %724 = math.tanh %723 : vector<8x40xf32>
    %725 = arith.truncf %724 : vector<8x40xf32> to vector<8x40xbf16>
    %cst_278 = arith.constant dense<0.000000e+00> : vector<8x10xf32>
    %726 = tpu.matmul %725, %301, %cst_278 {dimension_numbers = #tpu.dot_dimension_numbers<[1], [0], [0], [1], [0, 0, 1, 1], [], []>} : vector<8x40xbf16>, vector<40x10xbf16>, vector<8x10xf32> -> vector<8x10xf32>
    %727 = vector.broadcast %302 : vector<1x10xf32> to vector<8x10xf32>
    %728 = arith.addf %726, %727 : vector<8x10xf32>
    %cst_279 = arith.constant 0.000000e+00 : f32
    %729 = vector.broadcast %cst_279 : f32 to vector<8x10xf32>
    %730 = arith.subf %729, %687 : vector<8x10xf32>
    %cst_280 = arith.constant 1.000000e+00 : f32
    %731 = vector.broadcast %cst_280 : f32 to vector<8x10xf32>
    %732 = arith.mulf %731, %730 : vector<8x10xf32>
    %733 = arith.subf %728, %732 : vector<8x10xf32>
    %734 = arith.subf %733, %732 : vector<8x10xf32>
    %cst_281 = arith.constant 1.000000e+01 : f32
    %735 = vector.broadcast %cst_281 : f32 to vector<8x10xf32>
    %736 = arith.mulf %734, %735 : vector<8x10xf32>
    %737 = arith.mulf %736, %736 : vector<8x10xf32>
    %cst_282 = arith.constant dense<0.000000e+00> : vector<8xf32>
    %738 = vector.multi_reduction <add>, %737, %cst_282 [1] : vector<8x10xf32> to vector<8xf32>
    %739 = vector.shape_cast %738 : vector<8xf32> to vector<8x1xf32>
    %cst_283 = arith.constant 5.000000e-01 : f32
    %740 = vector.broadcast %cst_283 : f32 to vector<8x1xf32>
    %741 = arith.mulf %740, %739 : vector<8x1xf32>
    %742 = vector.broadcast %697 : f32 to vector<8x10xf32>
    %743 = arith.mulf %733, %742 : vector<8x10xf32>
    %744 = arith.addf %687, %743 : vector<8x10xf32>
    %c6_284 = arith.constant 6 : index
    %c0_285 = arith.constant 0 : index
    %c0_286 = arith.constant 0 : index
    %745 = vector.load %arg5[%c6_284, %c0_285, %c0_286] : memref<7x8x10xf32, #tpu.memory_space<vmem>>, vector<1x8x10xf32>
    %746 = vector.shape_cast %745 : vector<1x8x10xf32> to vector<8x10xf32>
    %cst_287 = arith.constant 1.000000e-01 : f32
    %747 = vector.broadcast %cst_287 : f32 to vector<8x10xf32>
    %748 = arith.mulf %747, %746 : vector<8x10xf32>
    %749 = arith.addf %744, %748 : vector<8x10xf32>
    %750 = vector.broadcast %697 : f32 to vector<8x1xf32>
    %751 = arith.mulf %741, %750 : vector<8x1xf32>
    %752 = arith.addf %690, %751 : vector<8x1xf32>
    %c7 = arith.constant 7 : index
    %c0_288 = arith.constant 0 : index
    %c0_289 = arith.constant 0 : index
    %753 = vector.load %arg32[%c7, %c0_288, %c0_289] : memref<8x8x10xf32, #tpu.memory_space<vmem>>, vector<1x8x10xf32>
    %754 = vector.shape_cast %753 : vector<1x8x10xf32> to vector<8x10xf32>
    %755 = vector.shape_cast %749 : vector<8x10xf32> to vector<1x8x10xf32>
    tpu.vector_store %arg32[%c7, %c0_288, %c0_289], %755 {strides = array<i32>} : memref<8x8x10xf32, #tpu.memory_space<vmem>>, vector<1x8x10xf32>,
    %c7_290 = arith.constant 7 : index
    %c0_291 = arith.constant 0 : index
    %c0_292 = arith.constant 0 : index
    %756 = vector.load %arg33[%c7_290, %c0_291, %c0_292] : memref<8x8x1xf32, #tpu.memory_space<vmem>>, vector<1x8x1xf32>
    %757 = vector.shape_cast %756 : vector<1x8x1xf32> to vector<8x1xf32>
    %758 = vector.shape_cast %752 : vector<8x1xf32> to vector<1x8x1xf32>
    tpu.vector_store %arg33[%c7_290, %c0_291, %c0_292], %758 {strides = array<i32>} : memref<8x8x1xf32, #tpu.memory_space<vmem>>, vector<1x8x1xf32>,
    %759 = tpu.concatenate %297, %377, %439, %501, %563, %625, %687, %749 in 0 : vector<8x10xf32>, vector<8x10xf32>, vector<8x10xf32>, vector<8x10xf32>, vector<8x10xf32>, vector<8x10xf32>, vector<8x10xf32>, vector<8x10xf32> -> vector<64x10xf32>
    %c0_293 = arith.constant 0 : index
    %c0_294 = arith.constant 0 : index
    %760 = vector.load %arg25[%c0_293, %c0_294] : memref<10x32xbf16, #tpu.memory_space<vmem>>, vector<10x32xbf16>
    %c0_295 = arith.constant 0 : index
    %c0_296 = arith.constant 0 : index
    %761 = vector.load %arg26[%c0_295, %c0_296] : memref<1x32xf32, #tpu.memory_space<vmem>>, vector<1x32xf32>
    %762 = arith.truncf %759 : vector<64x10xf32> to vector<64x10xbf16>
    %cst_297 = arith.constant dense<0.000000e+00> : vector<64x32xf32>
    %763 = tpu.matmul %762, %760, %cst_297 {dimension_numbers = #tpu.dot_dimension_numbers<[1], [0], [0], [1], [0, 0, 1, 1], [], []>} : vector<64x10xbf16>, vector<10x32xbf16>, vector<64x32xf32> -> vector<64x32xf32>
    %764 = vector.broadcast %761 : vector<1x32xf32> to vector<64x32xf32>
    %765 = arith.addf %763, %764 : vector<64x32xf32>
    %cst_298 = arith.constant 0.000000e+00 : f32
    %766 = vector.broadcast %cst_298 : f32 to vector<64x32xf32>
    %767 = arith.maximumf %765, %766 : vector<64x32xf32>
    %c0_299 = arith.constant 0 : index
    %c0_300 = arith.constant 0 : index
    %c0_301 = arith.constant 0 : index
    %768 = vector.load %arg27[%c0_299, %c0_300, %c0_301] : memref<3x32x32xbf16, #tpu.memory_space<vmem>>, vector<1x32x32xbf16>
    %769 = vector.shape_cast %768 : vector<1x32x32xbf16> to vector<32x32xbf16>
    %c0_302 = arith.constant 0 : index
    %c0_303 = arith.constant 0 : index
    %c0_304 = arith.constant 0 : index
    %770 = vector.load %arg28[%c0_302, %c0_303, %c0_304] : memref<3x1x32xf32, #tpu.memory_space<vmem>>, vector<1x1x32xf32>
    %771 = vector.shape_cast %770 : vector<1x1x32xf32> to vector<1x32xf32>
    %772 = arith.truncf %767 : vector<64x32xf32> to vector<64x32xbf16>
    %cst_305 = arith.constant dense<0.000000e+00> : vector<64x32xf32>
    %773 = tpu.matmul %772, %769, %cst_305 {dimension_numbers = #tpu.dot_dimension_numbers<[1], [0], [0], [1], [0, 0, 1, 1], [], []>} : vector<64x32xbf16>, vector<32x32xbf16>, vector<64x32xf32> -> vector<64x32xf32>
    %774 = vector.broadcast %771 : vector<1x32xf32> to vector<64x32xf32>
    %775 = arith.addf %773, %774 : vector<64x32xf32>
    %cst_306 = arith.constant 0.000000e+00 : f32
    %776 = vector.broadcast %cst_306 : f32 to vector<64x32xf32>
    %777 = arith.maximumf %775, %776 : vector<64x32xf32>
    %c1_307 = arith.constant 1 : index
    %c0_308 = arith.constant 0 : index
    %c0_309 = arith.constant 0 : index
    %778 = vector.load %arg27[%c1_307, %c0_308, %c0_309] : memref<3x32x32xbf16, #tpu.memory_space<vmem>>, vector<1x32x32xbf16>
    %779 = vector.shape_cast %778 : vector<1x32x32xbf16> to vector<32x32xbf16>
    %c1_310 = arith.constant 1 : index
    %c0_311 = arith.constant 0 : index
    %c0_312 = arith.constant 0 : index
    %780 = vector.load %arg28[%c1_310, %c0_311, %c0_312] : memref<3x1x32xf32, #tpu.memory_space<vmem>>, vector<1x1x32xf32>
    %781 = vector.shape_cast %780 : vector<1x1x32xf32> to vector<1x32xf32>
    %782 = arith.truncf %777 : vector<64x32xf32> to vector<64x32xbf16>
    %cst_313 = arith.constant dense<0.000000e+00> : vector<64x32xf32>
    %783 = tpu.matmul %782, %779, %cst_313 {dimension_numbers = #tpu.dot_dimension_numbers<[1], [0], [0], [1], [0, 0, 1, 1], [], []>} : vector<64x32xbf16>, vector<32x32xbf16>, vector<64x32xf32> -> vector<64x32xf32>
    %784 = vector.broadcast %781 : vector<1x32xf32> to vector<64x32xf32>
    %785 = arith.addf %783, %784 : vector<64x32xf32>
    %cst_314 = arith.constant 0.000000e+00 : f32
    %786 = vector.broadcast %cst_314 : f32 to vector<64x32xf32>
    %787 = arith.maximumf %785, %786 : vector<64x32xf32>
    %c2_315 = arith.constant 2 : index
    %c0_316 = arith.constant 0 : index
    %c0_317 = arith.constant 0 : index
    %788 = vector.load %arg27[%c2_315, %c0_316, %c0_317] : memref<3x32x32xbf16, #tpu.memory_space<vmem>>, vector<1x32x32xbf16>
    %789 = vector.shape_cast %788 : vector<1x32x32xbf16> to vector<32x32xbf16>
    %c2_318 = arith.constant 2 : index
    %c0_319 = arith.constant 0 : index
    %c0_320 = arith.constant 0 : index
    %790 = vector.load %arg28[%c2_318, %c0_319, %c0_320] : memref<3x1x32xf32, #tpu.memory_space<vmem>>, vector<1x1x32xf32>
    %791 = vector.shape_cast %790 : vector<1x1x32xf32> to vector<1x32xf32>
    %792 = arith.truncf %787 : vector<64x32xf32> to vector<64x32xbf16>
    %cst_321 = arith.constant dense<0.000000e+00> : vector<64x32xf32>
    %793 = tpu.matmul %792, %789, %cst_321 {dimension_numbers = #tpu.dot_dimension_numbers<[1], [0], [0], [1], [0, 0, 1, 1], [], []>} : vector<64x32xbf16>, vector<32x32xbf16>, vector<64x32xf32> -> vector<64x32xf32>
    %794 = vector.broadcast %791 : vector<1x32xf32> to vector<64x32xf32>
    %795 = arith.addf %793, %794 : vector<64x32xf32>
    %cst_322 = arith.constant 0.000000e+00 : f32
    %796 = vector.broadcast %cst_322 : f32 to vector<64x32xf32>
    %797 = arith.maximumf %795, %796 : vector<64x32xf32>
    %c0_323 = arith.constant 0 : index
    %c0_324 = arith.constant 0 : index
    %798 = vector.load %arg29[%c0_323, %c0_324] : memref<32x3xbf16, #tpu.memory_space<vmem>>, vector<32x3xbf16>
    %c0_325 = arith.constant 0 : index
    %c0_326 = arith.constant 0 : index
    %799 = vector.load %arg30[%c0_325, %c0_326] : memref<1x3xf32, #tpu.memory_space<vmem>>, vector<1x3xf32>
    %800 = arith.truncf %797 : vector<64x32xf32> to vector<64x32xbf16>
    %cst_327 = arith.constant dense<0.000000e+00> : vector<64x3xf32>
    %801 = tpu.matmul %800, %798, %cst_327 {dimension_numbers = #tpu.dot_dimension_numbers<[1], [0], [0], [1], [0, 0, 1, 1], [], []>} : vector<64x32xbf16>, vector<32x3xbf16>, vector<64x3xf32> -> vector<64x3xf32>
    %802 = vector.broadcast %799 : vector<1x3xf32> to vector<64x3xf32>
    %803 = arith.addf %801, %802 : vector<64x3xf32>
    %c0_328 = arith.constant 0 : index
    %c0_329 = arith.constant 0 : index
    %804 = vector.load %arg34[%c0_328, %c0_329] : memref<64x3xf32, #tpu.memory_space<vmem>>, vector<64x3xf32>
    tpu.vector_store %arg34[%c0_328, %c0_329], %803 {strides = array<i32>} : memref<64x3xf32, #tpu.memory_space<vmem>>, vector<64x3xf32>,
    return
  }
  func.func @transform_0(%arg0: i32) -> i32 {
    %c0_i32 = arith.constant 0 : i32
    %c0_i32_0 = arith.constant 0 : i32
    return %c0_i32 : i32
  }
  func.func @transform_1(%arg0: i32) -> (i32, i32) {
    %c0_i32 = arith.constant 0 : i32
    %c0_i32_0 = arith.constant 0 : i32
    %c0_i32_1 = arith.constant 0 : i32
    return %c0_i32, %c0_i32_0 : i32, i32
  }
  func.func @transform_2(%arg0: i32) -> (i32, i32) {
    %c0_i32 = arith.constant 0 : i32
    %c0_i32_0 = arith.constant 0 : i32
    %c0_i32_1 = arith.constant 0 : i32
    return %c0_i32, %c0_i32_0 : i32, i32
  }
  func.func @transform_3(%arg0: i32) -> (i32, i32) {
    %c0_i32 = arith.constant 0 : i32
    %c0_i32_0 = arith.constant 0 : i32
    %c0_i32_1 = arith.constant 0 : i32
    return %c0_i32, %c0_i32_0 : i32, i32
  }
  func.func @transform_4(%arg0: i32) -> (i32, i32, i32) {
    %c0_i32 = arith.constant 0 : i32
    %c0_i32_0 = arith.constant 0 : i32
    %c0_i32_1 = arith.constant 0 : i32
    %c0_i32_2 = arith.constant 0 : i32
    return %c0_i32, %c0_i32_0, %c0_i32_1 : i32, i32, i32
  }
  func.func @transform_5(%arg0: i32) -> (i32, i32) {
    %c0_i32 = arith.constant 0 : i32
    %c0_i32_0 = arith.constant 0 : i32
    %c0_i32_1 = arith.constant 0 : i32
    return %c0_i32, %c0_i32_0 : i32, i32
  }
  func.func @transform_6(%arg0: i32) -> (i32, i32) {
    %c0_i32 = arith.constant 0 : i32
    %c0_i32_0 = arith.constant 0 : i32
    %c0_i32_1 = arith.constant 0 : i32
    return %c0_i32, %c0_i32_0 : i32, i32
  }
  func.func @transform_7(%arg0: i32) -> (i32, i32) {
    %c0_i32 = arith.constant 0 : i32
    %c0_i32_0 = arith.constant 0 : i32
    %c0_i32_1 = arith.constant 0 : i32
    return %c0_i32, %c0_i32_0 : i32, i32
  }
  func.func @transform_8(%arg0: i32) -> (i32, i32) {
    %c0_i32 = arith.constant 0 : i32
    %c0_i32_0 = arith.constant 0 : i32
    %c0_i32_1 = arith.constant 0 : i32
    return %c0_i32, %c0_i32_0 : i32, i32
  }
  func.func @transform_9(%arg0: i32) -> (i32, i32) {
    %c0_i32 = arith.constant 0 : i32
    %c0_i32_0 = arith.constant 0 : i32
    %c0_i32_1 = arith.constant 0 : i32
    return %c0_i32, %c0_i32_0 : i32, i32
  }
  func.func @transform_10(%arg0: i32) -> (i32, i32) {
    %c0_i32 = arith.constant 0 : i32
    %c0_i32_0 = arith.constant 0 : i32
    %c0_i32_1 = arith.constant 0 : i32
    return %c0_i32, %c0_i32_0 : i32, i32
  }
  func.func @transform_11(%arg0: i32) -> (i32, i32) {
    %c0_i32 = arith.constant 0 : i32
    %c0_i32_0 = arith.constant 0 : i32
    %c0_i32_1 = arith.constant 0 : i32
    return %c0_i32, %c0_i32_0 : i32, i32
  }
  func.func @transform_12(%arg0: i32) -> (i32, i32) {
    %c0_i32 = arith.constant 0 : i32
    %c0_i32_0 = arith.constant 0 : i32
    %c0_i32_1 = arith.constant 0 : i32
    return %c0_i32, %c0_i32_0 : i32, i32
  }
  func.func @transform_13(%arg0: i32) -> (i32, i32, i32) {
    %c0_i32 = arith.constant 0 : i32
    %c0_i32_0 = arith.constant 0 : i32
    %c0_i32_1 = arith.constant 0 : i32
    %c0_i32_2 = arith.constant 0 : i32
    return %c0_i32, %c0_i32_0, %c0_i32_1 : i32, i32, i32
  }
  func.func @transform_14(%arg0: i32) -> (i32, i32, i32) {
    %c0_i32 = arith.constant 0 : i32
    %c0_i32_0 = arith.constant 0 : i32
    %c0_i32_1 = arith.constant 0 : i32
    %c0_i32_2 = arith.constant 0 : i32
    return %c0_i32, %c0_i32_0, %c0_i32_1 : i32, i32, i32
  }
  func.func @transform_15(%arg0: i32) -> (i32, i32) {
    %c0_i32 = arith.constant 0 : i32
    %c0_i32_0 = arith.constant 0 : i32
    %c0_i32_1 = arith.constant 0 : i32
    return %c0_i32, %c0_i32_0 : i32, i32
  }
  func.func @transform_16(%arg0: i32) -> (i32, i32) {
    %c0_i32 = arith.constant 0 : i32
    %c0_i32_0 = arith.constant 0 : i32
    %c0_i32_1 = arith.constant 0 : i32
    return %c0_i32, %c0_i32_0 : i32, i32
  }
  func.func @transform_17(%arg0: i32) -> (i32, i32) {
    %c0_i32 = arith.constant 0 : i32
    %c0_i32_0 = arith.constant 0 : i32
    %c0_i32_1 = arith.constant 0 : i32
    return %c0_i32, %c0_i32_0 : i32, i32
  }
  func.func @transform_18(%arg0: i32) -> (i32, i32) {
    %c0_i32 = arith.constant 0 : i32
    %c0_i32_0 = arith.constant 0 : i32
    %c0_i32_1 = arith.constant 0 : i32
    return %c0_i32, %c0_i32_0 : i32, i32
  }
  func.func @transform_19(%arg0: i32) -> (i32, i32) {
    %c0_i32 = arith.constant 0 : i32
    %c0_i32_0 = arith.constant 0 : i32
    %c0_i32_1 = arith.constant 0 : i32
    return %c0_i32, %c0_i32_0 : i32, i32
  }
  func.func @transform_20(%arg0: i32) -> (i32, i32, i32) {
    %c0_i32 = arith.constant 0 : i32
    %c0_i32_0 = arith.constant 0 : i32
    %c0_i32_1 = arith.constant 0 : i32
    %c0_i32_2 = arith.constant 0 : i32
    return %c0_i32, %c0_i32_0, %c0_i32_1 : i32, i32, i32
  }
  func.func @transform_21(%arg0: i32) -> (i32, i32, i32) {
    %c0_i32 = arith.constant 0 : i32
    %c0_i32_0 = arith.constant 0 : i32
    %c0_i32_1 = arith.constant 0 : i32
    %c0_i32_2 = arith.constant 0 : i32
    return %c0_i32, %c0_i32_0, %c0_i32_1 : i32, i32, i32
  }
  func.func @transform_22(%arg0: i32) -> (i32, i32) {
    %c0_i32 = arith.constant 0 : i32
    %c0_i32_0 = arith.constant 0 : i32
    %c0_i32_1 = arith.constant 0 : i32
    return %c0_i32, %c0_i32_0 : i32, i32
  }
  func.func @transform_23(%arg0: i32) -> (i32, i32) {
    %c0_i32 = arith.constant 0 : i32
    %c0_i32_0 = arith.constant 0 : i32
    %c0_i32_1 = arith.constant 0 : i32
    return %c0_i32, %c0_i32_0 : i32, i32
  }
  func.func @transform_24(%arg0: i32) -> (i32, i32) {
    %c0_i32 = arith.constant 0 : i32
    %c0_i32_0 = arith.constant 0 : i32
    %c0_i32_1 = arith.constant 0 : i32
    return %c0_i32, %c0_i32_0 : i32, i32
  }
  func.func @transform_25(%arg0: i32) -> (i32, i32) {
    %c0_i32 = arith.constant 0 : i32
    %c0_i32_0 = arith.constant 0 : i32
    %c0_i32_1 = arith.constant 0 : i32
    return %c0_i32, %c0_i32_0 : i32, i32
  }
  func.func @transform_26(%arg0: i32) -> (i32, i32, i32) {
    %c0_i32 = arith.constant 0 : i32
    %c0_i32_0 = arith.constant 0 : i32
    %c0_i32_1 = arith.constant 0 : i32
    %c0_i32_2 = arith.constant 0 : i32
    return %c0_i32, %c0_i32_0, %c0_i32_1 : i32, i32, i32
  }
  func.func @transform_27(%arg0: i32) -> (i32, i32, i32) {
    %c0_i32 = arith.constant 0 : i32
    %c0_i32_0 = arith.constant 0 : i32
    %c0_i32_1 = arith.constant 0 : i32
    %c0_i32_2 = arith.constant 0 : i32
    return %c0_i32, %c0_i32_0, %c0_i32_1 : i32, i32, i32
  }
  func.func @transform_28(%arg0: i32) -> (i32, i32) {
    %c0_i32 = arith.constant 0 : i32
    %c0_i32_0 = arith.constant 0 : i32
    %c0_i32_1 = arith.constant 0 : i32
    return %c0_i32, %c0_i32_0 : i32, i32
  }
  func.func @transform_29(%arg0: i32) -> (i32, i32) {
    %c0_i32 = arith.constant 0 : i32
    %c0_i32_0 = arith.constant 0 : i32
    %c0_i32_1 = arith.constant 0 : i32
    return %c0_i32, %c0_i32_0 : i32, i32
  }
  func.func @transform_30(%arg0: i32) -> (i32, i32) {
    %c0_i32 = arith.constant 0 : i32
    %c0_i32_0 = arith.constant 0 : i32
    %c0_i32_1 = arith.constant 0 : i32
    return %c0_i32, %c0_i32_0 : i32, i32
  }
  func.func @transform_31(%arg0: i32) -> (i32, i32, i32) {
    %c0_i32 = arith.constant 0 : i32
    %c0_i32_0 = arith.constant 0 : i32
    %c0_i32_1 = arith.constant 0 : i32
    %c0_i32_2 = arith.constant 0 : i32
    return %c0_i32, %c0_i32_0, %c0_i32_1 : i32, i32, i32
  }
  func.func @transform_32(%arg0: i32) -> (i32, i32, i32) {
    %c0_i32 = arith.constant 0 : i32
    %c0_i32_0 = arith.constant 0 : i32
    %c0_i32_1 = arith.constant 0 : i32
    %c0_i32_2 = arith.constant 0 : i32
    return %c0_i32, %c0_i32_0, %c0_i32_1 : i32, i32, i32
  }
  func.func @transform_33(%arg0: i32) -> (i32, i32) {
    %c0_i32 = arith.constant 0 : i32
    %c0_i32_0 = arith.constant 0 : i32
    %c0_i32_1 = arith.constant 0 : i32
    return %c0_i32, %c0_i32_0 : i32, i32
  }
}

</mosaic_0001>

<llo_original>
// kernel: squeeze.6
$region0: #{squeeze.6}
  %s0 = inlined_call_operand.vmem [shape: f32[8,4], index: 0, kind: input, shape index: {}]
  %s1 = inlined_call_operand.vmem [shape: f32[2,2,8], index: 1, kind: output, shape index: {}]
  $region1: #{squeeze.6} parent=0
    #allocation0 [shape = 'u8[8192]{0}', space=vmem, size = 0x2000, scoped, tag = 'scoped mem for output reshape']
    %v2 = vld [vmem:[%s0] ss:$2 sm:$0xf]
    %vm3 = vcmask 31744
    %4 = vst.msk [vmem:[#allocation0] sm:$0x3] %vm3, %v2
    %s5 = scalar_lea.vmem [#allocation0], 6
    %6 = vst.msk [vmem:[%s5] sm:$0xc] %vm3, %v2
    %s7 = scalar_lea.vmem %s0, 1
    %v8 = vld [vmem:[%s7] ss:$2 sm:$0xf]
    %9 = vrot.lane.b32.xlu0 %v8, 4
    %v10 = vpop.permute.xlu0 %9
    %vm11 = vcmask 64544
    %12 = vst.msk [vmem:[#allocation0] sm:$0x3] %vm11, %v10
    %s13 = scalar_lea.vmem [#allocation0], 6
    %14 = vst.msk [vmem:[%s13] sm:$0xc] %vm11, %v10
    %s16 = ssub.s32 4, 1
    %v17 = vld [vmem:[#allocation0] sm:%s16]
    %s19 = ssub.s32 4, 1
    %20 = vst [vmem:[%s1] sm:%s19] %v17
    %s21 = scalar_lea.vmem [#allocation0], 8
    %v22 = vld [vmem:[%s21] sm:%s16]
    %s24 = ssub.s32 4, 1
    %s25 = scalar_lea.vmem %s1, 2
    %26 = vst [vmem:[%s25] sm:%s24] %v22

// kernel: sde_vae_forward.1
$region0: #{sde_vae_forward.1}
  #allocation0 [shape = 'u32[]', space=smem, size = 0x4, offset = 0x4, fixed_abs, tag = 'smem constant byte address 0x4 - core index']
  #allocation1 [shape = 'u32[72,128]{1,0:T(1,128)}', space=vmem, size = 0x9000, scoped, tag = 'internal scratch']
  #allocation2 [shape = 'f32[48,384]{1,0:T(8,128)}', space=vmem, size = 0x12000, scoped, tag = 'scratch operand']
  %s0 = inlined_call_operand.smem [shape: u32[34], index: -1, kind: input, shape index: {}]
  %s1 = sld [smem:[%s0]]
  %s2 = scalar_lea.smem %s0, 1
  %s3 = sld [smem:[%s2]]
  %s4 = scalar_lea.smem %s0, 2
  %s5 = sld [smem:[%s4]]
  %s6 = scalar_lea.smem %s0, 3
  %s7 = sld [smem:[%s6]]
  %s8 = scalar_lea.smem %s0, 4
  %s9 = sld [smem:[%s8]]
  %s10 = scalar_lea.smem %s0, 5
  %s11 = sld [smem:[%s10]]
  %s12 = scalar_lea.smem %s0, 6
  %s13 = sld [smem:[%s12]]
  %s14 = scalar_lea.smem %s0, 7
  %s15 = sld [smem:[%s14]]
  %s16 = scalar_lea.smem %s0, 8
  %s17 = sld [smem:[%s16]]
  %s18 = scalar_lea.smem %s0, 9
  %s19 = sld [smem:[%s18]]
  %s20 = scalar_lea.smem %s0, 10
  %s21 = sld [smem:[%s20]]
  %s22 = scalar_lea.smem %s0, 11
  %s23 = sld [smem:[%s22]]
  %s24 = scalar_lea.smem %s0, 12
  %s25 = sld [smem:[%s24]]
  %s26 = scalar_lea.smem %s0, 13
  %s27 = sld [smem:[%s26]]
  %s28 = scalar_lea.smem %s0, 14
  %s29 = sld [smem:[%s28]]
  %s30 = scalar_lea.smem %s0, 15
  %s31 = sld [smem:[%s30]]
  %s32 = scalar_lea.smem %s0, 16
  %s33 = sld [smem:[%s32]]
  %s34 = scalar_lea.smem %s0, 17
  %s35 = sld [smem:[%s34]]
  %s36 = scalar_lea.smem %s0, 18
  %s37 = sld [smem:[%s36]]
  %s38 = scalar_lea.smem %s0, 19
  %s39 = sld [smem:[%s38]]
  %s40 = scalar_lea.smem %s0, 20
  %s41 = sld [smem:[%s40]]
  %s42 = scalar_lea.smem %s0, 21
  %s43 = sld [smem:[%s42]]
  %s44 = scalar_lea.smem %s0, 22
  %s45 = sld [smem:[%s44]]
  %s46 = scalar_lea.smem %s0, 23
  %s47 = sld [smem:[%s46]]
  %s48 = scalar_lea.smem %s0, 24
  %s49 = sld [smem:[%s48]]
  %s50 = scalar_lea.smem %s0, 25
  %s51 = sld [smem:[%s50]]
  %s52 = scalar_lea.smem %s0, 26
  %s53 = sld [smem:[%s52]]
  %s54 = scalar_lea.smem %s0, 27
  %s55 = sld [smem:[%s54]]
  %s56 = scalar_lea.smem %s0, 28
  %s57 = sld [smem:[%s56]]
  %s58 = scalar_lea.smem %s0, 29
  %s59 = sld [smem:[%s58]]
  %s60 = scalar_lea.smem %s0, 30
  %s61 = sld [smem:[%s60]]
  %s62 = scalar_lea.smem %s0, 31
  %s63 = sld [smem:[%s62]]
  %s64 = scalar_lea.smem %s0, 32
  %s65 = sld [smem:[%s64]]
  %s66 = scalar_lea.smem %s0, 33
  %s67 = sld [smem:[%s66]]
  %68 = xla_tuple %s61, %s63, %s65, %s67
  %s69 = sld [smem:[#allocation0]]
  $region162: #{sde_vae_forward.1} parent=0
    _
  %s71 = ssub.s32 1, %s69
  %s72 = scalar_select 0, %s71, %s69
  $region1: #{sde_vae_forward.1} parent=0
    #allocation3 [shape = 'u8[512]{0}', space=smem, size = 0x200, scoped, tag = 'input window, operand 0, single buffered']
    #allocation4 [shape = 's32[1]{0}', space=sflag, size = 0x4, scoped, tag = 'scoped memory for sde_vae_forward.1']
    #allocation5 [shape = 's32[1]{0}', space=sflag, size = 0x4, scoped, tag = 'scoped memory for sde_vae_forward.1']
    #allocation6 [shape = 'u8[98304]{0}', space=vmem, size = 0x18000, scoped, tag = 'input window, operand 6, single buffered']
    %73 = vsyncpa [#allocation5], 0
    %74 = vsyncpa [#allocation4], 0
    // Predicated region
    $region2: #{sde_vae_forward.1} parent=1 // pred_check
      _
    $region3: #{sde_vae_forward.1} parent=1 // pred_check_branch
      %76 = sbr.rel (0) target = $region5
    $region4: #{sde_vae_forward.1} parent=1 // pred_region
      %78 = vsyncadd [#allocation5], 0
      %s80 = sshll.u32 %s1, 4
      %s81 = int_to_ptr.vmem [resolvable:$true] %s80
      %83 = dma.vmem_to_smem %s81, 16, [#allocation3], [#allocation5]
    $region5: #{sde_vae_forward.1} parent=1 // pred_fallthru
      _
    // Predicated region
    $region6: #{sde_vae_forward.1} parent=1 // pred_check
      _
    $region7: #{sde_vae_forward.1} parent=1 // pred_check_branch
      %85 = sbr.rel (0) target = $region9
    $region8: #{sde_vae_forward.1} parent=1 // pred_region
      _
    $region9: #{sde_vae_forward.1} parent=1 // pred_fallthru
      _
    // Predicated region
    $region10: #{sde_vae_forward.1} parent=1 // pred_check
      _
    $region11: #{sde_vae_forward.1} parent=1 // pred_check_branch
      %87 = sbr.rel (0) target = $region13
    $region12: #{sde_vae_forward.1} parent=1 // pred_region
      _
    $region13: #{sde_vae_forward.1} parent=1 // pred_fallthru
      _
    // Predicated region
    $region14: #{sde_vae_forward.1} parent=1 // pred_check
      _
    $region15: #{sde_vae_forward.1} parent=1 // pred_check_branch
      %89 = sbr.rel (0) target = $region17
    $region16: #{sde_vae_forward.1} parent=1 // pred_region
      _
    $region17: #{sde_vae_forward.1} parent=1 // pred_fallthru
      _
    // Predicated region
    $region18: #{sde_vae_forward.1} parent=1 // pred_check
      _
    $region19: #{sde_vae_forward.1} parent=1 // pred_check_branch
      %91 = sbr.rel (0) target = $region21
    $region20: #{sde_vae_forward.1} parent=1 // pred_region
      _
    $region21: #{sde_vae_forward.1} parent=1 // pred_fallthru
      _
    // Predicated region
    $region22: #{sde_vae_forward.1} parent=1 // pred_check
      _
    $region23: #{sde_vae_forward.1} parent=1 // pred_check_branch
      %93 = sbr.rel (0) target = $region25
    $region24: #{sde_vae_forward.1} parent=1 // pred_region
      _
    $region25: #{sde_vae_forward.1} parent=1 // pred_fallthru
      _
    // Predicated region
    $region26: #{sde_vae_forward.1} parent=1 // pred_check
      _
    $region27: #{sde_vae_forward.1} parent=1 // pred_check_branch
      %95 = sbr.rel (0) target = $region29
    $region28: #{sde_vae_forward.1} parent=1 // pred_region
      %97 = vsyncadd [#allocation4], 0
      %s98 = sshll.u32 %s13, 4
      %s99 = int_to_ptr.hbm [resolvable:$true] %s98
      %s100 = sshll.u32 [#allocation6], 4
      %s101 = int_to_ptr.vmem [resolvable:$true] %s100
      %106 = dma.hbm_to_vmem [thread:$0]  %s99, 3072, %s101, [#allocation4], 192, 192, 12
    $region29: #{sde_vae_forward.1} parent=1 // pred_fallthru
      _
    // Predicated region
    $region30: #{sde_vae_forward.1} parent=1 // pred_check
      _
    $region31: #{sde_vae_forward.1} parent=1 // pred_check_branch
      %108 = sbr.rel (0) target = $region33
    $region32: #{sde_vae_forward.1} parent=1 // pred_region
      _
    $region33: #{sde_vae_forward.1} parent=1 // pred_fallthru
      _
    // Predicated region
    $region34: #{sde_vae_forward.1} parent=1 // pred_check
      _
    $region35: #{sde_vae_forward.1} parent=1 // pred_check_branch
      %110 = sbr.rel (0) target = $region37
    $region36: #{sde_vae_forward.1} parent=1 // pred_region
      _
    $region37: #{sde_vae_forward.1} parent=1 // pred_fallthru
      _
    // Predicated region
    $region38: #{sde_vae_forward.1} parent=1 // pred_check
      _
    $region39: #{sde_vae_forward.1} parent=1 // pred_check_branch
      %112 = sbr.rel (0) target = $region41
    $region40: #{sde_vae_forward.1} parent=1 // pred_region
      _
    $region41: #{sde_vae_forward.1} parent=1 // pred_fallthru
      _
    // Predicated region
    $region42: #{sde_vae_forward.1} parent=1 // pred_check
      _
    $region43: #{sde_vae_forward.1} parent=1 // pred_check_branch
      %114 = sbr.rel (0) target = $region45
    $region44: #{sde_vae_forward.1} parent=1 // pred_region
      _
    $region45: #{sde_vae_forward.1} parent=1 // pred_fallthru
      _
    // Predicated region
    $region46: #{sde_vae_forward.1} parent=1 // pred_check
      _
    $region47: #{sde_vae_forward.1} parent=1 // pred_check_branch
      %116 = sbr.rel (0) target = $region49
    $region48: #{sde_vae_forward.1} parent=1 // pred_region
      _
    $region49: #{sde_vae_forward.1} parent=1 // pred_fallthru
      _
    // Predicated region
    $region50: #{sde_vae_forward.1} parent=1 // pred_check
      _
    $region51: #{sde_vae_forward.1} parent=1 // pred_check_branch
      %118 = sbr.rel (0) target = $region53
    $region52: #{sde_vae_forward.1} parent=1 // pred_region
      _
    $region53: #{sde_vae_forward.1} parent=1 // pred_fallthru
      _
    // Predicated region
    $region54: #{sde_vae_forward.1} parent=1 // pred_check
      _
    $region55: #{sde_vae_forward.1} parent=1 // pred_check_branch
      %120 = sbr.rel (0) target = $region57
    $region56: #{sde_vae_forward.1} parent=1 // pred_region
      _
    $region57: #{sde_vae_forward.1} parent=1 // pred_fallthru
      _
    // Predicated region
    $region58: #{sde_vae_forward.1} parent=1 // pred_check
      _
    $region59: #{sde_vae_forward.1} parent=1 // pred_check_branch
      %122 = sbr.rel (0) target = $region61
    $region60: #{sde_vae_forward.1} parent=1 // pred_region
      _
    $region61: #{sde_vae_forward.1} parent=1 // pred_fallthru
      _
    // Predicated region
    $region62: #{sde_vae_forward.1} parent=1 // pred_check
      _
    $region63: #{sde_vae_forward.1} parent=1 // pred_check_branch
      %124 = sbr.rel (0) target = $region65
    $region64: #{sde_vae_forward.1} parent=1 // pred_region
      _
    $region65: #{sde_vae_forward.1} parent=1 // pred_fallthru
      _
    // Predicated region
    $region66: #{sde_vae_forward.1} parent=1 // pred_check
      _
    $region67: #{sde_vae_forward.1} parent=1 // pred_check_branch
      %126 = sbr.rel (0) target = $region69
    $region68: #{sde_vae_forward.1} parent=1 // pred_region
      _
    $region69: #{sde_vae_forward.1} parent=1 // pred_fallthru
      _
    // Predicated region
    $region70: #{sde_vae_forward.1} parent=1 // pred_check
      _
    $region71: #{sde_vae_forward.1} parent=1 // pred_check_branch
      %128 = sbr.rel (0) target = $region73
    $region72: #{sde_vae_forward.1} parent=1 // pred_region
      _
    $region73: #{sde_vae_forward.1} parent=1 // pred_fallthru
      _
    // Predicated region
    $region74: #{sde_vae_forward.1} parent=1 // pred_check
      _
    $region75: #{sde_vae_forward.1} parent=1 // pred_check_branch
      %130 = sbr.rel (0) target = $region77
    $region76: #{sde_vae_forward.1} parent=1 // pred_region
      _
    $region77: #{sde_vae_forward.1} parent=1 // pred_fallthru
      _
    // Predicated region
    $region78: #{sde_vae_forward.1} parent=1 // pred_check
      _
    $region79: #{sde_vae_forward.1} parent=1 // pred_check_branch
      %132 = sbr.rel (0) target = $region81
    $region80: #{sde_vae_forward.1} parent=1 // pred_region
      _
    $region81: #{sde_vae_forward.1} parent=1 // pred_fallthru
      _
    // Predicated region
    $region82: #{sde_vae_forward.1} parent=1 // pred_check
      _
    $region83: #{sde_vae_forward.1} parent=1 // pred_check_branch
      %134 = sbr.rel (0) target = $region85
    $region84: #{sde_vae_forward.1} parent=1 // pred_region
      _
    $region85: #{sde_vae_forward.1} parent=1 // pred_fallthru
      _
    // Predicated region
    $region86: #{sde_vae_forward.1} parent=1 // pred_check
      _
    $region87: #{sde_vae_forward.1} parent=1 // pred_check_branch
      %136 = sbr.rel (0) target = $region89
    $region88: #{sde_vae_forward.1} parent=1 // pred_region
      _
    $region89: #{sde_vae_forward.1} parent=1 // pred_fallthru
      _
    // Predicated region
    $region90: #{sde_vae_forward.1} parent=1 // pred_check
      _
    $region91: #{sde_vae_forward.1} parent=1 // pred_check_branch
      %138 = sbr.rel (0) target = $region93
    $region92: #{sde_vae_forward.1} parent=1 // pred_region
      _
    $region93: #{sde_vae_forward.1} parent=1 // pred_fallthru
      _
    // Predicated region
    $region94: #{sde_vae_forward.1} parent=1 // pred_check
      _
    $region95: #{sde_vae_forward.1} parent=1 // pred_check_branch
      %140 = sbr.rel (0) target = $region97
    $region96: #{sde_vae_forward.1} parent=1 // pred_region
      _
    $region97: #{sde_vae_forward.1} parent=1 // pred_fallthru
      _
    // Predicated region
    $region98: #{sde_vae_forward.1} parent=1 // pred_check
      _
    $region99: #{sde_vae_forward.1} parent=1 // pred_check_branch
      %142 = sbr.rel (0) target = $region101
    $region100: #{sde_vae_forward.1} parent=1 // pred_region
      _
    $region101: #{sde_vae_forward.1} parent=1 // pred_fallthru
      _
    // Predicated region
    $region102: #{sde_vae_forward.1} parent=1 // pred_check
      _
    $region103: #{sde_vae_forward.1} parent=1 // pred_check_branch
      %144 = sbr.rel (0) target = $region105
    $region104: #{sde_vae_forward.1} parent=1 // pred_region
      _
    $region105: #{sde_vae_forward.1} parent=1 // pred_fallthru
      _
    // Predicated region
    $region106: #{sde_vae_forward.1} parent=1 // pred_check
      _
    $region107: #{sde_vae_forward.1} parent=1 // pred_check_branch
      %146 = sbr.rel (0) target = $region109
    $region108: #{sde_vae_forward.1} parent=1 // pred_region
      _
    $region109: #{sde_vae_forward.1} parent=1 // pred_fallthru
      _
    // Predicated region
    $region110: #{sde_vae_forward.1} parent=1 // pred_check
      _
    $region111: #{sde_vae_forward.1} parent=1 // pred_check_branch
      %148 = sbr.rel (0) target = $region113
    $region112: #{sde_vae_forward.1} parent=1 // pred_region
      _
    $region113: #{sde_vae_forward.1} parent=1 // pred_fallthru
      _
    // Predicated region
    $region114: #{sde_vae_forward.1} parent=1 // pred_check
      _
    $region115: #{sde_vae_forward.1} parent=1 // pred_check_branch
      %150 = sbr.rel (0) target = $region117
    $region116: #{sde_vae_forward.1} parent=1 // pred_region
      _
    $region117: #{sde_vae_forward.1} parent=1 // pred_fallthru
      _
    // Predicated region
    $region118: #{sde_vae_forward.1} parent=1 // pred_check
      _
    $region119: #{sde_vae_forward.1} parent=1 // pred_check_branch
      %152 = sbr.rel (0) target = $region121
    $region120: #{sde_vae_forward.1} parent=1 // pred_region
      _
    $region121: #{sde_vae_forward.1} parent=1 // pred_fallthru
      _
    // Predicated region
    $region122: #{sde_vae_forward.1} parent=1 // pred_check
      _
    $region123: #{sde_vae_forward.1} parent=1 // pred_check_branch
      %154 = sbr.rel (0) target = $region125
    $region124: #{sde_vae_forward.1} parent=1 // pred_region
      %156 = dma.done [#allocation5], 16
    $region125: #{sde_vae_forward.1} parent=1 // pred_fallthru
      _
    // Predicated region
    $region126: #{sde_vae_forward.1} parent=1 // pred_check
      _
    $region127: #{sde_vae_forward.1} parent=1 // pred_check_branch
      %158 = sbr.rel (0) target = $region129
    $region128: #{sde_vae_forward.1} parent=1 // pred_region
      %160 = dma.done [#allocation4], 3072
    $region129: #{sde_vae_forward.1} parent=1 // pred_fallthru
      _
    %161 = sfence
    %v163 = vld [vmem:[%s3] sm:$0xff]
    %v164 = vld [vmem:[%s3 + $0x8] sm:$0xff]
    %v165 = vld [vmem:[%s3 + $0x10] sm:$0xff]
    %v166 = vld [vmem:[%s3 + $0x18] sm:$0xff]
    %v167 = vld [vmem:[%s3 + $0x20] sm:$0xff]
    %v168 = vld [vmem:[%s3 + $0x28] sm:$0xff]
    %v169 = vld [vmem:[%s11] sm:$0x77]
    %v170 = vld [vmem:[%s11 + $0x8] sm:$0x7]
    %v171 = vld [vmem:[%s15] sm:$0x7]
    %v172 = vpack.c.bf16 %v164, %v163
    %v173 = vpack.c.bf16 %v166, %v165
    %v174 = vpack.c.bf16 %v168, %v167
    %v176 = vperm.slane %v171, 0
    %v177 = vperm.slane %v171, 1
    %v178 = vperm.slane %v171, 2
    %v184 = vunpack.c.l.b16 %v169
    %v185 = vunpack.c.h.b16 %v169
    %v186 = vunpack.c.l.b16 %v170
    %v187 = vpack.c.b16 %v184, %v184
    %v188 = vpack.c.b16 %v185, %v185
    %v189 = vpack.c.b16 %v186, %v186
    %vm190 = vcmask 39936
    %v192 = vsel %vm190, %v172, 0
    %v195 = vsel %vm190, %v173, 0
    %v198 = vsel %vm190, %v174, 0
    %vm200 = vcmask 1041408
    %vm201 = vcmask 1042432
    %v202 = vsel %vm200, 4294967295, 65535
    %v203 = vsel %vm201, %v202, 0
    %v205 = vand.u32 %v187, %v203
    %v208 = vand.u32 %v188, %v203
    %v211 = vand.u32 %v189, %v203
    %213 = vmatpush.bf16.msra.mxu0 0
    %214 = vmatpush.bf16.msra.mxu0 0
    %215 = vmatpush.bf16.msra.mxu0 0
    %216 = vmatpush.bf16.msra.mxu0 0
    %217 = vmatpush.bf16.msra.mxu0 0
    %218 = vmatpush.bf16.msra.mxu0 0
    %219 = vmatpush.bf16.msra.mxu0 0
    %220 = vmatpush.bf16.msra.mxu0 %v205
    %221 = vmatmul.bf16.gmra.mxu0 %v192
    %v222 = vpop.f32.mrf.mxu0
    %v223 = vadd.f32 %v176, %v222
    %v224 = vpop.f32.mrf.mxu0
    %v225 = vadd.f32 %v176, %v224
    %226 = vmatmul.bf16.gmra.mxu0 %v195
    %v227 = vpop.f32.mrf.mxu0
    %v228 = vadd.f32 %v176, %v227
    %v229 = vpop.f32.mrf.mxu0
    %v230 = vadd.f32 %v176, %v229
    %231 = vmatmul.bf16.gmra.mxu0 %v198
    %v232 = vpop.f32.mrf.mxu0
    %v233 = vadd.f32 %v176, %v232
    %v234 = vpop.f32.mrf.mxu0
    %v235 = vadd.f32 %v176, %v234
    %236 = vdwg.mxu0
    %237 = vmatpush.bf16.msra.mxu0 0
    %238 = vmatpush.bf16.msra.mxu0 0
    %239 = vmatpush.bf16.msra.mxu0 0
    %240 = vmatpush.bf16.msra.mxu0 0
    %241 = vmatpush.bf16.msra.mxu0 0
    %242 = vmatpush.bf16.msra.mxu0 0
    %243 = vmatpush.bf16.msra.mxu0 0
    %244 = vmatpush.bf16.msra.mxu0 %v208
    %245 = vmatmul.bf16.gmra.mxu0 %v192
    %v246 = vpop.f32.mrf.mxu0
    %v247 = vadd.f32 %v177, %v246
    %v248 = vpop.f32.mrf.mxu0
    %v249 = vadd.f32 %v177, %v248
    %250 = vmatmul.bf16.gmra.mxu0 %v195
    %v251 = vpop.f32.mrf.mxu0
    %v252 = vadd.f32 %v177, %v251
    %v253 = vpop.f32.mrf.mxu0
    %v254 = vadd.f32 %v177, %v253
    %255 = vmatmul.bf16.gmra.mxu0 %v198
    %v256 = vpop.f32.mrf.mxu0
    %v257 = vadd.f32 %v177, %v256
    %v258 = vpop.f32.mrf.mxu0
    %v259 = vadd.f32 %v177, %v258
    %260 = vdwg.mxu0
    %261 = vmatpush.bf16.msra.mxu0 0
    %262 = vmatpush.bf16.msra.mxu0 0
    %263 = vmatpush.bf16.msra.mxu0 0
    %264 = vmatpush.bf16.msra.mxu0 0
    %265 = vmatpush.bf16.msra.mxu0 0
    %266 = vmatpush.bf16.msra.mxu0 0
    %267 = vmatpush.bf16.msra.mxu0 0
    %268 = vmatpush.bf16.msra.mxu0 %v211
    %269 = vmatmul.bf16.gmra.mxu0 %v192
    %v270 = vpop.f32.mrf.mxu0
    %v271 = vadd.f32 %v178, %v270
    %v272 = vpop.f32.mrf.mxu0
    %v273 = vadd.f32 %v178, %v272
    %274 = vmatmul.bf16.gmra.mxu0 %v195
    %v275 = vpop.f32.mrf.mxu0
    %v276 = vadd.f32 %v178, %v275
    %v277 = vpop.f32.mrf.mxu0
    %v278 = vadd.f32 %v178, %v277
    %279 = vmatmul.bf16.gmra.mxu0 %v198
    %v280 = vpop.f32.mrf.mxu0
    %v281 = vadd.f32 %v178, %v280
    %v282 = vpop.f32.mrf.mxu0
    %v283 = vadd.f32 %v178, %v282
    %284 = vdwg.mxu0
    %285 = vst [vmem:[#allocation2] sm:$0xff] %v223
    %286 = vst [vmem:[#allocation2 + $0x8] sm:$0xff] %v247
    %287 = vst [vmem:[#allocation2 + $0x10] sm:$0xff] %v271
    %288 = vst [vmem:[#allocation2 + $0x18] sm:$0xff] %v225
    %289 = vst [vmem:[#allocation2 + $0x20] sm:$0xff] %v249
    %290 = vst [vmem:[#allocation2 + $0x28] sm:$0xff] %v273
    %291 = vst [vmem:[#allocation2 + $0x30] sm:$0xff] %v228
    %292 = vst [vmem:[#allocation2 + $0x38] sm:$0xff] %v252
    %293 = vst [vmem:[#allocation2 + $0x40] sm:$0xff] %v276
    %294 = vst [vmem:[#allocation2 + $0x48] sm:$0xff] %v230
    %295 = vst [vmem:[#allocation2 + $0x50] sm:$0xff] %v254
    %296 = vst [vmem:[#allocation2 + $0x58] sm:$0xff] %v278
    %297 = vst [vmem:[#allocation2 + $0x60] sm:$0xff] %v233
    %298 = vst [vmem:[#allocation2 + $0x68] sm:$0xff] %v257
    %299 = vst [vmem:[#allocation2 + $0x70] sm:$0xff] %v281
    %300 = vst [vmem:[#allocation2 + $0x78] sm:$0xff] %v235
    %301 = vst [vmem:[#allocation2 + $0x80] sm:$0xff] %v259
    %302 = vst [vmem:[#allocation2 + $0x88] sm:$0xff] %v283
    %v303 = vld [vmem:[#allocation6] sm:$0xff]
    %v304 = vld [vmem:[#allocation6 + $0x8] sm:$0xf]
    %v305 = vld [vmem:[#allocation6 + $0xc] sm:$0xff]
    %v306 = vld [vmem:[#allocation6 + $0x14] sm:$0xf]
    %v307 = vld [vmem:[#allocation6 + $0x18] sm:$0xff]
    %v308 = vld [vmem:[#allocation6 + $0x20] sm:$0xf]
    %v309 = vld [vmem:[#allocation6 + $0x24] sm:$0xff]
    %v310 = vld [vmem:[#allocation6 + $0x2c] sm:$0xf]
    %v311 = vld [vmem:[#allocation6 + $0x30] sm:$0xff]
    %v312 = vld [vmem:[#allocation6 + $0x38] sm:$0xf]
    %v313 = vld [vmem:[#allocation6 + $0x3c] sm:$0xff]
    %v314 = vld [vmem:[#allocation6 + $0x44] sm:$0xf]
    %v315 = vld [vmem:[#allocation6 + $0x48] sm:$0xff]
    %v316 = vld [vmem:[#allocation6 + $0x50] sm:$0xf]
    %v317 = vld [vmem:[#allocation6 + $0x54] sm:$0xff]
    %v318 = vld [vmem:[#allocation6 + $0x5c] sm:$0xf]
    %v319 = vld [vmem:[#allocation6 + $0x60] sm:$0xff]
    %v320 = vld [vmem:[#allocation6 + $0x68] sm:$0xf]
    %v321 = vld [vmem:[#allocation6 + $0x6c] sm:$0xff]
    %v322 = vld [vmem:[#allocation6 + $0x74] sm:$0xf]
    %v323 = vld [vmem:[#allocation6 + $0x78] sm:$0xff]
    %v324 = vld [vmem:[#allocation6 + $0x80] sm:$0xf]
    %v325 = vld [vmem:[#allocation6 + $0x84] sm:$0xff]
    %v326 = vld [vmem:[#allocation6 + $0x8c] sm:$0xf]
    %v327 = vld [vmem:[#allocation6 + $0x90] sm:$0xff]
    %v328 = vld [vmem:[#allocation6 + $0x98] sm:$0xf]
    %v329 = vld [vmem:[#allocation6 + $0x9c] sm:$0xff]
    %v330 = vld [vmem:[#allocation6 + $0xa4] sm:$0xf]
    %v331 = vld [vmem:[#allocation6 + $0xa8] sm:$0xff]
    %v332 = vld [vmem:[#allocation6 + $0xb0] sm:$0xf]
    %v333 = vld [vmem:[#allocation6 + $0xb4] sm:$0xff]
    %v334 = vld [vmem:[#allocation6 + $0xbc] sm:$0xf]
    %v335 = vld [vmem:[%s17] sm:$0x7]
    %v336 = vld [vmem:[#allocation2] sm:$0xff]
    %v337 = vld [vmem:[#allocation2 + $0x8] sm:$0xff]
    %v338 = vld [vmem:[#allocation2 + $0x10] sm:$0xff]
    %v340 = vperm.slane %v335, 0
    %v341 = vperm.slane %v335, 1
    %v342 = vperm.slane %v335, 2
    %v378 = vunpack.c.l.b16 %v303
    %v379 = vunpack.c.h.b16 %v303
    %v380 = vunpack.c.l.b16 %v304
    %v381 = vunpack.c.l.b16 %v305
    %v382 = vunpack.c.h.b16 %v305
    %v383 = vunpack.c.l.b16 %v306
    %v384 = vunpack.c.l.b16 %v307
    %v385 = vunpack.c.h.b16 %v307
    %v386 = vunpack.c.l.b16 %v308
    %v387 = vunpack.c.l.b16 %v309
    %v388 = vunpack.c.h.b16 %v309
    %v389 = vunpack.c.l.b16 %v310
    %v390 = vunpack.c.l.b16 %v311
    %v391 = vunpack.c.h.b16 %v311
    %v392 = vunpack.c.l.b16 %v312
    %v393 = vunpack.c.l.b16 %v313
    %v394 = vunpack.c.h.b16 %v313
    %v395 = vunpack.c.l.b16 %v314
    %v396 = vunpack.c.l.b16 %v315
    %v397 = vunpack.c.h.b16 %v315
    %v398 = vunpack.c.l.b16 %v316
    %v399 = vunpack.c.l.b16 %v317
    %v400 = vunpack.c.h.b16 %v317
    %v401 = vunpack.c.l.b16 %v318
    %v402 = vunpack.c.l.b16 %v319
    %v403 = vunpack.c.h.b16 %v319
    %v404 = vunpack.c.l.b16 %v320
    %v405 = vunpack.c.l.b16 %v321
    %v406 = vunpack.c.h.b16 %v321
    %v407 = vunpack.c.l.b16 %v322
    %v408 = vunpack.c.l.b16 %v323
    %v409 = vunpack.c.h.b16 %v323
    %v410 = vunpack.c.l.b16 %v324
    %v411 = vunpack.c.l.b16 %v325
    %v412 = vunpack.c.h.b16 %v325
    %v413 = vunpack.c.l.b16 %v326
    %v414 = vunpack.c.l.b16 %v327
    %v415 = vunpack.c.h.b16 %v327
    %v416 = vunpack.c.l.b16 %v328
    %v417 = vunpack.c.l.b16 %v329
    %v418 = vunpack.c.h.b16 %v329
    %v419 = vunpack.c.l.b16 %v330
    %v420 = vunpack.c.l.b16 %v331
    %v421 = vunpack.c.h.b16 %v331
    %v422 = vunpack.c.l.b16 %v332
    %v423 = vunpack.c.l.b16 %v333
    %v424 = vunpack.c.h.b16 %v333
    %v425 = vunpack.c.l.b16 %v334
    %v426 = vpack.c.b16 %v381, %v378
    %v427 = vpack.c.b16 %v382, %v379
    %v428 = vpack.c.b16 %v383, %v380
    %v429 = vpack.c.b16 %v387, %v384
    %v430 = vpack.c.b16 %v388, %v385
    %v431 = vpack.c.b16 %v389, %v386
    %v432 = vpack.c.b16 %v393, %v390
    %v433 = vpack.c.b16 %v394, %v391
    %v434 = vpack.c.b16 %v395, %v392
    %v435 = vpack.c.b16 %v399, %v396
    %v436 = vpack.c.b16 %v400, %v397
    %v437 = vpack.c.b16 %v401, %v398
    %v438 = vpack.c.b16 %v405, %v402
    %v439 = vpack.c.b16 %v406, %v403
    %v440 = vpack.c.b16 %v407, %v404
    %v441 = vpack.c.b16 %v411, %v408
    %v442 = vpack.c.b16 %v412, %v409
    %v443 = vpack.c.b16 %v413, %v410
    %v444 = vpack.c.b16 %v417, %v414
    %v445 = vpack.c.b16 %v418, %v415
    %v446 = vpack.c.b16 %v419, %v416
    %v447 = vpack.c.b16 %v423, %v420
    %v448 = vpack.c.b16 %v424, %v421
    %v449 = vpack.c.b16 %v425, %v422
    %474 = vmatpush.bf16.msra.mxu0 %v447
    %475 = vmatpush.bf16.msra.mxu0 %v444
    %476 = vmatpush.bf16.msra.mxu0 %v441
    %477 = vmatpush.bf16.msra.mxu0 %v438
    %478 = vmatpush.bf16.msra.mxu0 %v435
    %479 = vmatpush.bf16.msra.mxu0 %v432
    %480 = vmatpush.bf16.msra.mxu0 %v429
    %481 = vmatpush.bf16.msra.mxu0 %v426
    %482 = vmatmul.bf16.gmra.mxu0 0
    %v483 = vpop.f32.mrf.mxu0
    %v484 = vadd.f32 %v340, %v483
    %v485 = vpop.f32.mrf.mxu0
    %486 = vdwg.mxu0
    %487 = vmatpush.bf16.msra.mxu0 %v448
    %488 = vmatpush.bf16.msra.mxu0 %v445
    %489 = vmatpush.bf16.msra.mxu0 %v442
    %490 = vmatpush.bf16.msra.mxu0 %v439
    %491 = vmatpush.bf16.msra.mxu0 %v436
    %492 = vmatpush.bf16.msra.mxu0 %v433
    %493 = vmatpush.bf16.msra.mxu0 %v430
    %494 = vmatpush.bf16.msra.mxu0 %v427
    %495 = vmatmul.bf16.gmra.mxu0 0
    %v496 = vpop.f32.mrf.mxu0
    %v497 = vadd.f32 %v341, %v496
    %v498 = vpop.f32.mrf.mxu0
    %499 = vdwg.mxu0
    %500 = vmatpush.bf16.msra.mxu0 %v449
    %501 = vmatpush.bf16.msra.mxu0 %v446
    %502 = vmatpush.bf16.msra.mxu0 %v443
    %503 = vmatpush.bf16.msra.mxu0 %v440
    %504 = vmatpush.bf16.msra.mxu0 %v437
    %505 = vmatpush.bf16.msra.mxu0 %v434
    %506 = vmatpush.bf16.msra.mxu0 %v431
    %507 = vmatpush.bf16.msra.mxu0 %v428
    %508 = vmatmul.bf16.gmra.mxu0 0
    %v509 = vpop.f32.mrf.mxu0
    %v510 = vadd.f32 %v342, %v509
    %v511 = vpop.f32.mrf.mxu0
    %512 = vdwg.mxu0
    %v513 = vadd.f32 %v336, %v484
    %v514 = vxor.u32 %v513, 2147483648
    %v515 = vmul.f32 %v514, 1.442695
    %v516 = vpow.pop %v515
    %v517 = vadd.f32 %v516, 1.0
    %v518 = vrcp.pop %v517
    %v519 = vmul.f32 %v517, %v518
    %v520 = vsub.f32 1.0, %v519
    %v521 = vmul.f32 %v518, %v520
    %v522 = vadd.f32 %v518, %v521
    %vm523 = vweird.f32 %v517
    %vm524 = vweird.f32 %v518
    %vm525 = vmor %vm523, %vm524
    %v526 = vsel %vm525, %v518, %v522
    %v527 = vand.u32 2147483647, %v517
    %vm528 = vcmp.eq.f32.partialorder %v527, 8.507059e+37
    %v529 = vand.u32 %v517, 2147483648
    %v530 = vor.u32 1.1754944e-38, %v529
    %v531 = vsel %vm528, %v530, %v526
    %v532 = vmul.f32 1.0, %v531
    %v533 = vadd.f32 %v337, %v497
    %v534 = vxor.u32 %v533, 2147483648
    %v535 = vmul.f32 %v534, 1.442695
    %v536 = vpow.pop %v535
    %v537 = vadd.f32 %v536, 1.0
    %v538 = vrcp.pop %v537
    %v539 = vmul.f32 %v537, %v538
    %v540 = vsub.f32 1.0, %v539
    %v541 = vmul.f32 %v538, %v540
    %v542 = vadd.f32 %v538, %v541
    %vm543 = vweird.f32 %v537
    %vm544 = vweird.f32 %v538
    %vm545 = vmor %vm543, %vm544
    %v546 = vsel %vm545, %v538, %v542
    %v547 = vand.u32 2147483647, %v537
    %vm548 = vcmp.eq.f32.partialorder %v547, 8.507059e+37
    %v549 = vand.u32 %v537, 2147483648
    %v550 = vor.u32 1.1754944e-38, %v549
    %v551 = vsel %vm548, %v550, %v546
    %v552 = vmul.f32 1.0, %v551
    %v553 = vmul.f32 %v532, %v510
    %v554 = vadd.f32 %v338, %v553
    %v555 = vtanh.pop %v554
    %v556 = vsub.f32 1.0, %v552
    %v557 = vmul.f32 %v556, %v555
    %v558 = vmul.f32 %v552, 0.0
    %v559 = vadd.f32 %v557, %v558
    %v560 = vld [vmem:[#allocation2 + $0x18] sm:$0xff]
    %v561 = vld [vmem:[#allocation2 + $0x20] sm:$0xff]
    %v562 = vld [vmem:[#allocation2 + $0x28] sm:$0xff]
    %v563 = vpack.c.bf16 %v559, %v559
    %564 = vmatpush.bf16.msra.mxu0 %v447
    %565 = vmatpush.bf16.msra.mxu0 %v444
    %566 = vmatpush.bf16.msra.mxu0 %v441
    %567 = vmatpush.bf16.msra.mxu0 %v438
    %568 = vmatpush.bf16.msra.mxu0 %v435
    %569 = vmatpush.bf16.msra.mxu0 %v432
    %570 = vmatpush.bf16.msra.mxu0 %v429
    %571 = vmatpush.bf16.msra.mxu0 %v426
    %572 = vmatmul.bf16.gmra.mxu0 %v563
    %v573 = vpop.f32.mrf.mxu0
    %v574 = vadd.f32 %v340, %v573
    %v575 = vpop.f32.mrf.mxu0
    %576 = vdwg.mxu0
    %577 = vmatpush.bf16.msra.mxu0 %v448
    %578 = vmatpush.bf16.msra.mxu0 %v445
    %579 = vmatpush.bf16.msra.mxu0 %v442
    %580 = vmatpush.bf16.msra.mxu0 %v439
    %581 = vmatpush.bf16.msra.mxu0 %v436
    %582 = vmatpush.bf16.msra.mxu0 %v433
    %583 = vmatpush.bf16.msra.mxu0 %v430
    %584 = vmatpush.bf16.msra.mxu0 %v427
    %585 = vmatmul.bf16.gmra.mxu0 %v563
    %v586 = vpop.f32.mrf.mxu0
    %v587 = vadd.f32 %v341, %v586
    %v588 = vpop.f32.mrf.mxu0
    %589 = vdwg.mxu0
    %590 = vmatpush.bf16.msra.mxu0 %v449
    %591 = vmatpush.bf16.msra.mxu0 %v446
    %592 = vmatpush.bf16.msra.mxu0 %v443
    %593 = vmatpush.bf16.msra.mxu0 %v440
    %594 = vmatpush.bf16.msra.mxu0 %v437
    %595 = vmatpush.bf16.msra.mxu0 %v434
    %596 = vmatpush.bf16.msra.mxu0 %v431
    %597 = vmatpush.bf16.msra.mxu0 %v428
    %598 = vmatmul.bf16.gmra.mxu0 %v563
    %v599 = vpop.f32.mrf.mxu0
    %v600 = vadd.f32 %v342, %v599
    %v601 = vpop.f32.mrf.mxu0
    %602 = vdwg.mxu0
    %v603 = vadd.f32 %v560, %v574
    %v604 = vxor.u32 %v603, 2147483648
    %v605 = vmul.f32 %v604, 1.442695
    %v606 = vpow.pop %v605
    %v607 = vadd.f32 %v606, 1.0
    %v608 = vrcp.pop %v607
    %v609 = vmul.f32 %v607, %v608
    %v610 = vsub.f32 1.0, %v609
    %v611 = vmul.f32 %v608, %v610
    %v612 = vadd.f32 %v608, %v611
    %vm613 = vweird.f32 %v607
    %vm614 = vweird.f32 %v608
    %vm615 = vmor %vm613, %vm614
    %v616 = vsel %vm615, %v608, %v612
    %v617 = vand.u32 2147483647, %v607
    %vm618 = vcmp.eq.f32.partialorder %v617, 8.507059e+37
    %v619 = vand.u32 %v607, 2147483648
    %v620 = vor.u32 1.1754944e-38, %v619
    %v621 = vsel %vm618, %v620, %v616
    %v622 = vmul.f32 1.0, %v621
    %v623 = vadd.f32 %v561, %v587
    %v624 = vxor.u32 %v623, 2147483648
    %v625 = vmul.f32 %v624, 1.442695
    %v626 = vpow.pop %v625
    %v627 = vadd.f32 %v626, 1.0
    %v628 = vrcp.pop %v627
    %v629 = vmul.f32 %v627, %v628
    %v630 = vsub.f32 1.0, %v629
    %v631 = vmul.f32 %v628, %v630
    %v632 = vadd.f32 %v628, %v631
    %vm633 = vweird.f32 %v627
    %vm634 = vweird.f32 %v628
    %vm635 = vmor %vm633, %vm634
    %v636 = vsel %vm635, %v628, %v632
    %v637 = vand.u32 2147483647, %v627
    %vm638 = vcmp.eq.f32.partialorder %v637, 8.507059e+37
    %v639 = vand.u32 %v627, 2147483648
    %v640 = vor.u32 1.1754944e-38, %v639
    %v641 = vsel %vm638, %v640, %v636
    %v642 = vmul.f32 1.0, %v641
    %v643 = vmul.f32 %v622, %v600
    %v644 = vadd.f32 %v562, %v643
    %v645 = vtanh.pop %v644
    %v646 = vsub.f32 1.0, %v642
    %v647 = vmul.f32 %v646, %v645
    %v648 = vmul.f32 %v642, %v559
    %v649 = vadd.f32 %v647, %v648
    %v650 = vld [vmem:[#allocation2 + $0x30] sm:$0xff]
    %v651 = vld [vmem:[#allocation2 + $0x38] sm:$0xff]
    %v652 = vld [vmem:[#allocation2 + $0x40] sm:$0xff]
    %v653 = vpack.c.bf16 %v649, %v649
    %654 = vmatpush.bf16.msra.mxu0 %v447
    %655 = vmatpush.bf16.msra.mxu0 %v444
    %656 = vmatpush.bf16.msra.mxu0 %v441
    %657 = vmatpush.bf16.msra.mxu0 %v438
    %658 = vmatpush.bf16.msra.mxu0 %v435
    %659 = vmatpush.bf16.msra.mxu0 %v432
    %660 = vmatpush.bf16.msra.mxu0 %v429
    %661 = vmatpush.bf16.msra.mxu0 %v426
    %662 = vmatmul.bf16.gmra.mxu0 %v653
    %v663 = vpop.f32.mrf.mxu0
    %v664 = vadd.f32 %v340, %v663
    %v665 = vpop.f32.mrf.mxu0
    %666 = vdwg.mxu0
    %667 = vmatpush.bf16.msra.mxu0 %v448
    %668 = vmatpush.bf16.msra.mxu0 %v445
    %669 = vmatpush.bf16.msra.mxu0 %v442
    %670 = vmatpush.bf16.msra.mxu0 %v439
    %671 = vmatpush.bf16.msra.mxu0 %v436
    %672 = vmatpush.bf16.msra.mxu0 %v433
    %673 = vmatpush.bf16.msra.mxu0 %v430
    %674 = vmatpush.bf16.msra.mxu0 %v427
    %675 = vmatmul.bf16.gmra.mxu0 %v653
    %v676 = vpop.f32.mrf.mxu0
    %v677 = vadd.f32 %v341, %v676
    %v678 = vpop.f32.mrf.mxu0
    %679 = vdwg.mxu0
    %680 = vmatpush.bf16.msra.mxu0 %v449
    %681 = vmatpush.bf16.msra.mxu0 %v446
    %682 = vmatpush.bf16.msra.mxu0 %v443
    %683 = vmatpush.bf16.msra.mxu0 %v440
    %684 = vmatpush.bf16.msra.mxu0 %v437
    %685 = vmatpush.bf16.msra.mxu0 %v434
    %686 = vmatpush.bf16.msra.mxu0 %v431
    %687 = vmatpush.bf16.msra.mxu0 %v428
    %688 = vmatmul.bf16.gmra.mxu0 %v653
    %v689 = vpop.f32.mrf.mxu0
    %v690 = vadd.f32 %v342, %v689
    %v691 = vpop.f32.mrf.mxu0
    %692 = vdwg.mxu0
    %v693 = vadd.f32 %v650, %v664
    %v694 = vxor.u32 %v693, 2147483648
    %v695 = vmul.f32 %v694, 1.442695
    %v696 = vpow.pop %v695
    %v697 = vadd.f32 %v696, 1.0
    %v698 = vrcp.pop %v697
    %v699 = vmul.f32 %v697, %v698
    %v700 = vsub.f32 1.0, %v699
    %v701 = vmul.f32 %v698, %v700
    %v702 = vadd.f32 %v698, %v701
    %vm703 = vweird.f32 %v697
    %vm704 = vweird.f32 %v698
    %vm705 = vmor %vm703, %vm704
    %v706 = vsel %vm705, %v698, %v702
    %v707 = vand.u32 2147483647, %v697
    %vm708 = vcmp.eq.f32.partialorder %v707, 8.507059e+37
    %v709 = vand.u32 %v697, 2147483648
    %v710 = vor.u32 1.1754944e-38, %v709
    %v711 = vsel %vm708, %v710, %v706
    %v712 = vmul.f32 1.0, %v711
    %v713 = vadd.f32 %v651, %v677
    %v714 = vxor.u32 %v713, 2147483648
    %v715 = vmul.f32 %v714, 1.442695
    %v716 = vpow.pop %v715
    %v717 = vadd.f32 %v716, 1.0
    %v718 = vrcp.pop %v717
    %v719 = vmul.f32 %v717, %v718
    %v720 = vsub.f32 1.0, %v719
    %v721 = vmul.f32 %v718, %v720
    %v722 = vadd.f32 %v718, %v721
    %vm723 = vweird.f32 %v717
    %vm724 = vweird.f32 %v718
    %vm725 = vmor %vm723, %vm724
    %v726 = vsel %vm725, %v718, %v722
    %v727 = vand.u32 2147483647, %v717
    %vm728 = vcmp.eq.f32.partialorder %v727, 8.507059e+37
    %v729 = vand.u32 %v717, 2147483648
    %v730 = vor.u32 1.1754944e-38, %v729
    %v731 = vsel %vm728, %v730, %v726
    %v732 = vmul.f32 1.0, %v731
    %v733 = vmul.f32 %v712, %v690
    %v734 = vadd.f32 %v652, %v733
    %v735 = vtanh.pop %v734
    %v736 = vsub.f32 1.0, %v732
    %v737 = vmul.f32 %v736, %v735
    %v738 = vmul.f32 %v732, %v649
    %v739 = vadd.f32 %v737, %v738
    %v740 = vld [vmem:[#allocation2 + $0x48] sm:$0xff]
    %v741 = vld [vmem:[#allocation2 + $0x50] sm:$0xff]
    %v742 = vld [vmem:[#allocation2 + $0x58] sm:$0xff]
    %v743 = vpack.c.bf16 %v739, %v739
    %744 = vmatpush.bf16.msra.mxu0 %v447
    %745 = vmatpush.bf16.msra.mxu0 %v444
    %746 = vmatpush.bf16.msra.mxu0 %v441
    %747 = vmatpush.bf16.msra.mxu0 %v438
    %748 = vmatpush.bf16.msra.mxu0 %v435
    %749 = vmatpush.bf16.msra.mxu0 %v432
    %750 = vmatpush.bf16.msra.mxu0 %v429
    %751 = vmatpush.bf16.msra.mxu0 %v426
    %752 = vmatmul.bf16.gmra.mxu0 %v743
    %v753 = vpop.f32.mrf.mxu0
    %v754 = vadd.f32 %v340, %v753
    %v755 = vpop.f32.mrf.mxu0
    %756 = vdwg.mxu0
    %757 = vmatpush.bf16.msra.mxu0 %v448
    %758 = vmatpush.bf16.msra.mxu0 %v445
    %759 = vmatpush.bf16.msra.mxu0 %v442
    %760 = vmatpush.bf16.msra.mxu0 %v439
    %761 = vmatpush.bf16.msra.mxu0 %v436
    %762 = vmatpush.bf16.msra.mxu0 %v433
    %763 = vmatpush.bf16.msra.mxu0 %v430
    %764 = vmatpush.bf16.msra.mxu0 %v427
    %765 = vmatmul.bf16.gmra.mxu0 %v743
    %v766 = vpop.f32.mrf.mxu0
    %v767 = vadd.f32 %v341, %v766
    %v768 = vpop.f32.mrf.mxu0
    %769 = vdwg.mxu0
    %770 = vmatpush.bf16.msra.mxu0 %v449
    %771 = vmatpush.bf16.msra.mxu0 %v446
    %772 = vmatpush.bf16.msra.mxu0 %v443
    %773 = vmatpush.bf16.msra.mxu0 %v440
    %774 = vmatpush.bf16.msra.mxu0 %v437
    %775 = vmatpush.bf16.msra.mxu0 %v434
    %776 = vmatpush.bf16.msra.mxu0 %v431
    %777 = vmatpush.bf16.msra.mxu0 %v428
    %778 = vmatmul.bf16.gmra.mxu0 %v743
    %v779 = vpop.f32.mrf.mxu0
    %v780 = vadd.f32 %v342, %v779
    %v781 = vpop.f32.mrf.mxu0
    %782 = vdwg.mxu0
    %v783 = vadd.f32 %v740, %v754
    %v784 = vxor.u32 %v783, 2147483648
    %v785 = vmul.f32 %v784, 1.442695
    %v786 = vpow.pop %v785
    %v787 = vadd.f32 %v786, 1.0
    %v788 = vrcp.pop %v787
    %v789 = vmul.f32 %v787, %v788
    %v790 = vsub.f32 1.0, %v789
    %v791 = vmul.f32 %v788, %v790
    %v792 = vadd.f32 %v788, %v791
    %vm793 = vweird.f32 %v787
    %vm794 = vweird.f32 %v788
    %vm795 = vmor %vm793, %vm794
    %v796 = vsel %vm795, %v788, %v792
    %v797 = vand.u32 2147483647, %v787
    %vm798 = vcmp.eq.f32.partialorder %v797, 8.507059e+37
    %v799 = vand.u32 %v787, 2147483648
    %v800 = vor.u32 1.1754944e-38, %v799
    %v801 = vsel %vm798, %v800, %v796
    %v802 = vmul.f32 1.0, %v801
    %v803 = vadd.f32 %v741, %v767
    %v804 = vxor.u32 %v803, 2147483648
    %v805 = vmul.f32 %v804, 1.442695
    %v806 = vpow.pop %v805
    %v807 = vadd.f32 %v806, 1.0
    %v808 = vrcp.pop %v807
    %v809 = vmul.f32 %v807, %v808
    %v810 = vsub.f32 1.0, %v809
    %v811 = vmul.f32 %v808, %v810
    %v812 = vadd.f32 %v808, %v811
    %vm813 = vweird.f32 %v807
    %vm814 = vweird.f32 %v808
    %vm815 = vmor %vm813, %vm814
    %v816 = vsel %vm815, %v808, %v812
    %v817 = vand.u32 2147483647, %v807
    %vm818 = vcmp.eq.f32.partialorder %v817, 8.507059e+37
    %v819 = vand.u32 %v807, 2147483648
    %v820 = vor.u32 1.1754944e-38, %v819
    %v821 = vsel %vm818, %v820, %v816
    %v822 = vmul.f32 1.0, %v821
    %v823 = vmul.f32 %v802, %v780
    %v824 = vadd.f32 %v742, %v823
    %v825 = vtanh.pop %v824
    %v826 = vsub.f32 1.0, %v822
    %v827 = vmul.f32 %v826, %v825
    %v828 = vmul.f32 %v822, %v739
    %v829 = vadd.f32 %v827, %v828
    %v830 = vld [vmem:[#allocation2 + $0x60] sm:$0xff]
    %v831 = vld [vmem:[#allocation2 + $0x68] sm:$0xff]
    %v832 = vld [vmem:[#allocation2 + $0x70] sm:$0xff]
    %v833 = vpack.c.bf16 %v829, %v829
    %834 = vmatpush.bf16.msra.mxu0 %v447
    %835 = vmatpush.bf16.msra.mxu0 %v444
    %836 = vmatpush.bf16.msra.mxu0 %v441
    %837 = vmatpush.bf16.msra.mxu0 %v438
    %838 = vmatpush.bf16.msra.mxu0 %v435
    %839 = vmatpush.bf16.msra.mxu0 %v432
    %840 = vmatpush.bf16.msra.mxu0 %v429
    %841 = vmatpush.bf16.msra.mxu0 %v426
    %842 = vmatmul.bf16.gmra.mxu0 %v833
    %v843 = vpop.f32.mrf.mxu0
    %v844 = vadd.f32 %v340, %v843
    %v845 = vpop.f32.mrf.mxu0
    %846 = vdwg.mxu0
    %847 = vmatpush.bf16.msra.mxu0 %v448
    %848 = vmatpush.bf16.msra.mxu0 %v445
    %849 = vmatpush.bf16.msra.mxu0 %v442
    %850 = vmatpush.bf16.msra.mxu0 %v439
    %851 = vmatpush.bf16.msra.mxu0 %v436
    %852 = vmatpush.bf16.msra.mxu0 %v433
    %853 = vmatpush.bf16.msra.mxu0 %v430
    %854 = vmatpush.bf16.msra.mxu0 %v427
    %855 = vmatmul.bf16.gmra.mxu0 %v833
    %v856 = vpop.f32.mrf.mxu0
    %v857 = vadd.f32 %v341, %v856
    %v858 = vpop.f32.mrf.mxu0
    %859 = vdwg.mxu0
    %860 = vmatpush.bf16.msra.mxu0 %v449
    %861 = vmatpush.bf16.msra.mxu0 %v446
    %862 = vmatpush.bf16.msra.mxu0 %v443
    %863 = vmatpush.bf16.msra.mxu0 %v440
    %864 = vmatpush.bf16.msra.mxu0 %v437
    %865 = vmatpush.bf16.msra.mxu0 %v434
    %866 = vmatpush.bf16.msra.mxu0 %v431
    %867 = vmatpush.bf16.msra.mxu0 %v428
    %868 = vmatmul.bf16.gmra.mxu0 %v833
    %v869 = vpop.f32.mrf.mxu0
    %v870 = vadd.f32 %v342, %v869
    %v871 = vpop.f32.mrf.mxu0
    %872 = vdwg.mxu0
    %v873 = vadd.f32 %v830, %v844
    %v874 = vxor.u32 %v873, 2147483648
    %v875 = vmul.f32 %v874, 1.442695
    %v876 = vpow.pop %v875
    %v877 = vadd.f32 %v876, 1.0
    %v878 = vrcp.pop %v877
    %v879 = vmul.f32 %v877, %v878
    %v880 = vsub.f32 1.0, %v879
    %v881 = vmul.f32 %v878, %v880
    %v882 = vadd.f32 %v878, %v881
    %vm883 = vweird.f32 %v877
    %vm884 = vweird.f32 %v878
    %vm885 = vmor %vm883, %vm884
    %v886 = vsel %vm885, %v878, %v882
    %v887 = vand.u32 2147483647, %v877
    %vm888 = vcmp.eq.f32.partialorder %v887, 8.507059e+37
    %v889 = vand.u32 %v877, 2147483648
    %v890 = vor.u32 1.1754944e-38, %v889
    %v891 = vsel %vm888, %v890, %v886
    %v892 = vmul.f32 1.0, %v891
    %v893 = vadd.f32 %v831, %v857
    %v894 = vxor.u32 %v893, 2147483648
    %v895 = vmul.f32 %v894, 1.442695
    %v896 = vpow.pop %v895
    %v897 = vadd.f32 %v896, 1.0
    %v898 = vrcp.pop %v897
    %v899 = vmul.f32 %v897, %v898
    %v900 = vsub.f32 1.0, %v899
    %v901 = vmul.f32 %v898, %v900
    %v902 = vadd.f32 %v898, %v901
    %vm903 = vweird.f32 %v897
    %vm904 = vweird.f32 %v898
    %vm905 = vmor %vm903, %vm904
    %v906 = vsel %vm905, %v898, %v902
    %v907 = vand.u32 2147483647, %v897
    %vm908 = vcmp.eq.f32.partialorder %v907, 8.507059e+37
    %v909 = vand.u32 %v897, 2147483648
    %v910 = vor.u32 1.1754944e-38, %v909
    %v911 = vsel %vm908, %v910, %v906
    %v912 = vmul.f32 1.0, %v911
    %v913 = vmul.f32 %v892, %v870
    %v914 = vadd.f32 %v832, %v913
    %v915 = vtanh.pop %v914
    %v916 = vsub.f32 1.0, %v912
    %v917 = vmul.f32 %v916, %v915
    %v918 = vmul.f32 %v912, %v829
    %v919 = vadd.f32 %v917, %v918
    %v920 = vld [vmem:[#allocation2 + $0x78] sm:$0xff]
    %v921 = vld [vmem:[#allocation2 + $0x80] sm:$0xff]
    %v922 = vld [vmem:[#allocation2 + $0x88] sm:$0xff]
    %v923 = vpack.c.bf16 %v919, %v919
    %924 = vmatpush.bf16.msra.mxu0 %v447
    %925 = vmatpush.bf16.msra.mxu0 %v444
    %926 = vmatpush.bf16.msra.mxu0 %v441
    %927 = vmatpush.bf16.msra.mxu0 %v438
    %928 = vmatpush.bf16.msra.mxu0 %v435
    %929 = vmatpush.bf16.msra.mxu0 %v432
    %930 = vmatpush.bf16.msra.mxu0 %v429
    %931 = vmatpush.bf16.msra.mxu0 %v426
    %932 = vmatmul.bf16.gmra.mxu0 %v923
    %v933 = vpop.f32.mrf.mxu0
    %v934 = vadd.f32 %v340, %v933
    %v935 = vpop.f32.mrf.mxu0
    %936 = vdwg.mxu0
    %937 = vmatpush.bf16.msra.mxu0 %v448
    %938 = vmatpush.bf16.msra.mxu0 %v445
    %939 = vmatpush.bf16.msra.mxu0 %v442
    %940 = vmatpush.bf16.msra.mxu0 %v439
    %941 = vmatpush.bf16.msra.mxu0 %v436
    %942 = vmatpush.bf16.msra.mxu0 %v433
    %943 = vmatpush.bf16.msra.mxu0 %v430
    %944 = vmatpush.bf16.msra.mxu0 %v427
    %945 = vmatmul.bf16.gmra.mxu0 %v923
    %v946 = vpop.f32.mrf.mxu0
    %v947 = vadd.f32 %v341, %v946
    %v948 = vpop.f32.mrf.mxu0
    %949 = vdwg.mxu0
    %950 = vmatpush.bf16.msra.mxu0 %v449
    %951 = vmatpush.bf16.msra.mxu0 %v446
    %952 = vmatpush.bf16.msra.mxu0 %v443
    %953 = vmatpush.bf16.msra.mxu0 %v440
    %954 = vmatpush.bf16.msra.mxu0 %v437
    %955 = vmatpush.bf16.msra.mxu0 %v434
    %956 = vmatpush.bf16.msra.mxu0 %v431
    %957 = vmatpush.bf16.msra.mxu0 %v428
    %958 = vmatmul.bf16.gmra.mxu0 %v923
    %v959 = vpop.f32.mrf.mxu0
    %v960 = vadd.f32 %v342, %v959
    %v961 = vpop.f32.mrf.mxu0
    %962 = vdwg.mxu0
    %v963 = vadd.f32 %v920, %v934
    %v964 = vxor.u32 %v963, 2147483648
    %v965 = vmul.f32 %v964, 1.442695
    %v966 = vpow.pop %v965
    %v967 = vadd.f32 %v966, 1.0
    %v968 = vrcp.pop %v967
    %v969 = vmul.f32 %v967, %v968
    %v970 = vsub.f32 1.0, %v969
    %v971 = vmul.f32 %v968, %v970
    %v972 = vadd.f32 %v968, %v971
    %vm973 = vweird.f32 %v967
    %vm974 = vweird.f32 %v968
    %vm975 = vmor %vm973, %vm974
    %v976 = vsel %vm975, %v968, %v972
    %v977 = vand.u32 2147483647, %v967
    %vm978 = vcmp.eq.f32.partialorder %v977, 8.507059e+37
    %v979 = vand.u32 %v967, 2147483648
    %v980 = vor.u32 1.1754944e-38, %v979
    %v981 = vsel %vm978, %v980, %v976
    %v982 = vmul.f32 1.0, %v981
    %v983 = vadd.f32 %v921, %v947
    %v984 = vxor.u32 %v983, 2147483648
    %v985 = vmul.f32 %v984, 1.442695
    %v986 = vpow.pop %v985
    %v987 = vadd.f32 %v986, 1.0
    %v988 = vrcp.pop %v987
    %v989 = vmul.f32 %v987, %v988
    %v990 = vsub.f32 1.0, %v989
    %v991 = vmul.f32 %v988, %v990
    %v992 = vadd.f32 %v988, %v991
    %vm993 = vweird.f32 %v987
    %vm994 = vweird.f32 %v988
    %vm995 = vmor %vm993, %vm994
    %v996 = vsel %vm995, %v988, %v992
    %v997 = vand.u32 2147483647, %v987
    %vm998 = vcmp.eq.f32.partialorder %v997, 8.507059e+37
    %v999 = vand.u32 %v987, 2147483648
    %v1000 = vor.u32 1.1754944e-38, %v999
    %v1001 = vsel %vm998, %v1000, %v996
    %v1002 = vmul.f32 1.0, %v1001
    %v1003 = vmul.f32 %v982, %v960
    %v1004 = vadd.f32 %v922, %v1003
    %v1005 = vtanh.pop %v1004
    %v1006 = vsub.f32 1.0, %v1002
    %v1007 = vmul.f32 %v1006, %v1005
    %v1008 = vmul.f32 %v1002, %v919
    %v1009 = vadd.f32 %v1007, %v1008
    %v1010 = vld [vmem:[%s19] sm:$0xf]
    %v1011 = vld [vmem:[%s19 + $0x4] sm:$0xf]
    %v1012 = vld [vmem:[%s19 + $0x8] sm:$0xf]
    %v1013 = vld [vmem:[%s19 + $0xc] sm:$0xf]
    %v1014 = vld [vmem:[%s19 + $0x10] sm:$0xf]
    %v1015 = vld [vmem:[%s19 + $0x14] sm:$0xf]
    %v1016 = vld [vmem:[%s19 + $0x18] sm:$0xf]
    %v1017 = vld [vmem:[%s19 + $0x1c] sm:$0xf]
    %v1018 = vld [vmem:[%s19 + $0x20] sm:$0xf]
    %v1019 = vld [vmem:[%s19 + $0x24] sm:$0xf]
    %v1020 = vld [vmem:[%s19 + $0x28] sm:$0xf]
    %v1021 = vld [vmem:[%s19 + $0x2c] sm:$0xf]
    %v1022 = vld [vmem:[%s19 + $0x30] sm:$0xf]
    %v1023 = vld [vmem:[%s19 + $0x34] sm:$0xf]
    %v1024 = vld [vmem:[%s19 + $0x38] sm:$0xf]
    %v1025 = vld [vmem:[%s19 + $0x3c] sm:$0xf]
    %v1026 = vld [vmem:[%s21] sm:$0x1]
    %v1027 = vpack.c.bf16 %v1009, %v1009
    %v1029 = vperm.slane %v1026, 0
    %v1047 = vunpack.c.l.b16 %v1010
    %v1048 = vunpack.c.l.b16 %v1011
    %v1049 = vunpack.c.l.b16 %v1012
    %v1050 = vunpack.c.l.b16 %v1013
    %v1051 = vunpack.c.l.b16 %v1014
    %v1052 = vunpack.c.l.b16 %v1015
    %v1053 = vunpack.c.l.b16 %v1016
    %v1054 = vunpack.c.l.b16 %v1017
    %v1055 = vunpack.c.l.b16 %v1018
    %v1056 = vunpack.c.l.b16 %v1019
    %v1057 = vunpack.c.l.b16 %v1020
    %v1058 = vunpack.c.l.b16 %v1021
    %v1059 = vunpack.c.l.b16 %v1022
    %v1060 = vunpack.c.l.b16 %v1023
    %v1061 = vunpack.c.l.b16 %v1024
    %v1062 = vunpack.c.l.b16 %v1025
    %v1063 = vpack.c.b16 %v1048, %v1047
    %v1064 = vpack.c.b16 %v1050, %v1049
    %v1065 = vpack.c.b16 %v1052, %v1051
    %v1066 = vpack.c.b16 %v1054, %v1053
    %v1067 = vpack.c.b16 %v1056, %v1055
    %v1068 = vpack.c.b16 %v1058, %v1057
    %v1069 = vpack.c.b16 %v1060, %v1059
    %v1070 = vpack.c.b16 %v1062, %v1061
    %1079 = vmatpush.bf16.msra.mxu0 %v1070
    %1080 = vmatpush.bf16.msra.mxu0 %v1069
    %1081 = vmatpush.bf16.msra.mxu0 %v1068
    %1082 = vmatpush.bf16.msra.mxu0 %v1067
    %1083 = vmatpush.bf16.msra.mxu0 %v1066
    %1084 = vmatpush.bf16.msra.mxu0 %v1065
    %1085 = vmatpush.bf16.msra.mxu0 %v1064
    %1086 = vmatpush.bf16.msra.mxu0 %v1063
    %1087 = vmatmul.bf16.gmra.mxu0 %v1027
    %v1088 = vpop.f32.mrf.mxu0
    %v1089 = vadd.f32 %v1029, %v1088
    %v1090 = vpop.f32.mrf.mxu0
    %1091 = vdwg.mxu0
    %vm1092 = vcmask 80896
    %1093 = vst.msk [vmem:[%s61] sm:$0xff] %vm1092, %v1089
    %v1094 = vld [vmem:[%s5] sm:$0x7f]
    %v1095 = vld [vmem:[%s23] sm:$0x1]
    %1097 = vset.pattern.permute.xlu0 0
    %1098 = vperm.xlu0 %1097, %v1094
    %v1099 = vpop.permute.xlu0 %1098
    %v1102 = vperm.slane %v1095, 0
    %v1104 = vmul.f32 %v1099, %v1102
    %v1105 = vld [vmem:[%s25] sm:$0x1]
    %v1107 = vperm.slane %v1105, 0
    %v1109 = vadd.f32 %v1104, %v1107
    %v1110 = vmax.f32 %v1109, 0.0
    %v1111 = vld [vmem:[%s27] sm:$0xf]
    %v1112 = vld [vmem:[%s27 + $0x4] sm:$0xf]
    %v1113 = vld [vmem:[%s27 + $0x8] sm:$0x3]
    %v1114 = vld [vmem:[%s29] sm:$0x1]
    %v1115 = vpack.c.bf16 %v1110, %v1110
    %v1117 = vperm.slane %v1114, 0
    %v1122 = vunpack.c.l.b16 %v1111
    %v1123 = vunpack.c.l.b16 %v1112
    %v1124 = vunpack.c.l.b16 %v1113
    %v1125 = vpack.c.b16 %v1123, %v1122
    %v1126 = vpack.c.b16 %v1124, %v1124
    %vm1128 = vcmask 162816
    %v1130 = vsel %vm1128, %v1115, 0
    %v1133 = vsel %vm200, %v1126, 0
    %1135 = vmatpush.bf16.msra.mxu0 0
    %1136 = vmatpush.bf16.msra.mxu0 0
    %1137 = vmatpush.bf16.msra.mxu0 0
    %1138 = vmatpush.bf16.msra.mxu0 0
    %1139 = vmatpush.bf16.msra.mxu0 0
    %1140 = vmatpush.bf16.msra.mxu0 0
    %1141 = vmatpush.bf16.msra.mxu0 %v1133
    %1142 = vmatpush.bf16.msra.mxu0 %v1125
    %1143 = vmatmul.bf16.gmra.mxu0 %v1130
    %v1144 = vpop.f32.mrf.mxu0
    %v1145 = vadd.f32 %v1117, %v1144
    %v1146 = vpop.f32.mrf.mxu0
    %1147 = vdwg.mxu0
    %v1148 = vmax.f32 %v1145, 0.0
    %s1149 = scalar_lea.vmem %s27, 12
    %v1150 = vld [vmem:[%s1149] sm:$0xf]
    %v1151 = vld [vmem:[%s1149 + $0x4] sm:$0xf]
    %v1152 = vld [vmem:[%s1149 + $0x8] sm:$0x3]
    %s1153 = scalar_lea.vmem %s29, 1
    %v1154 = vld [vmem:[%s1153] sm:$0x1]
    %v1155 = vpack.c.bf16 %v1148, %v1148
    %v1157 = vperm.slane %v1154, 0
    %v1162 = vunpack.c.l.b16 %v1150
    %v1163 = vunpack.c.l.b16 %v1151
    %v1164 = vunpack.c.l.b16 %v1152
    %v1165 = vpack.c.b16 %v1163, %v1162
    %v1166 = vpack.c.b16 %v1164, %v1164
    %v1169 = vsel %vm1128, %v1155, 0
    %v1172 = vsel %vm200, %v1166, 0
    %1174 = vmatpush.bf16.msra.mxu0 0
    %1175 = vmatpush.bf16.msra.mxu0 0
    %1176 = vmatpush.bf16.msra.mxu0 0
    %1177 = vmatpush.bf16.msra.mxu0 0
    %1178 = vmatpush.bf16.msra.mxu0 0
    %1179 = vmatpush.bf16.msra.mxu0 0
    %1180 = vmatpush.bf16.msra.mxu0 %v1172
    %1181 = vmatpush.bf16.msra.mxu0 %v1165
    %1182 = vmatmul.bf16.gmra.mxu0 %v1169
    %v1183 = vpop.f32.mrf.mxu0
    %v1184 = vadd.f32 %v1157, %v1183
    %v1185 = vpop.f32.mrf.mxu0
    %1186 = vdwg.mxu0
    %v1187 = vmax.f32 %v1184, 0.0
    %s1188 = scalar_lea.vmem %s27, 24
    %v1189 = vld [vmem:[%s1188] sm:$0xf]
    %v1190 = vld [vmem:[%s1188 + $0x4] sm:$0xf]
    %v1191 = vld [vmem:[%s1188 + $0x8] sm:$0x3]
    %s1192 = scalar_lea.vmem %s29, 2
    %v1193 = vld [vmem:[%s1192] sm:$0x1]
    %v1194 = vpack.c.bf16 %v1187, %v1187
    %v1196 = vperm.slane %v1193, 0
    %v1201 = vunpack.c.l.b16 %v1189
    %v1202 = vunpack.c.l.b16 %v1190
    %v1203 = vunpack.c.l.b16 %v1191
    %v1204 = vpack.c.b16 %v1202, %v1201
    %v1205 = vpack.c.b16 %v1203, %v1203
    %v1208 = vsel %vm1128, %v1194, 0
    %v1211 = vsel %vm200, %v1205, 0
    %1213 = vmatpush.bf16.msra.mxu0 0
    %1214 = vmatpush.bf16.msra.mxu0 0
    %1215 = vmatpush.bf16.msra.mxu0 0
    %1216 = vmatpush.bf16.msra.mxu0 0
    %1217 = vmatpush.bf16.msra.mxu0 0
    %1218 = vmatpush.bf16.msra.mxu0 0
    %1219 = vmatpush.bf16.msra.mxu0 %v1211
    %1220 = vmatpush.bf16.msra.mxu0 %v1204
    %1221 = vmatmul.bf16.gmra.mxu0 %v1208
    %v1222 = vpop.f32.mrf.mxu0
    %v1223 = vadd.f32 %v1196, %v1222
    %v1224 = vpop.f32.mrf.mxu0
    %1225 = vdwg.mxu0
    %v1226 = vmax.f32 %v1223, 0.0
    %s1227 = scalar_lea.vmem %s27, 36
    %v1228 = vld [vmem:[%s1227] sm:$0xf]
    %v1229 = vld [vmem:[%s1227 + $0x4] sm:$0xf]
    %v1230 = vld [vmem:[%s1227 + $0x8] sm:$0x3]
    %s1231 = scalar_lea.vmem %s29, 3
    %v1232 = vld [vmem:[%s1231] sm:$0x1]
    %v1233 = vpack.c.bf16 %v1226, %v1226
    %v1235 = vperm.slane %v1232, 0
    %v1240 = vunpack.c.l.b16 %v1228
    %v1241 = vunpack.c.l.b16 %v1229
    %v1242 = vunpack.c.l.b16 %v1230
    %v1243 = vpack.c.b16 %v1241, %v1240
    %v1244 = vpack.c.b16 %v1242, %v1242
    %v1247 = vsel %vm1128, %v1233, 0
    %v1250 = vsel %vm200, %v1244, 0
    %1252 = vmatpush.bf16.msra.mxu0 0
    %1253 = vmatpush.bf16.msra.mxu0 0
    %1254 = vmatpush.bf16.msra.mxu0 0
    %1255 = vmatpush.bf16.msra.mxu0 0
    %1256 = vmatpush.bf16.msra.mxu0 0
    %1257 = vmatpush.bf16.msra.mxu0 0
    %1258 = vmatpush.bf16.msra.mxu0 %v1250
    %1259 = vmatpush.bf16.msra.mxu0 %v1243
    %1260 = vmatmul.bf16.gmra.mxu0 %v1247
    %v1261 = vpop.f32.mrf.mxu0
    %v1262 = vadd.f32 %v1235, %v1261
    %v1263 = vpop.f32.mrf.mxu0
    %1264 = vdwg.mxu0
    %v1265 = vmax.f32 %v1262, 0.0
    %v1266 = vld [vmem:[%s31] sm:$0xf]
    %v1267 = vld [vmem:[%s31 + $0x4] sm:$0xf]
    %v1268 = vld [vmem:[%s31 + $0x8] sm:$0x3]
    %v1269 = vld [vmem:[%s33] sm:$0x1]
    %v1270 = vpack.c.bf16 %v1265, %v1265
    %v1272 = vperm.slane %v1269, 0
    %v1277 = vunpack.c.l.b16 %v1266
    %v1278 = vunpack.c.l.b16 %v1267
    %v1279 = vunpack.c.l.b16 %v1268
    %v1280 = vpack.c.b16 %v1278, %v1277
    %v1281 = vpack.c.b16 %v1279, %v1279
    %v1284 = vsel %vm1128, %v1270, 0
    %v1287 = vsel %vm200, %v1281, 0
    %1289 = vmatpush.bf16.msra.mxu0 0
    %1290 = vmatpush.bf16.msra.mxu0 0
    %1291 = vmatpush.bf16.msra.mxu0 0
    %1292 = vmatpush.bf16.msra.mxu0 0
    %1293 = vmatpush.bf16.msra.mxu0 0
    %1294 = vmatpush.bf16.msra.mxu0 0
    %1295 = vmatpush.bf16.msra.mxu0 %v1287
    %1296 = vmatpush.bf16.msra.mxu0 %v1280
    %1297 = vmatmul.bf16.gmra.mxu0 %v1284
    %v1298 = vpop.f32.mrf.mxu0
    %v1299 = vadd.f32 %v1272, %v1298
    %v1300 = vpop.f32.mrf.mxu0
    %1301 = vdwg.mxu0
    %v1302 = vld [vmem:[%s37] sm:$0x1]
    %v1303 = vpack.c.bf16 %v1299, %v1299
    %vm1304 = vcmask 15360
    %v1306 = vsel %vm1304, %v1303, 0
    %vm1308 = vcmask 1040384
    %v1310 = vsel %vm1308, %v1302, 0
    %1312 = vmatpush.bf16.msra.mxu0 0
    %1313 = vmatpush.bf16.msra.mxu0 0
    %1314 = vmatpush.bf16.msra.mxu0 0
    %1315 = vmatpush.bf16.msra.mxu0 0
    %1316 = vmatpush.bf16.msra.mxu0 0
    %1317 = vmatpush.bf16.msra.mxu0 0
    %1318 = vmatpush.bf16.msra.mxu0 0
    %1319 = vmatpush.bf16.msra.mxu0 %v1310
    %1320 = vmatmul.bf16.gmra.mxu0 %v1306
    %v1321 = vpop.f32.mrf.mxu0
    %v1322 = vadd.f32 0.0, %v1321
    %v1323 = vpop.f32.mrf.mxu0
    %1324 = vdwg.mxu0
    %v1325 = vld [vmem:[%s7] sm:$0xff]
    %1327 = vset.pattern.permute.xlu0 0
    %1328 = vperm.xlu0 %1327, %v1325
    %v1329 = vpop.permute.xlu0 %1328
    %v1331 = vperm.slane %v1322, 0
    %v1332 = vmul.f32 %v1329, %v1331
    %v1333 = vperm.slane %v1322, 1
    %v1334 = vmul.f32 %v1329, %v1333
    %v1335 = vperm.slane %v1322, 2
    %v1336 = vmul.f32 %v1329, %v1335
    %v1337 = vperm.slane %v1322, 3
    %v1338 = vmul.f32 %v1329, %v1337
    %v1339 = vperm.slane %v1322, 4
    %v1340 = vmul.f32 %v1329, %v1339
    %v1341 = vperm.slane %v1322, 5
    %v1342 = vmul.f32 %v1329, %v1341
    %v1343 = vperm.slane %v1322, 6
    %v1344 = vmul.f32 %v1329, %v1343
    %v1346 = vrot.slane %v1089, 7
    %v1348 = vrot.slane %v1089, 6
    %v1350 = vsel %vm1308, %v1089, %v1346
    %v1351 = vsel %vm200, %v1350, %v1346
    %v1352 = vsel %vm201, %v1351, %v1348
    %vm1353 = vcmask 1043456
    %v1354 = vsel %vm1353, %v1352, 0.0
    %v1355 = vld [vmem:[%s35] sm:$0xf]
    %v1356 = vld [vmem:[%s35 + $0x4] sm:$0x1]
    %v1357 = vld [vmem:[%s39] sm:$0x1]
    %v1358 = vld [vmem:[%s45] sm:$0xf]
    %v1359 = vld [vmem:[%s45 + $0x4] sm:$0xf]
    %v1360 = vld [vmem:[%s45 + $0x8] sm:$0xf]
    %v1361 = vld [vmem:[%s45 + $0xc] sm:$0xf]
    %v1362 = vld [vmem:[%s45 + $0x10] sm:$0xf]
    %v1363 = vld [vmem:[%s47] sm:$0x1]
    %v1364 = vld [vmem:[%s41] sm:$0xf]
    %v1365 = vld [vmem:[%s41 + $0x4] sm:$0xf]
    %v1366 = vld [vmem:[%s41 + $0x8] sm:$0xf]
    %v1367 = vld [vmem:[%s41 + $0xc] sm:$0xf]
    %v1368 = vld [vmem:[%s41 + $0x10] sm:$0xf]
    %s1369 = scalar_lea.vmem %s41, 20
    %v1370 = vld [vmem:[%s1369] sm:$0xf]
    %v1371 = vld [vmem:[%s1369 + $0x4] sm:$0xf]
    %v1372 = vld [vmem:[%s1369 + $0x8] sm:$0xf]
    %v1373 = vld [vmem:[%s1369 + $0xc] sm:$0xf]
    %v1374 = vld [vmem:[%s1369 + $0x10] sm:$0xf]
    %s1375 = scalar_lea.vmem %s41, 40
    %v1376 = vld [vmem:[%s1375] sm:$0xf]
    %v1377 = vld [vmem:[%s1375 + $0x4] sm:$0xf]
    %v1378 = vld [vmem:[%s1375 + $0x8] sm:$0xf]
    %v1379 = vld [vmem:[%s1375 + $0xc] sm:$0xf]
    %v1380 = vld [vmem:[%s1375 + $0x10] sm:$0xf]
    %s1381 = scalar_lea.vmem %s41, 60
    %v1382 = vld [vmem:[%s1381] sm:$0xf]
    %v1383 = vld [vmem:[%s1381 + $0x4] sm:$0xf]
    %v1384 = vld [vmem:[%s1381 + $0x8] sm:$0xf]
    %v1385 = vld [vmem:[%s1381 + $0xc] sm:$0xf]
    %v1386 = vld [vmem:[%s1381 + $0x10] sm:$0xf]
    %v1387 = vld [vmem:[%s43] sm:$0x1]
    %s1388 = scalar_lea.vmem %s43, 1
    %v1389 = vld [vmem:[%s1388] sm:$0x1]
    %s1390 = scalar_lea.vmem %s43, 2
    %v1391 = vld [vmem:[%s1390] sm:$0x1]
    %s1392 = scalar_lea.vmem %s43, 3
    %v1393 = vld [vmem:[%s1392] sm:$0x1]
    %1394 = vst.msk [vmem:[%s63] sm:$0xff] %vm1092, %v1354
    %vm1395 = vcmask 7168
    %1396 = vst.msk [vmem:[%s65] sm:$0xff] %vm1395, 0.0
    %s1397 = sld [smem:[#allocation3]]
    %v1398 = vpack.c.bf16 %v1354, %v1354
    %v1401 = vunpack.c.l.b16 %v1355
    %v1402 = vunpack.c.l.b16 %v1356
    %v1403 = vpack.c.b16 %v1402, %v1401
    %v1405 = vsel %vm1092, %v1398, 0
    %vm1407 = vcmask 1044480
    %v1409 = vsel %vm1407, %v1403, 0
    %1411 = vmatpush.bf16.msra.mxu0 0
    %1412 = vmatpush.bf16.msra.mxu0 0
    %1413 = vmatpush.bf16.msra.mxu0 0
    %1414 = vmatpush.bf16.msra.mxu0 0
    %1415 = vmatpush.bf16.msra.mxu0 0
    %1416 = vmatpush.bf16.msra.mxu0 0
    %1417 = vmatpush.bf16.msra.mxu0 0
    %1418 = vmatpush.bf16.msra.mxu0 %v1409
    %1419 = vmatmul.bf16.gmra.mxu0 %v1405
    %v1420 = vpop.f32.mrf.mxu0
    %v1421 = vadd.f32 %v1332, %v1420
    %v1422 = vpop.f32.mrf.mxu0
    %1423 = vdwg.mxu0
    %v1425 = vperm.slane %v1357, 0
    %v1427 = vadd.f32 %v1421, %v1425
    %v1428 = vmax.f32 %v1427, 0.0
    %v1429 = vpack.c.bf16 %v1428, %v1428
    %v1431 = vperm.slane %v1387, 0
    %v1438 = vunpack.c.l.b16 %v1364
    %v1439 = vunpack.c.l.b16 %v1365
    %v1440 = vunpack.c.l.b16 %v1366
    %v1441 = vunpack.c.l.b16 %v1367
    %v1442 = vunpack.c.l.b16 %v1368
    %v1443 = vpack.c.b16 %v1439, %v1438
    %v1444 = vpack.c.b16 %v1441, %v1440
    %v1445 = vpack.c.b16 %v1442, %v1442
    %vm1448 = vcmask 326656
    %v1450 = vsel %vm1448, %v1429, 0
    %v1453 = vsel %vm1353, %v1445, 0
    %1455 = vmatpush.bf16.msra.mxu0 0
    %1456 = vmatpush.bf16.msra.mxu0 0
    %1457 = vmatpush.bf16.msra.mxu0 0
    %1458 = vmatpush.bf16.msra.mxu0 0
    %1459 = vmatpush.bf16.msra.mxu0 0
    %1460 = vmatpush.bf16.msra.mxu0 %v1453
    %1461 = vmatpush.bf16.msra.mxu0 %v1444
    %1462 = vmatpush.bf16.msra.mxu0 %v1443
    %1463 = vmatmul.bf16.gmra.mxu0 %v1450
    %v1464 = vpop.f32.mrf.mxu0
    %v1465 = vadd.f32 %v1431, %v1464
    %v1466 = vpop.f32.mrf.mxu0
    %1467 = vdwg.mxu0
    %v1468 = vtanh.pop %v1465
    %v1469 = vpack.c.bf16 %v1468, %v1468
    %v1471 = vperm.slane %v1389, 0
    %v1478 = vunpack.c.l.b16 %v1370
    %v1479 = vunpack.c.l.b16 %v1371
    %v1480 = vunpack.c.l.b16 %v1372
    %v1481 = vunpack.c.l.b16 %v1373
    %v1482 = vunpack.c.l.b16 %v1374
    %v1483 = vpack.c.b16 %v1479, %v1478
    %v1484 = vpack.c.b16 %v1481, %v1480
    %v1485 = vpack.c.b16 %v1482, %v1482
    %v1489 = vsel %vm1448, %v1469, 0
    %v1492 = vsel %vm1353, %v1485, 0
    %1494 = vmatpush.bf16.msra.mxu0 0
    %1495 = vmatpush.bf16.msra.mxu0 0
    %1496 = vmatpush.bf16.msra.mxu0 0
    %1497 = vmatpush.bf16.msra.mxu0 0
    %1498 = vmatpush.bf16.msra.mxu0 0
    %1499 = vmatpush.bf16.msra.mxu0 %v1492
    %1500 = vmatpush.bf16.msra.mxu0 %v1484
    %1501 = vmatpush.bf16.msra.mxu0 %v1483
    %1502 = vmatmul.bf16.gmra.mxu0 %v1489
    %v1503 = vpop.f32.mrf.mxu0
    %v1504 = vadd.f32 %v1471, %v1503
    %v1505 = vpop.f32.mrf.mxu0
    %1506 = vdwg.mxu0
    %v1507 = vtanh.pop %v1504
    %v1508 = vpack.c.bf16 %v1507, %v1507
    %v1510 = vperm.slane %v1391, 0
    %v1517 = vunpack.c.l.b16 %v1376
    %v1518 = vunpack.c.l.b16 %v1377
    %v1519 = vunpack.c.l.b16 %v1378
    %v1520 = vunpack.c.l.b16 %v1379
    %v1521 = vunpack.c.l.b16 %v1380
    %v1522 = vpack.c.b16 %v1518, %v1517
    %v1523 = vpack.c.b16 %v1520, %v1519
    %v1524 = vpack.c.b16 %v1521, %v1521
    %v1528 = vsel %vm1448, %v1508, 0
    %v1531 = vsel %vm1353, %v1524, 0
    %1533 = vmatpush.bf16.msra.mxu0 0
    %1534 = vmatpush.bf16.msra.mxu0 0
    %1535 = vmatpush.bf16.msra.mxu0 0
    %1536 = vmatpush.bf16.msra.mxu0 0
    %1537 = vmatpush.bf16.msra.mxu0 0
    %1538 = vmatpush.bf16.msra.mxu0 %v1531
    %1539 = vmatpush.bf16.msra.mxu0 %v1523
    %1540 = vmatpush.bf16.msra.mxu0 %v1522
    %1541 = vmatmul.bf16.gmra.mxu0 %v1528
    %v1542 = vpop.f32.mrf.mxu0
    %v1543 = vadd.f32 %v1510, %v1542
    %v1544 = vpop.f32.mrf.mxu0
    %1545 = vdwg.mxu0
    %v1546 = vtanh.pop %v1543
    %v1547 = vpack.c.bf16 %v1546, %v1546
    %v1549 = vperm.slane %v1393, 0
    %v1556 = vunpack.c.l.b16 %v1382
    %v1557 = vunpack.c.l.b16 %v1383
    %v1558 = vunpack.c.l.b16 %v1384
    %v1559 = vunpack.c.l.b16 %v1385
    %v1560 = vunpack.c.l.b16 %v1386
    %v1561 = vpack.c.b16 %v1557, %v1556
    %v1562 = vpack.c.b16 %v1559, %v1558
    %v1563 = vpack.c.b16 %v1560, %v1560
    %v1567 = vsel %vm1448, %v1547, 0
    %v1570 = vsel %vm1353, %v1563, 0
    %1572 = vmatpush.bf16.msra.mxu0 0
    %1573 = vmatpush.bf16.msra.mxu0 0
    %1574 = vmatpush.bf16.msra.mxu0 0
    %1575 = vmatpush.bf16.msra.mxu0 0
    %1576 = vmatpush.bf16.msra.mxu0 0
    %1577 = vmatpush.bf16.msra.mxu0 %v1570
    %1578 = vmatpush.bf16.msra.mxu0 %v1562
    %1579 = vmatpush.bf16.msra.mxu0 %v1561
    %1580 = vmatmul.bf16.gmra.mxu0 %v1567
    %v1581 = vpop.f32.mrf.mxu0
    %v1582 = vadd.f32 %v1549, %v1581
    %v1583 = vpop.f32.mrf.mxu0
    %1584 = vdwg.mxu0
    %v1585 = vtanh.pop %v1582
    %v1586 = vpack.c.bf16 %v1585, %v1585
    %v1588 = vperm.slane %v1363, 0
    %v1595 = vunpack.c.l.b16 %v1358
    %v1596 = vunpack.c.l.b16 %v1359
    %v1597 = vunpack.c.l.b16 %v1360
    %v1598 = vunpack.c.l.b16 %v1361
    %v1599 = vunpack.c.l.b16 %v1362
    %v1600 = vpack.c.b16 %v1596, %v1595
    %v1601 = vpack.c.b16 %v1598, %v1597
    %v1602 = vpack.c.b16 %v1599, %v1599
    %v1606 = vsel %vm1448, %v1586, 0
    %v1609 = vsel %vm1353, %v1602, 0
    %1611 = vmatpush.bf16.msra.mxu0 0
    %1612 = vmatpush.bf16.msra.mxu0 0
    %1613 = vmatpush.bf16.msra.mxu0 0
    %1614 = vmatpush.bf16.msra.mxu0 0
    %1615 = vmatpush.bf16.msra.mxu0 0
    %1616 = vmatpush.bf16.msra.mxu0 %v1609
    %1617 = vmatpush.bf16.msra.mxu0 %v1601
    %1618 = vmatpush.bf16.msra.mxu0 %v1600
    %1619 = vmatmul.bf16.gmra.mxu0 %v1606
    %v1620 = vpop.f32.mrf.mxu0
    %v1621 = vadd.f32 %v1588, %v1620
    %v1622 = vpop.f32.mrf.mxu0
    %1623 = vdwg.mxu0
    %v1624 = vsub.f32 0.0, %v1354
    %v1625 = vsub.f32 %v1621, %v1624
    %v1626 = vsub.f32 %v1625, %v1624
    %v1627 = vmul.f32 %v1626, 10.0
    %v1628 = vmul.f32 %v1627, %v1627
    %v1629 = vsel %vm1092, %v1628, 0.0
    %1630 = vadd.xlane.f32.xlu0 %v1629
    %v1631 = vpop.xlane.xlu0 %1630
    %v1632 = vmul.f32 %v1631, 0.5
    %v1633 = vstv %s1397
    %v1634 = vmul.f32 %v1625, %v1633
    %v1635 = vadd.f32 %v1354, %v1634
    %v1636 = vld [vmem:[%s9] sm:$0xff]
    %v1637 = vmul.f32 %v1636, 0.1
    %v1638 = vadd.f32 %v1635, %v1637
    %v1639 = vmul.f32 %v1632, %v1633
    %v1640 = vadd.f32 %v1639, 0.0
    %s1641 = scalar_lea.vmem %s63, 8
    %1642 = vst.msk [vmem:[%s1641] sm:$0xff] %vm1092, %v1638
    %s1643 = scalar_lea.vmem %s65, 8
    %1644 = vst.msk [vmem:[%s1643] sm:$0xff] %vm1395, %v1640
    %s1645 = sld [smem:[#allocation3 + $0x1]]
    %v1646 = vpack.c.bf16 %v1638, %v1638
    %v1648 = vsel %vm1092, %v1646, 0
    %1650 = vmatpush.bf16.msra.mxu0 0
    %1651 = vmatpush.bf16.msra.mxu0 0
    %1652 = vmatpush.bf16.msra.mxu0 0
    %1653 = vmatpush.bf16.msra.mxu0 0
    %1654 = vmatpush.bf16.msra.mxu0 0
    %1655 = vmatpush.bf16.msra.mxu0 0
    %1656 = vmatpush.bf16.msra.mxu0 0
    %1657 = vmatpush.bf16.msra.mxu0 %v1409
    %1658 = vmatmul.bf16.gmra.mxu0 %v1648
    %v1659 = vpop.f32.mrf.mxu0
    %v1660 = vadd.f32 %v1334, %v1659
    %v1661 = vpop.f32.mrf.mxu0
    %1662 = vdwg.mxu0
    %v1663 = vadd.f32 %v1660, %v1425
    %v1664 = vmax.f32 %v1663, 0.0
    %v1665 = vpack.c.bf16 %v1664, %v1664
    %v1667 = vsel %vm1448, %v1665, 0
    %1669 = vmatpush.bf16.msra.mxu0 0
    %1670 = vmatpush.bf16.msra.mxu0 0
    %1671 = vmatpush.bf16.msra.mxu0 0
    %1672 = vmatpush.bf16.msra.mxu0 0
    %1673 = vmatpush.bf16.msra.mxu0 0
    %1674 = vmatpush.bf16.msra.mxu0 %v1453
    %1675 = vmatpush.bf16.msra.mxu0 %v1444
    %1676 = vmatpush.bf16.msra.mxu0 %v1443
    %1677 = vmatmul.bf16.gmra.mxu0 %v1667
    %v1678 = vpop.f32.mrf.mxu0
    %v1679 = vadd.f32 %v1431, %v1678
    %v1680 = vpop.f32.mrf.mxu0
    %1681 = vdwg.mxu0
    %v1682 = vtanh.pop %v1679
    %v1683 = vpack.c.bf16 %v1682, %v1682
    %v1685 = vsel %vm1448, %v1683, 0
    %1687 = vmatpush.bf16.msra.mxu0 0
    %1688 = vmatpush.bf16.msra.mxu0 0
    %1689 = vmatpush.bf16.msra.mxu0 0
    %1690 = vmatpush.bf16.msra.mxu0 0
    %1691 = vmatpush.bf16.msra.mxu0 0
    %1692 = vmatpush.bf16.msra.mxu0 %v1492
    %1693 = vmatpush.bf16.msra.mxu0 %v1484
    %1694 = vmatpush.bf16.msra.mxu0 %v1483
    %1695 = vmatmul.bf16.gmra.mxu0 %v1685
    %v1696 = vpop.f32.mrf.mxu0
    %v1697 = vadd.f32 %v1471, %v1696
    %v1698 = vpop.f32.mrf.mxu0
    %1699 = vdwg.mxu0
    %v1700 = vtanh.pop %v1697
    %v1701 = vpack.c.bf16 %v1700, %v1700
    %v1703 = vsel %vm1448, %v1701, 0
    %1705 = vmatpush.bf16.msra.mxu0 0
    %1706 = vmatpush.bf16.msra.mxu0 0
    %1707 = vmatpush.bf16.msra.mxu0 0
    %1708 = vmatpush.bf16.msra.mxu0 0
    %1709 = vmatpush.bf16.msra.mxu0 0
    %1710 = vmatpush.bf16.msra.mxu0 %v1531
    %1711 = vmatpush.bf16.msra.mxu0 %v1523
    %1712 = vmatpush.bf16.msra.mxu0 %v1522
    %1713 = vmatmul.bf16.gmra.mxu0 %v1703
    %v1714 = vpop.f32.mrf.mxu0
    %v1715 = vadd.f32 %v1510, %v1714
    %v1716 = vpop.f32.mrf.mxu0
    %1717 = vdwg.mxu0
    %v1718 = vtanh.pop %v1715
    %v1719 = vpack.c.bf16 %v1718, %v1718
    %v1721 = vsel %vm1448, %v1719, 0
    %1723 = vmatpush.bf16.msra.mxu0 0
    %1724 = vmatpush.bf16.msra.mxu0 0
    %1725 = vmatpush.bf16.msra.mxu0 0
    %1726 = vmatpush.bf16.msra.mxu0 0
    %1727 = vmatpush.bf16.msra.mxu0 0
    %1728 = vmatpush.bf16.msra.mxu0 %v1570
    %1729 = vmatpush.bf16.msra.mxu0 %v1562
    %1730 = vmatpush.bf16.msra.mxu0 %v1561
    %1731 = vmatmul.bf16.gmra.mxu0 %v1721
    %v1732 = vpop.f32.mrf.mxu0
    %v1733 = vadd.f32 %v1549, %v1732
    %v1734 = vpop.f32.mrf.mxu0
    %1735 = vdwg.mxu0
    %v1736 = vtanh.pop %v1733
    %v1737 = vpack.c.bf16 %v1736, %v1736
    %v1739 = vsel %vm1448, %v1737, 0
    %1741 = vmatpush.bf16.msra.mxu0 0
    %1742 = vmatpush.bf16.msra.mxu0 0
    %1743 = vmatpush.bf16.msra.mxu0 0
    %1744 = vmatpush.bf16.msra.mxu0 0
    %1745 = vmatpush.bf16.msra.mxu0 0
    %1746 = vmatpush.bf16.msra.mxu0 %v1609
    %1747 = vmatpush.bf16.msra.mxu0 %v1601
    %1748 = vmatpush.bf16.msra.mxu0 %v1600
    %1749 = vmatmul.bf16.gmra.mxu0 %v1739
    %v1750 = vpop.f32.mrf.mxu0
    %v1751 = vadd.f32 %v1588, %v1750
    %v1752 = vpop.f32.mrf.mxu0
    %1753 = vdwg.mxu0
    %v1754 = vsub.f32 0.0, %v1638
    %v1755 = vsub.f32 %v1751, %v1754
    %v1756 = vsub.f32 %v1755, %v1754
    %v1757 = vmul.f32 %v1756, 10.0
    %v1758 = vmul.f32 %v1757, %v1757
    %v1759 = vsel %vm1092, %v1758, 0.0
    %1760 = vadd.xlane.f32.xlu0 %v1759
    %v1761 = vpop.xlane.xlu0 %1760
    %v1762 = vmul.f32 %v1761, 0.5
    %v1763 = vstv %s1645
    %v1764 = vmul.f32 %v1755, %v1763
    %v1765 = vadd.f32 %v1638, %v1764
    %s1766 = scalar_lea.vmem %s9, 8
    %v1767 = vld [vmem:[%s1766] sm:$0xff]
    %v1768 = vmul.f32 %v1767, 0.1
    %v1769 = vadd.f32 %v1765, %v1768
    %v1770 = vmul.f32 %v1762, %v1763
    %v1771 = vadd.f32 %v1640, %v1770
    %s1772 = scalar_lea.vmem %s63, 16
    %1773 = vst.msk [vmem:[%s1772] sm:$0xff] %vm1092, %v1769
    %s1774 = scalar_lea.vmem %s65, 16
    %1775 = vst.msk [vmem:[%s1774] sm:$0xff] %vm1395, %v1771
    %s1776 = sld [smem:[#allocation3 + $0x2]]
    %v1777 = vpack.c.bf16 %v1769, %v1769
    %v1779 = vsel %vm1092, %v1777, 0
    %1781 = vmatpush.bf16.msra.mxu0 0
    %1782 = vmatpush.bf16.msra.mxu0 0
    %1783 = vmatpush.bf16.msra.mxu0 0
    %1784 = vmatpush.bf16.msra.mxu0 0
    %1785 = vmatpush.bf16.msra.mxu0 0
    %1786 = vmatpush.bf16.msra.mxu0 0
    %1787 = vmatpush.bf16.msra.mxu0 0
    %1788 = vmatpush.bf16.msra.mxu0 %v1409
    %1789 = vmatmul.bf16.gmra.mxu0 %v1779
    %v1790 = vpop.f32.mrf.mxu0
    %v1791 = vadd.f32 %v1336, %v1790
    %v1792 = vpop.f32.mrf.mxu0
    %1793 = vdwg.mxu0
    %v1794 = vadd.f32 %v1791, %v1425
    %v1795 = vmax.f32 %v1794, 0.0
    %v1796 = vpack.c.bf16 %v1795, %v1795
    %v1798 = vsel %vm1448, %v1796, 0
    %1800 = vmatpush.bf16.msra.mxu0 0
    %1801 = vmatpush.bf16.msra.mxu0 0
    %1802 = vmatpush.bf16.msra.mxu0 0
    %1803 = vmatpush.bf16.msra.mxu0 0
    %1804 = vmatpush.bf16.msra.mxu0 0
    %1805 = vmatpush.bf16.msra.mxu0 %v1453
    %1806 = vmatpush.bf16.msra.mxu0 %v1444
    %1807 = vmatpush.bf16.msra.mxu0 %v1443
    %1808 = vmatmul.bf16.gmra.mxu0 %v1798
    %v1809 = vpop.f32.mrf.mxu0
    %v1810 = vadd.f32 %v1431, %v1809
    %v1811 = vpop.f32.mrf.mxu0
    %1812 = vdwg.mxu0
    %v1813 = vtanh.pop %v1810
    %v1814 = vpack.c.bf16 %v1813, %v1813
    %v1816 = vsel %vm1448, %v1814, 0
    %1818 = vmatpush.bf16.msra.mxu0 0
    %1819 = vmatpush.bf16.msra.mxu0 0
    %1820 = vmatpush.bf16.msra.mxu0 0
    %1821 = vmatpush.bf16.msra.mxu0 0
    %1822 = vmatpush.bf16.msra.mxu0 0
    %1823 = vmatpush.bf16.msra.mxu0 %v1492
    %1824 = vmatpush.bf16.msra.mxu0 %v1484
    %1825 = vmatpush.bf16.msra.mxu0 %v1483
    %1826 = vmatmul.bf16.gmra.mxu0 %v1816
    %v1827 = vpop.f32.mrf.mxu0
    %v1828 = vadd.f32 %v1471, %v1827
    %v1829 = vpop.f32.mrf.mxu0
    %1830 = vdwg.mxu0
    %v1831 = vtanh.pop %v1828
    %v1832 = vpack.c.bf16 %v1831, %v1831
    %v1834 = vsel %vm1448, %v1832, 0
    %1836 = vmatpush.bf16.msra.mxu0 0
    %1837 = vmatpush.bf16.msra.mxu0 0
    %1838 = vmatpush.bf16.msra.mxu0 0
    %1839 = vmatpush.bf16.msra.mxu0 0
    %1840 = vmatpush.bf16.msra.mxu0 0
    %1841 = vmatpush.bf16.msra.mxu0 %v1531
    %1842 = vmatpush.bf16.msra.mxu0 %v1523
    %1843 = vmatpush.bf16.msra.mxu0 %v1522
    %1844 = vmatmul.bf16.gmra.mxu0 %v1834
    %v1845 = vpop.f32.mrf.mxu0
    %v1846 = vadd.f32 %v1510, %v1845
    %v1847 = vpop.f32.mrf.mxu0
    %1848 = vdwg.mxu0
    %v1849 = vtanh.pop %v1846
    %v1850 = vpack.c.bf16 %v1849, %v1849
    %v1852 = vsel %vm1448, %v1850, 0
    %1854 = vmatpush.bf16.msra.mxu0 0
    %1855 = vmatpush.bf16.msra.mxu0 0
    %1856 = vmatpush.bf16.msra.mxu0 0
    %1857 = vmatpush.bf16.msra.mxu0 0
    %1858 = vmatpush.bf16.msra.mxu0 0
    %1859 = vmatpush.bf16.msra.mxu0 %v1570
    %1860 = vmatpush.bf16.msra.mxu0 %v1562
    %1861 = vmatpush.bf16.msra.mxu0 %v1561
    %1862 = vmatmul.bf16.gmra.mxu0 %v1852
    %v1863 = vpop.f32.mrf.mxu0
    %v1864 = vadd.f32 %v1549, %v1863
    %v1865 = vpop.f32.mrf.mxu0
    %1866 = vdwg.mxu0
    %v1867 = vtanh.pop %v1864
    %v1868 = vpack.c.bf16 %v1867, %v1867
    %v1870 = vsel %vm1448, %v1868, 0
    %1872 = vmatpush.bf16.msra.mxu0 0
    %1873 = vmatpush.bf16.msra.mxu0 0
    %1874 = vmatpush.bf16.msra.mxu0 0
    %1875 = vmatpush.bf16.msra.mxu0 0
    %1876 = vmatpush.bf16.msra.mxu0 0
    %1877 = vmatpush.bf16.msra.mxu0 %v1609
    %1878 = vmatpush.bf16.msra.mxu0 %v1601
    %1879 = vmatpush.bf16.msra.mxu0 %v1600
    %1880 = vmatmul.bf16.gmra.mxu0 %v1870
    %v1881 = vpop.f32.mrf.mxu0
    %v1882 = vadd.f32 %v1588, %v1881
    %v1883 = vpop.f32.mrf.mxu0
    %1884 = vdwg.mxu0
    %v1885 = vsub.f32 0.0, %v1769
    %v1886 = vsub.f32 %v1882, %v1885
    %v1887 = vsub.f32 %v1886, %v1885
    %v1888 = vmul.f32 %v1887, 10.0
    %v1889 = vmul.f32 %v1888, %v1888
    %v1890 = vsel %vm1092, %v1889, 0.0
    %1891 = vadd.xlane.f32.xlu0 %v1890
    %v1892 = vpop.xlane.xlu0 %1891
    %v1893 = vmul.f32 %v1892, 0.5
    %v1894 = vstv %s1776
    %v1895 = vmul.f32 %v1886, %v1894
    %v1896 = vadd.f32 %v1769, %v1895
    %s1897 = scalar_lea.vmem %s9, 16
    %v1898 = vld [vmem:[%s1897] sm:$0xff]
    %v1899 = vmul.f32 %v1898, 0.1
    %v1900 = vadd.f32 %v1896, %v1899
    %v1901 = vmul.f32 %v1893, %v1894
    %v1902 = vadd.f32 %v1771, %v1901
    %s1903 = scalar_lea.vmem %s63, 24
    %1904 = vst.msk [vmem:[%s1903] sm:$0xff] %vm1092, %v1900
    %s1905 = scalar_lea.vmem %s65, 24
    %1906 = vst.msk [vmem:[%s1905] sm:$0xff] %vm1395, %v1902
    %s1907 = sld [smem:[#allocation3 + $0x3]]
    %v1908 = vpack.c.bf16 %v1900, %v1900
    %v1910 = vsel %vm1092, %v1908, 0
    %1912 = vmatpush.bf16.msra.mxu0 0
    %1913 = vmatpush.bf16.msra.mxu0 0
    %1914 = vmatpush.bf16.msra.mxu0 0
    %1915 = vmatpush.bf16.msra.mxu0 0
    %1916 = vmatpush.bf16.msra.mxu0 0
    %1917 = vmatpush.bf16.msra.mxu0 0
    %1918 = vmatpush.bf16.msra.mxu0 0
    %1919 = vmatpush.bf16.msra.mxu0 %v1409
    %1920 = vmatmul.bf16.gmra.mxu0 %v1910
    %v1921 = vpop.f32.mrf.mxu0
    %v1922 = vadd.f32 %v1338, %v1921
    %v1923 = vpop.f32.mrf.mxu0
    %1924 = vdwg.mxu0
    %v1925 = vadd.f32 %v1922, %v1425
    %v1926 = vmax.f32 %v1925, 0.0
    %v1927 = vpack.c.bf16 %v1926, %v1926
    %v1929 = vsel %vm1448, %v1927, 0
    %1931 = vmatpush.bf16.msra.mxu0 0
    %1932 = vmatpush.bf16.msra.mxu0 0
    %1933 = vmatpush.bf16.msra.mxu0 0
    %1934 = vmatpush.bf16.msra.mxu0 0
    %1935 = vmatpush.bf16.msra.mxu0 0
    %1936 = vmatpush.bf16.msra.mxu0 %v1453
    %1937 = vmatpush.bf16.msra.mxu0 %v1444
    %1938 = vmatpush.bf16.msra.mxu0 %v1443
    %1939 = vmatmul.bf16.gmra.mxu0 %v1929
    %v1940 = vpop.f32.mrf.mxu0
    %v1941 = vadd.f32 %v1431, %v1940
    %v1942 = vpop.f32.mrf.mxu0
    %1943 = vdwg.mxu0
    %v1944 = vtanh.pop %v1941
    %v1945 = vpack.c.bf16 %v1944, %v1944
    %v1947 = vsel %vm1448, %v1945, 0
    %1949 = vmatpush.bf16.msra.mxu0 0
    %1950 = vmatpush.bf16.msra.mxu0 0
    %1951 = vmatpush.bf16.msra.mxu0 0
    %1952 = vmatpush.bf16.msra.mxu0 0
    %1953 = vmatpush.bf16.msra.mxu0 0
    %1954 = vmatpush.bf16.msra.mxu0 %v1492
    %1955 = vmatpush.bf16.msra.mxu0 %v1484
    %1956 = vmatpush.bf16.msra.mxu0 %v1483
    %1957 = vmatmul.bf16.gmra.mxu0 %v1947
    %v1958 = vpop.f32.mrf.mxu0
    %v1959 = vadd.f32 %v1471, %v1958
    %v1960 = vpop.f32.mrf.mxu0
    %1961 = vdwg.mxu0
    %v1962 = vtanh.pop %v1959
    %v1963 = vpack.c.bf16 %v1962, %v1962
    %v1965 = vsel %vm1448, %v1963, 0
    %1967 = vmatpush.bf16.msra.mxu0 0
    %1968 = vmatpush.bf16.msra.mxu0 0
    %1969 = vmatpush.bf16.msra.mxu0 0
    %1970 = vmatpush.bf16.msra.mxu0 0
    %1971 = vmatpush.bf16.msra.mxu0 0
    %1972 = vmatpush.bf16.msra.mxu0 %v1531
    %1973 = vmatpush.bf16.msra.mxu0 %v1523
    %1974 = vmatpush.bf16.msra.mxu0 %v1522
    %1975 = vmatmul.bf16.gmra.mxu0 %v1965
    %v1976 = vpop.f32.mrf.mxu0
    %v1977 = vadd.f32 %v1510, %v1976
    %v1978 = vpop.f32.mrf.mxu0
    %1979 = vdwg.mxu0
    %v1980 = vtanh.pop %v1977
    %v1981 = vpack.c.bf16 %v1980, %v1980
    %v1983 = vsel %vm1448, %v1981, 0
    %1985 = vmatpush.bf16.msra.mxu0 0
    %1986 = vmatpush.bf16.msra.mxu0 0
    %1987 = vmatpush.bf16.msra.mxu0 0
    %1988 = vmatpush.bf16.msra.mxu0 0
    %1989 = vmatpush.bf16.msra.mxu0 0
    %1990 = vmatpush.bf16.msra.mxu0 %v1570
    %1991 = vmatpush.bf16.msra.mxu0 %v1562
    %1992 = vmatpush.bf16.msra.mxu0 %v1561
    %1993 = vmatmul.bf16.gmra.mxu0 %v1983
    %v1994 = vpop.f32.mrf.mxu0
    %v1995 = vadd.f32 %v1549, %v1994
    %v1996 = vpop.f32.mrf.mxu0
    %1997 = vdwg.mxu0
    %v1998 = vtanh.pop %v1995
    %v1999 = vpack.c.bf16 %v1998, %v1998
    %v2001 = vsel %vm1448, %v1999, 0
    %2003 = vmatpush.bf16.msra.mxu0 0
    %2004 = vmatpush.bf16.msra.mxu0 0
    %2005 = vmatpush.bf16.msra.mxu0 0
    %2006 = vmatpush.bf16.msra.mxu0 0
    %2007 = vmatpush.bf16.msra.mxu0 0
    %2008 = vmatpush.bf16.msra.mxu0 %v1609
    %2009 = vmatpush.bf16.msra.mxu0 %v1601
    %2010 = vmatpush.bf16.msra.mxu0 %v1600
    %2011 = vmatmul.bf16.gmra.mxu0 %v2001
    %v2012 = vpop.f32.mrf.mxu0
    %v2013 = vadd.f32 %v1588, %v2012
    %v2014 = vpop.f32.mrf.mxu0
    %2015 = vdwg.mxu0
    %v2016 = vsub.f32 0.0, %v1900
    %v2017 = vsub.f32 %v2013, %v2016
    %v2018 = vsub.f32 %v2017, %v2016
    %v2019 = vmul.f32 %v2018, 10.0
    %v2020 = vmul.f32 %v2019, %v2019
    %v2021 = vsel %vm1092, %v2020, 0.0
    %2022 = vadd.xlane.f32.xlu0 %v2021
    %v2023 = vpop.xlane.xlu0 %2022
    %v2024 = vmul.f32 %v2023, 0.5
    %v2025 = vstv %s1907
    %v2026 = vmul.f32 %v2017, %v2025
    %v2027 = vadd.f32 %v1900, %v2026
    %s2028 = scalar_lea.vmem %s9, 24
    %v2029 = vld [vmem:[%s2028] sm:$0xff]
    %v2030 = vmul.f32 %v2029, 0.1
    %v2031 = vadd.f32 %v2027, %v2030
    %v2032 = vmul.f32 %v2024, %v2025
    %v2033 = vadd.f32 %v1902, %v2032
    %s2034 = scalar_lea.vmem %s63, 32
    %2035 = vst.msk [vmem:[%s2034] sm:$0xff] %vm1092, %v2031
    %s2036 = scalar_lea.vmem %s65, 32
    %2037 = vst.msk [vmem:[%s2036] sm:$0xff] %vm1395, %v2033
    %s2038 = sld [smem:[#allocation3 + $0x4]]
    %v2039 = vpack.c.bf16 %v2031, %v2031
    %v2041 = vsel %vm1092, %v2039, 0
    %2043 = vmatpush.bf16.msra.mxu0 0
    %2044 = vmatpush.bf16.msra.mxu0 0
    %2045 = vmatpush.bf16.msra.mxu0 0
    %2046 = vmatpush.bf16.msra.mxu0 0
    %2047 = vmatpush.bf16.msra.mxu0 0
    %2048 = vmatpush.bf16.msra.mxu0 0
    %2049 = vmatpush.bf16.msra.mxu0 0
    %2050 = vmatpush.bf16.msra.mxu0 %v1409
    %2051 = vmatmul.bf16.gmra.mxu0 %v2041
    %v2052 = vpop.f32.mrf.mxu0
    %v2053 = vadd.f32 %v1340, %v2052
    %v2054 = vpop.f32.mrf.mxu0
    %2055 = vdwg.mxu0
    %v2056 = vadd.f32 %v2053, %v1425
    %v2057 = vmax.f32 %v2056, 0.0
    %v2058 = vpack.c.bf16 %v2057, %v2057
    %v2060 = vsel %vm1448, %v2058, 0
    %2062 = vmatpush.bf16.msra.mxu0 0
    %2063 = vmatpush.bf16.msra.mxu0 0
    %2064 = vmatpush.bf16.msra.mxu0 0
    %2065 = vmatpush.bf16.msra.mxu0 0
    %2066 = vmatpush.bf16.msra.mxu0 0
    %2067 = vmatpush.bf16.msra.mxu0 %v1453
    %2068 = vmatpush.bf16.msra.mxu0 %v1444
    %2069 = vmatpush.bf16.msra.mxu0 %v1443
    %2070 = vmatmul.bf16.gmra.mxu0 %v2060
    %v2071 = vpop.f32.mrf.mxu0
    %v2072 = vadd.f32 %v1431, %v2071
    %v2073 = vpop.f32.mrf.mxu0
    %2074 = vdwg.mxu0
    %v2075 = vtanh.pop %v2072
    %v2076 = vpack.c.bf16 %v2075, %v2075
    %v2078 = vsel %vm1448, %v2076, 0
    %2080 = vmatpush.bf16.msra.mxu0 0
    %2081 = vmatpush.bf16.msra.mxu0 0
    %2082 = vmatpush.bf16.msra.mxu0 0
    %2083 = vmatpush.bf16.msra.mxu0 0
    %2084 = vmatpush.bf16.msra.mxu0 0
    %2085 = vmatpush.bf16.msra.mxu0 %v1492
    %2086 = vmatpush.bf16.msra.mxu0 %v1484
    %2087 = vmatpush.bf16.msra.mxu0 %v1483
    %2088 = vmatmul.bf16.gmra.mxu0 %v2078
    %v2089 = vpop.f32.mrf.mxu0
    %v2090 = vadd.f32 %v1471, %v2089
    %v2091 = vpop.f32.mrf.mxu0
    %2092 = vdwg.mxu0
    %v2093 = vtanh.pop %v2090
    %v2094 = vpack.c.bf16 %v2093, %v2093
    %v2096 = vsel %vm1448, %v2094, 0
    %2098 = vmatpush.bf16.msra.mxu0 0
    %2099 = vmatpush.bf16.msra.mxu0 0
    %2100 = vmatpush.bf16.msra.mxu0 0
    %2101 = vmatpush.bf16.msra.mxu0 0
    %2102 = vmatpush.bf16.msra.mxu0 0
    %2103 = vmatpush.bf16.msra.mxu0 %v1531
    %2104 = vmatpush.bf16.msra.mxu0 %v1523
    %2105 = vmatpush.bf16.msra.mxu0 %v1522
    %2106 = vmatmul.bf16.gmra.mxu0 %v2096
    %v2107 = vpop.f32.mrf.mxu0
    %v2108 = vadd.f32 %v1510, %v2107
    %v2109 = vpop.f32.mrf.mxu0
    %2110 = vdwg.mxu0
    %v2111 = vtanh.pop %v2108
    %v2112 = vpack.c.bf16 %v2111, %v2111
    %v2114 = vsel %vm1448, %v2112, 0
    %2116 = vmatpush.bf16.msra.mxu0 0
    %2117 = vmatpush.bf16.msra.mxu0 0
    %2118 = vmatpush.bf16.msra.mxu0 0
    %2119 = vmatpush.bf16.msra.mxu0 0
    %2120 = vmatpush.bf16.msra.mxu0 0
    %2121 = vmatpush.bf16.msra.mxu0 %v1570
    %2122 = vmatpush.bf16.msra.mxu0 %v1562
    %2123 = vmatpush.bf16.msra.mxu0 %v1561
    %2124 = vmatmul.bf16.gmra.mxu0 %v2114
    %v2125 = vpop.f32.mrf.mxu0
    %v2126 = vadd.f32 %v1549, %v2125
    %v2127 = vpop.f32.mrf.mxu0
    %2128 = vdwg.mxu0
    %v2129 = vtanh.pop %v2126
    %v2130 = vpack.c.bf16 %v2129, %v2129
    %v2132 = vsel %vm1448, %v2130, 0
    %2134 = vmatpush.bf16.msra.mxu0 0
    %2135 = vmatpush.bf16.msra.mxu0 0
    %2136 = vmatpush.bf16.msra.mxu0 0
    %2137 = vmatpush.bf16.msra.mxu0 0
    %2138 = vmatpush.bf16.msra.mxu0 0
    %2139 = vmatpush.bf16.msra.mxu0 %v1609
    %2140 = vmatpush.bf16.msra.mxu0 %v1601
    %2141 = vmatpush.bf16.msra.mxu0 %v1600
    %2142 = vmatmul.bf16.gmra.mxu0 %v2132
    %v2143 = vpop.f32.mrf.mxu0
    %v2144 = vadd.f32 %v1588, %v2143
    %v2145 = vpop.f32.mrf.mxu0
    %2146 = vdwg.mxu0
    %v2147 = vsub.f32 0.0, %v2031
    %v2148 = vsub.f32 %v2144, %v2147
    %v2149 = vsub.f32 %v2148, %v2147
    %v2150 = vmul.f32 %v2149, 10.0
    %v2151 = vmul.f32 %v2150, %v2150
    %v2152 = vsel %vm1092, %v2151, 0.0
    %2153 = vadd.xlane.f32.xlu0 %v2152
    %v2154 = vpop.xlane.xlu0 %2153
    %v2155 = vmul.f32 %v2154, 0.5
    %v2156 = vstv %s2038
    %v2157 = vmul.f32 %v2148, %v2156
    %v2158 = vadd.f32 %v2031, %v2157
    %s2159 = scalar_lea.vmem %s9, 32
    %v2160 = vld [vmem:[%s2159] sm:$0xff]
    %v2161 = vmul.f32 %v2160, 0.1
    %v2162 = vadd.f32 %v2158, %v2161
    %v2163 = vmul.f32 %v2155, %v2156
    %v2164 = vadd.f32 %v2033, %v2163
    %s2165 = scalar_lea.vmem %s63, 40
    %2166 = vst.msk [vmem:[%s2165] sm:$0xff] %vm1092, %v2162
    %s2167 = scalar_lea.vmem %s65, 40
    %2168 = vst.msk [vmem:[%s2167] sm:$0xff] %vm1395, %v2164
    %s2169 = sld [smem:[#allocation3 + $0x5]]
    %v2170 = vpack.c.bf16 %v2162, %v2162
    %v2172 = vsel %vm1092, %v2170, 0
    %2174 = vmatpush.bf16.msra.mxu0 0
    %2175 = vmatpush.bf16.msra.mxu0 0
    %2176 = vmatpush.bf16.msra.mxu0 0
    %2177 = vmatpush.bf16.msra.mxu0 0
    %2178 = vmatpush.bf16.msra.mxu0 0
    %2179 = vmatpush.bf16.msra.mxu0 0
    %2180 = vmatpush.bf16.msra.mxu0 0
    %2181 = vmatpush.bf16.msra.mxu0 %v1409
    %2182 = vmatmul.bf16.gmra.mxu0 %v2172
    %v2183 = vpop.f32.mrf.mxu0
    %v2184 = vadd.f32 %v1342, %v2183
    %v2185 = vpop.f32.mrf.mxu0
    %2186 = vdwg.mxu0
    %v2187 = vadd.f32 %v2184, %v1425
    %v2188 = vmax.f32 %v2187, 0.0
    %v2189 = vpack.c.bf16 %v2188, %v2188
    %v2191 = vsel %vm1448, %v2189, 0
    %2193 = vmatpush.bf16.msra.mxu0 0
    %2194 = vmatpush.bf16.msra.mxu0 0
    %2195 = vmatpush.bf16.msra.mxu0 0
    %2196 = vmatpush.bf16.msra.mxu0 0
    %2197 = vmatpush.bf16.msra.mxu0 0
    %2198 = vmatpush.bf16.msra.mxu0 %v1453
    %2199 = vmatpush.bf16.msra.mxu0 %v1444
    %2200 = vmatpush.bf16.msra.mxu0 %v1443
    %2201 = vmatmul.bf16.gmra.mxu0 %v2191
    %v2202 = vpop.f32.mrf.mxu0
    %v2203 = vadd.f32 %v1431, %v2202
    %v2204 = vpop.f32.mrf.mxu0
    %2205 = vdwg.mxu0
    %v2206 = vtanh.pop %v2203
    %v2207 = vpack.c.bf16 %v2206, %v2206
    %v2209 = vsel %vm1448, %v2207, 0
    %2211 = vmatpush.bf16.msra.mxu0 0
    %2212 = vmatpush.bf16.msra.mxu0 0
    %2213 = vmatpush.bf16.msra.mxu0 0
    %2214 = vmatpush.bf16.msra.mxu0 0
    %2215 = vmatpush.bf16.msra.mxu0 0
    %2216 = vmatpush.bf16.msra.mxu0 %v1492
    %2217 = vmatpush.bf16.msra.mxu0 %v1484
    %2218 = vmatpush.bf16.msra.mxu0 %v1483
    %2219 = vmatmul.bf16.gmra.mxu0 %v2209
    %v2220 = vpop.f32.mrf.mxu0
    %v2221 = vadd.f32 %v1471, %v2220
    %v2222 = vpop.f32.mrf.mxu0
    %2223 = vdwg.mxu0
    %v2224 = vtanh.pop %v2221
    %v2225 = vpack.c.bf16 %v2224, %v2224
    %v2227 = vsel %vm1448, %v2225, 0
    %2229 = vmatpush.bf16.msra.mxu0 0
    %2230 = vmatpush.bf16.msra.mxu0 0
    %2231 = vmatpush.bf16.msra.mxu0 0
    %2232 = vmatpush.bf16.msra.mxu0 0
    %2233 = vmatpush.bf16.msra.mxu0 0
    %2234 = vmatpush.bf16.msra.mxu0 %v1531
    %2235 = vmatpush.bf16.msra.mxu0 %v1523
    %2236 = vmatpush.bf16.msra.mxu0 %v1522
    %2237 = vmatmul.bf16.gmra.mxu0 %v2227
    %v2238 = vpop.f32.mrf.mxu0
    %v2239 = vadd.f32 %v1510, %v2238
    %v2240 = vpop.f32.mrf.mxu0
    %2241 = vdwg.mxu0
    %v2242 = vtanh.pop %v2239
    %v2243 = vpack.c.bf16 %v2242, %v2242
    %v2245 = vsel %vm1448, %v2243, 0
    %2247 = vmatpush.bf16.msra.mxu0 0
    %2248 = vmatpush.bf16.msra.mxu0 0
    %2249 = vmatpush.bf16.msra.mxu0 0
    %2250 = vmatpush.bf16.msra.mxu0 0
    %2251 = vmatpush.bf16.msra.mxu0 0
    %2252 = vmatpush.bf16.msra.mxu0 %v1570
    %2253 = vmatpush.bf16.msra.mxu0 %v1562
    %2254 = vmatpush.bf16.msra.mxu0 %v1561
    %2255 = vmatmul.bf16.gmra.mxu0 %v2245
    %v2256 = vpop.f32.mrf.mxu0
    %v2257 = vadd.f32 %v1549, %v2256
    %v2258 = vpop.f32.mrf.mxu0
    %2259 = vdwg.mxu0
    %v2260 = vtanh.pop %v2257
    %v2261 = vpack.c.bf16 %v2260, %v2260
    %v2263 = vsel %vm1448, %v2261, 0
    %2265 = vmatpush.bf16.msra.mxu0 0
    %2266 = vmatpush.bf16.msra.mxu0 0
    %2267 = vmatpush.bf16.msra.mxu0 0
    %2268 = vmatpush.bf16.msra.mxu0 0
    %2269 = vmatpush.bf16.msra.mxu0 0
    %2270 = vmatpush.bf16.msra.mxu0 %v1609
    %2271 = vmatpush.bf16.msra.mxu0 %v1601
    %2272 = vmatpush.bf16.msra.mxu0 %v1600
    %2273 = vmatmul.bf16.gmra.mxu0 %v2263
    %v2274 = vpop.f32.mrf.mxu0
    %v2275 = vadd.f32 %v1588, %v2274
    %v2276 = vpop.f32.mrf.mxu0
    %2277 = vdwg.mxu0
    %v2278 = vsub.f32 0.0, %v2162
    %v2279 = vsub.f32 %v2275, %v2278
    %v2280 = vsub.f32 %v2279, %v2278
    %v2281 = vmul.f32 %v2280, 10.0
    %v2282 = vmul.f32 %v2281, %v2281
    %v2283 = vsel %vm1092, %v2282, 0.0
    %2284 = vadd.xlane.f32.xlu0 %v2283
    %v2285 = vpop.xlane.xlu0 %2284
    %v2286 = vmul.f32 %v2285, 0.5
    %v2287 = vstv %s2169
    %v2288 = vmul.f32 %v2279, %v2287
    %v2289 = vadd.f32 %v2162, %v2288
    %s2290 = scalar_lea.vmem %s9, 40
    %v2291 = vld [vmem:[%s2290] sm:$0xff]
    %v2292 = vmul.f32 %v2291, 0.1
    %v2293 = vadd.f32 %v2289, %v2292
    %v2294 = vmul.f32 %v2286, %v2287
    %v2295 = vadd.f32 %v2164, %v2294
    %s2296 = scalar_lea.vmem %s63, 48
    %2297 = vst.msk [vmem:[%s2296] sm:$0xff] %vm1092, %v2293
    %s2298 = scalar_lea.vmem %s65, 48
    %2299 = vst.msk [vmem:[%s2298] sm:$0xff] %vm1395, %v2295
    %s2300 = sld [smem:[#allocation3 + $0x6]]
    %v2301 = vpack.c.bf16 %v2293, %v2293
    %v2303 = vsel %vm1092, %v2301, 0
    %2305 = vmatpush.bf16.msra.mxu0 0
    %2306 = vmatpush.bf16.msra.mxu0 0
    %2307 = vmatpush.bf16.msra.mxu0 0
    %2308 = vmatpush.bf16.msra.mxu0 0
    %2309 = vmatpush.bf16.msra.mxu0 0
    %2310 = vmatpush.bf16.msra.mxu0 0
    %2311 = vmatpush.bf16.msra.mxu0 0
    %2312 = vmatpush.bf16.msra.mxu0 %v1409
    %2313 = vmatmul.bf16.gmra.mxu0 %v2303
    %v2314 = vpop.f32.mrf.mxu0
    %v2315 = vadd.f32 %v1344, %v2314
    %v2316 = vpop.f32.mrf.mxu0
    %2317 = vdwg.mxu0
    %v2318 = vadd.f32 %v2315, %v1425
    %v2319 = vmax.f32 %v2318, 0.0
    %v2320 = vpack.c.bf16 %v2319, %v2319
    %v2322 = vsel %vm1448, %v2320, 0
    %2324 = vmatpush.bf16.msra.mxu0 0
    %2325 = vmatpush.bf16.msra.mxu0 0
    %2326 = vmatpush.bf16.msra.mxu0 0
    %2327 = vmatpush.bf16.msra.mxu0 0
    %2328 = vmatpush.bf16.msra.mxu0 0
    %2329 = vmatpush.bf16.msra.mxu0 %v1453
    %2330 = vmatpush.bf16.msra.mxu0 %v1444
    %2331 = vmatpush.bf16.msra.mxu0 %v1443
    %2332 = vmatmul.bf16.gmra.mxu0 %v2322
    %v2333 = vpop.f32.mrf.mxu0
    %v2334 = vadd.f32 %v1431, %v2333
    %v2335 = vpop.f32.mrf.mxu0
    %2336 = vdwg.mxu0
    %v2337 = vtanh.pop %v2334
    %v2338 = vpack.c.bf16 %v2337, %v2337
    %v2340 = vsel %vm1448, %v2338, 0
    %2342 = vmatpush.bf16.msra.mxu0 0
    %2343 = vmatpush.bf16.msra.mxu0 0
    %2344 = vmatpush.bf16.msra.mxu0 0
    %2345 = vmatpush.bf16.msra.mxu0 0
    %2346 = vmatpush.bf16.msra.mxu0 0
    %2347 = vmatpush.bf16.msra.mxu0 %v1492
    %2348 = vmatpush.bf16.msra.mxu0 %v1484
    %2349 = vmatpush.bf16.msra.mxu0 %v1483
    %2350 = vmatmul.bf16.gmra.mxu0 %v2340
    %v2351 = vpop.f32.mrf.mxu0
    %v2352 = vadd.f32 %v1471, %v2351
    %v2353 = vpop.f32.mrf.mxu0
    %2354 = vdwg.mxu0
    %v2355 = vtanh.pop %v2352
    %v2356 = vpack.c.bf16 %v2355, %v2355
    %v2358 = vsel %vm1448, %v2356, 0
    %2360 = vmatpush.bf16.msra.mxu0 0
    %2361 = vmatpush.bf16.msra.mxu0 0
    %2362 = vmatpush.bf16.msra.mxu0 0
    %2363 = vmatpush.bf16.msra.mxu0 0
    %2364 = vmatpush.bf16.msra.mxu0 0
    %2365 = vmatpush.bf16.msra.mxu0 %v1531
    %2366 = vmatpush.bf16.msra.mxu0 %v1523
    %2367 = vmatpush.bf16.msra.mxu0 %v1522
    %2368 = vmatmul.bf16.gmra.mxu0 %v2358
    %v2369 = vpop.f32.mrf.mxu0
    %v2370 = vadd.f32 %v1510, %v2369
    %v2371 = vpop.f32.mrf.mxu0
    %2372 = vdwg.mxu0
    %v2373 = vtanh.pop %v2370
    %v2374 = vpack.c.bf16 %v2373, %v2373
    %v2376 = vsel %vm1448, %v2374, 0
    %2378 = vmatpush.bf16.msra.mxu0 0
    %2379 = vmatpush.bf16.msra.mxu0 0
    %2380 = vmatpush.bf16.msra.mxu0 0
    %2381 = vmatpush.bf16.msra.mxu0 0
    %2382 = vmatpush.bf16.msra.mxu0 0
    %2383 = vmatpush.bf16.msra.mxu0 %v1570
    %2384 = vmatpush.bf16.msra.mxu0 %v1562
    %2385 = vmatpush.bf16.msra.mxu0 %v1561
    %2386 = vmatmul.bf16.gmra.mxu0 %v2376
    %v2387 = vpop.f32.mrf.mxu0
    %v2388 = vadd.f32 %v1549, %v2387
    %v2389 = vpop.f32.mrf.mxu0
    %2390 = vdwg.mxu0
    %v2391 = vtanh.pop %v2388
    %v2392 = vpack.c.bf16 %v2391, %v2391
    %v2394 = vsel %vm1448, %v2392, 0
    %2396 = vmatpush.bf16.msra.mxu0 0
    %2397 = vmatpush.bf16.msra.mxu0 0
    %2398 = vmatpush.bf16.msra.mxu0 0
    %2399 = vmatpush.bf16.msra.mxu0 0
    %2400 = vmatpush.bf16.msra.mxu0 0
    %2401 = vmatpush.bf16.msra.mxu0 %v1609
    %2402 = vmatpush.bf16.msra.mxu0 %v1601
    %2403 = vmatpush.bf16.msra.mxu0 %v1600
    %2404 = vmatmul.bf16.gmra.mxu0 %v2394
    %v2405 = vpop.f32.mrf.mxu0
    %v2406 = vadd.f32 %v1588, %v2405
    %v2407 = vpop.f32.mrf.mxu0
    %2408 = vdwg.mxu0
    %v2409 = vsub.f32 0.0, %v2293
    %v2410 = vsub.f32 %v2406, %v2409
    %v2411 = vsub.f32 %v2410, %v2409
    %v2412 = vmul.f32 %v2411, 10.0
    %v2413 = vmul.f32 %v2412, %v2412
    %v2414 = vsel %vm1092, %v2413, 0.0
    %2415 = vadd.xlane.f32.xlu0 %v2414
    %v2416 = vpop.xlane.xlu0 %2415
    %v2417 = vmul.f32 %v2416, 0.5
    %v2418 = vstv %s2300
    %v2419 = vmul.f32 %v2410, %v2418
    %v2420 = vadd.f32 %v2293, %v2419
    %s2421 = scalar_lea.vmem %s9, 48
    %v2422 = vld [vmem:[%s2421] sm:$0xff]
    %v2423 = vmul.f32 %v2422, 0.1
    %v2424 = vadd.f32 %v2420, %v2423
    %v2425 = vmul.f32 %v2417, %v2418
    %v2426 = vadd.f32 %v2295, %v2425
    %s2427 = scalar_lea.vmem %s63, 56
    %2428 = vst.msk [vmem:[%s2427] sm:$0xff] %vm1092, %v2424
    %s2429 = scalar_lea.vmem %s65, 56
    %2430 = vst.msk [vmem:[%s2429] sm:$0xff] %vm1395, %v2426
    %v2431 = vld [vmem:[%s49] sm:$0xf]
    %v2432 = vld [vmem:[%s49 + $0x4] sm:$0x1]
    %v2433 = vld [vmem:[%s51] sm:$0x1]
    %v2434 = vpack.c.bf16 %v1638, %v1354
    %v2435 = vpack.c.bf16 %v1900, %v1769
    %v2436 = vpack.c.bf16 %v2162, %v2031
    %v2437 = vpack.c.bf16 %v2424, %v2293
    %v2439 = vperm.slane %v2433, 0
    %v2443 = vunpack.c.l.b16 %v2431
    %v2444 = vunpack.c.l.b16 %v2432
    %v2445 = vpack.c.b16 %v2444, %v2443
    %v2447 = vsel %vm1092, %v2434, 0
    %v2450 = vsel %vm1092, %v2435, 0
    %v2453 = vsel %vm1092, %v2436, 0
    %v2456 = vsel %vm1092, %v2437, 0
    %v2459 = vsel %vm1407, %v2445, 0
    %2461 = vmatpush.bf16.msra.mxu0 0
    %2462 = vmatpush.bf16.msra.mxu0 0
    %2463 = vmatpush.bf16.msra.mxu0 0
    %2464 = vmatpush.bf16.msra.mxu0 0
    %2465 = vmatpush.bf16.msra.mxu0 0
    %2466 = vmatpush.bf16.msra.mxu0 0
    %2467 = vmatpush.bf16.msra.mxu0 0
    %2468 = vmatpush.bf16.msra.mxu0 %v2459
    %2469 = vmatmul.bf16.gmra.mxu0 %v2447
    %v2470 = vpop.f32.mrf.mxu0
    %v2471 = vadd.f32 %v2439, %v2470
    %v2472 = vpop.f32.mrf.mxu0
    %v2473 = vadd.f32 %v2439, %v2472
    %2474 = vmatmul.bf16.gmra.mxu0 %v2450
    %v2475 = vpop.f32.mrf.mxu0
    %v2476 = vadd.f32 %v2439, %v2475
    %v2477 = vpop.f32.mrf.mxu0
    %v2478 = vadd.f32 %v2439, %v2477
    %2479 = vmatmul.bf16.gmra.mxu0 %v2453
    %v2480 = vpop.f32.mrf.mxu0
    %v2481 = vadd.f32 %v2439, %v2480
    %v2482 = vpop.f32.mrf.mxu0
    %v2483 = vadd.f32 %v2439, %v2482
    %2484 = vmatmul.bf16.gmra.mxu0 %v2456
    %v2485 = vpop.f32.mrf.mxu0
    %v2486 = vadd.f32 %v2439, %v2485
    %v2487 = vpop.f32.mrf.mxu0
    %v2488 = vadd.f32 %v2439, %v2487
    %2489 = vdwg.mxu0
    %v2490 = vmax.f32 %v2471, 0.0
    %v2491 = vmax.f32 %v2473, 0.0
    %v2492 = vmax.f32 %v2476, 0.0
    %v2493 = vmax.f32 %v2478, 0.0
    %v2494 = vmax.f32 %v2481, 0.0
    %v2495 = vmax.f32 %v2483, 0.0
    %v2496 = vmax.f32 %v2486, 0.0
    %v2497 = vmax.f32 %v2488, 0.0
    %v2498 = vld [vmem:[%s53] sm:$0xf]
    %v2499 = vld [vmem:[%s53 + $0x4] sm:$0xf]
    %v2500 = vld [vmem:[%s53 + $0x8] sm:$0xf]
    %v2501 = vld [vmem:[%s53 + $0xc] sm:$0xf]
    %v2502 = vld [vmem:[%s55] sm:$0x1]
    %v2503 = vpack.c.bf16 %v2491, %v2490
    %v2504 = vpack.c.bf16 %v2493, %v2492
    %v2505 = vpack.c.bf16 %v2495, %v2494
    %v2506 = vpack.c.bf16 %v2497, %v2496
    %v2508 = vperm.slane %v2502, 0
    %v2514 = vunpack.c.l.b16 %v2498
    %v2515 = vunpack.c.l.b16 %v2499
    %v2516 = vunpack.c.l.b16 %v2500
    %v2517 = vunpack.c.l.b16 %v2501
    %v2518 = vpack.c.b16 %v2515, %v2514
    %v2519 = vpack.c.b16 %v2517, %v2516
    %vm2522 = vcmask 261120
    %v2524 = vsel %vm2522, %v2503, 0
    %v2527 = vsel %vm2522, %v2504, 0
    %v2530 = vsel %vm2522, %v2505, 0
    %v2533 = vsel %vm2522, %v2506, 0
    %2535 = vmatpush.bf16.msra.mxu0 0
    %2536 = vmatpush.bf16.msra.mxu0 0
    %2537 = vmatpush.bf16.msra.mxu0 0
    %2538 = vmatpush.bf16.msra.mxu0 0
    %2539 = vmatpush.bf16.msra.mxu0 0
    %2540 = vmatpush.bf16.msra.mxu0 0
    %2541 = vmatpush.bf16.msra.mxu0 %v2519
    %2542 = vmatpush.bf16.msra.mxu0 %v2518
    %2543 = vmatmul.bf16.gmra.mxu0 %v2524
    %v2544 = vpop.f32.mrf.mxu0
    %v2545 = vadd.f32 %v2508, %v2544
    %v2546 = vpop.f32.mrf.mxu0
    %v2547 = vadd.f32 %v2508, %v2546
    %2548 = vmatmul.bf16.gmra.mxu0 %v2527
    %v2549 = vpop.f32.mrf.mxu0
    %v2550 = vadd.f32 %v2508, %v2549
    %v2551 = vpop.f32.mrf.mxu0
    %v2552 = vadd.f32 %v2508, %v2551
    %2553 = vmatmul.bf16.gmra.mxu0 %v2530
    %v2554 = vpop.f32.mrf.mxu0
    %v2555 = vadd.f32 %v2508, %v2554
    %v2556 = vpop.f32.mrf.mxu0
    %v2557 = vadd.f32 %v2508, %v2556
    %2558 = vmatmul.bf16.gmra.mxu0 %v2533
    %v2559 = vpop.f32.mrf.mxu0
    %v2560 = vadd.f32 %v2508, %v2559
    %v2561 = vpop.f32.mrf.mxu0
    %v2562 = vadd.f32 %v2508, %v2561
    %2563 = vdwg.mxu0
    %v2564 = vmax.f32 %v2545, 0.0
    %v2565 = vmax.f32 %v2547, 0.0
    %v2566 = vmax.f32 %v2550, 0.0
    %v2567 = vmax.f32 %v2552, 0.0
    %v2568 = vmax.f32 %v2555, 0.0
    %v2569 = vmax.f32 %v2557, 0.0
    %v2570 = vmax.f32 %v2560, 0.0
    %v2571 = vmax.f32 %v2562, 0.0
    %s2572 = scalar_lea.vmem %s53, 16
    %v2573 = vld [vmem:[%s2572] sm:$0xf]
    %v2574 = vld [vmem:[%s2572 + $0x4] sm:$0xf]
    %v2575 = vld [vmem:[%s2572 + $0x8] sm:$0xf]
    %v2576 = vld [vmem:[%s2572 + $0xc] sm:$0xf]
    %s2577 = scalar_lea.vmem %s55, 1
    %v2578 = vld [vmem:[%s2577] sm:$0x1]
    %v2579 = vpack.c.bf16 %v2565, %v2564
    %v2580 = vpack.c.bf16 %v2567, %v2566
    %v2581 = vpack.c.bf16 %v2569, %v2568
    %v2582 = vpack.c.bf16 %v2571, %v2570
    %v2584 = vperm.slane %v2578, 0
    %v2590 = vunpack.c.l.b16 %v2573
    %v2591 = vunpack.c.l.b16 %v2574
    %v2592 = vunpack.c.l.b16 %v2575
    %v2593 = vunpack.c.l.b16 %v2576
    %v2594 = vpack.c.b16 %v2591, %v2590
    %v2595 = vpack.c.b16 %v2593, %v2592
    %v2599 = vsel %vm2522, %v2579, 0
    %v2602 = vsel %vm2522, %v2580, 0
    %v2605 = vsel %vm2522, %v2581, 0
    %v2608 = vsel %vm2522, %v2582, 0
    %2610 = vmatpush.bf16.msra.mxu0 0
    %2611 = vmatpush.bf16.msra.mxu0 0
    %2612 = vmatpush.bf16.msra.mxu0 0
    %2613 = vmatpush.bf16.msra.mxu0 0
    %2614 = vmatpush.bf16.msra.mxu0 0
    %2615 = vmatpush.bf16.msra.mxu0 0
    %2616 = vmatpush.bf16.msra.mxu0 %v2595
    %2617 = vmatpush.bf16.msra.mxu0 %v2594
    %2618 = vmatmul.bf16.gmra.mxu0 %v2599
    %v2619 = vpop.f32.mrf.mxu0
    %v2620 = vadd.f32 %v2584, %v2619
    %v2621 = vpop.f32.mrf.mxu0
    %v2622 = vadd.f32 %v2584, %v2621
    %2623 = vmatmul.bf16.gmra.mxu0 %v2602
    %v2624 = vpop.f32.mrf.mxu0
    %v2625 = vadd.f32 %v2584, %v2624
    %v2626 = vpop.f32.mrf.mxu0
    %v2627 = vadd.f32 %v2584, %v2626
    %2628 = vmatmul.bf16.gmra.mxu0 %v2605
    %v2629 = vpop.f32.mrf.mxu0
    %v2630 = vadd.f32 %v2584, %v2629
    %v2631 = vpop.f32.mrf.mxu0
    %v2632 = vadd.f32 %v2584, %v2631
    %2633 = vmatmul.bf16.gmra.mxu0 %v2608
    %v2634 = vpop.f32.mrf.mxu0
    %v2635 = vadd.f32 %v2584, %v2634
    %v2636 = vpop.f32.mrf.mxu0
    %v2637 = vadd.f32 %v2584, %v2636
    %2638 = vdwg.mxu0
    %v2639 = vmax.f32 %v2620, 0.0
    %v2640 = vmax.f32 %v2622, 0.0
    %v2641 = vmax.f32 %v2625, 0.0
    %v2642 = vmax.f32 %v2627, 0.0
    %v2643 = vmax.f32 %v2630, 0.0
    %v2644 = vmax.f32 %v2632, 0.0
    %v2645 = vmax.f32 %v2635, 0.0
    %v2646 = vmax.f32 %v2637, 0.0
    %s2647 = scalar_lea.vmem %s53, 32
    %v2648 = vld [vmem:[%s2647] sm:$0xf]
    %v2649 = vld [vmem:[%s2647 + $0x4] sm:$0xf]
    %v2650 = vld [vmem:[%s2647 + $0x8] sm:$0xf]
    %v2651 = vld [vmem:[%s2647 + $0xc] sm:$0xf]
    %s2652 = scalar_lea.vmem %s55, 2
    %v2653 = vld [vmem:[%s2652] sm:$0x1]
    %v2654 = vpack.c.bf16 %v2640, %v2639
    %v2655 = vpack.c.bf16 %v2642, %v2641
    %v2656 = vpack.c.bf16 %v2644, %v2643
    %v2657 = vpack.c.bf16 %v2646, %v2645
    %v2659 = vperm.slane %v2653, 0
    %v2665 = vunpack.c.l.b16 %v2648
    %v2666 = vunpack.c.l.b16 %v2649
    %v2667 = vunpack.c.l.b16 %v2650
    %v2668 = vunpack.c.l.b16 %v2651
    %v2669 = vpack.c.b16 %v2666, %v2665
    %v2670 = vpack.c.b16 %v2668, %v2667
    %v2674 = vsel %vm2522, %v2654, 0
    %v2677 = vsel %vm2522, %v2655, 0
    %v2680 = vsel %vm2522, %v2656, 0
    %v2683 = vsel %vm2522, %v2657, 0
    %2685 = vmatpush.bf16.msra.mxu0 0
    %2686 = vmatpush.bf16.msra.mxu0 0
    %2687 = vmatpush.bf16.msra.mxu0 0
    %2688 = vmatpush.bf16.msra.mxu0 0
    %2689 = vmatpush.bf16.msra.mxu0 0
    %2690 = vmatpush.bf16.msra.mxu0 0
    %2691 = vmatpush.bf16.msra.mxu0 %v2670
    %2692 = vmatpush.bf16.msra.mxu0 %v2669
    %2693 = vmatmul.bf16.gmra.mxu0 %v2674
    %v2694 = vpop.f32.mrf.mxu0
    %v2695 = vadd.f32 %v2659, %v2694
    %v2696 = vpop.f32.mrf.mxu0
    %v2697 = vadd.f32 %v2659, %v2696
    %2698 = vmatmul.bf16.gmra.mxu0 %v2677
    %v2699 = vpop.f32.mrf.mxu0
    %v2700 = vadd.f32 %v2659, %v2699
    %v2701 = vpop.f32.mrf.mxu0
    %v2702 = vadd.f32 %v2659, %v2701
    %2703 = vmatmul.bf16.gmra.mxu0 %v2680
    %v2704 = vpop.f32.mrf.mxu0
    %v2705 = vadd.f32 %v2659, %v2704
    %v2706 = vpop.f32.mrf.mxu0
    %v2707 = vadd.f32 %v2659, %v2706
    %2708 = vmatmul.bf16.gmra.mxu0 %v2683
    %v2709 = vpop.f32.mrf.mxu0
    %v2710 = vadd.f32 %v2659, %v2709
    %v2711 = vpop.f32.mrf.mxu0
    %v2712 = vadd.f32 %v2659, %v2711
    %2713 = vdwg.mxu0
    %v2714 = vmax.f32 %v2695, 0.0
    %v2715 = vmax.f32 %v2697, 0.0
    %v2716 = vmax.f32 %v2700, 0.0
    %v2717 = vmax.f32 %v2702, 0.0
    %v2718 = vmax.f32 %v2705, 0.0
    %v2719 = vmax.f32 %v2707, 0.0
    %v2720 = vmax.f32 %v2710, 0.0
    %v2721 = vmax.f32 %v2712, 0.0
    %v2722 = vld [vmem:[%s57] sm:$0xf]
    %v2723 = vld [vmem:[%s57 + $0x4] sm:$0xf]
    %v2724 = vld [vmem:[%s57 + $0x8] sm:$0xf]
    %v2725 = vld [vmem:[%s57 + $0xc] sm:$0xf]
    %v2726 = vld [vmem:[%s59] sm:$0x1]
    %v2727 = vpack.c.bf16 %v2715, %v2714
    %v2728 = vpack.c.bf16 %v2717, %v2716
    %v2729 = vpack.c.bf16 %v2719, %v2718
    %v2730 = vpack.c.bf16 %v2721, %v2720
    %v2732 = vperm.slane %v2726, 0
    %v2738 = vunpack.c.l.b16 %v2722
    %v2739 = vunpack.c.l.b16 %v2723
    %v2740 = vunpack.c.l.b16 %v2724
    %v2741 = vunpack.c.l.b16 %v2725
    %v2742 = vpack.c.b16 %v2739, %v2738
    %v2743 = vpack.c.b16 %v2741, %v2740
    %v2747 = vsel %vm2522, %v2727, 0
    %v2750 = vsel %vm2522, %v2728, 0
    %v2753 = vsel %vm2522, %v2729, 0
    %v2756 = vsel %vm2522, %v2730, 0
    %2758 = vmatpush.bf16.msra.mxu0 0
    %2759 = vmatpush.bf16.msra.mxu0 0
    %2760 = vmatpush.bf16.msra.mxu0 0
    %2761 = vmatpush.bf16.msra.mxu0 0
    %2762 = vmatpush.bf16.msra.mxu0 0
    %2763 = vmatpush.bf16.msra.mxu0 0
    %2764 = vmatpush.bf16.msra.mxu0 %v2743
    %2765 = vmatpush.bf16.msra.mxu0 %v2742
    %2766 = vmatmul.bf16.gmra.mxu0 %v2747
    %v2767 = vpop.f32.mrf.mxu0
    %v2768 = vadd.f32 %v2732, %v2767
    %v2769 = vpop.f32.mrf.mxu0
    %v2770 = vadd.f32 %v2732, %v2769
    %2771 = vmatmul.bf16.gmra.mxu0 %v2750
    %v2772 = vpop.f32.mrf.mxu0
    %v2773 = vadd.f32 %v2732, %v2772
    %v2774 = vpop.f32.mrf.mxu0
    %v2775 = vadd.f32 %v2732, %v2774
    %2776 = vmatmul.bf16.gmra.mxu0 %v2753
    %v2777 = vpop.f32.mrf.mxu0
    %v2778 = vadd.f32 %v2732, %v2777
    %v2779 = vpop.f32.mrf.mxu0
    %v2780 = vadd.f32 %v2732, %v2779
    %2781 = vmatmul.bf16.gmra.mxu0 %v2756
    %v2782 = vpop.f32.mrf.mxu0
    %v2783 = vadd.f32 %v2732, %v2782
    %v2784 = vpop.f32.mrf.mxu0
    %v2785 = vadd.f32 %v2732, %v2784
    %2786 = vdwg.mxu0
    %vm2787 = vcmask 23552
    %2788 = vst.msk [vmem:[%s67] sm:$0xff] %vm2787, %v2768
    %2789 = vst.msk [vmem:[%s67 + $0x8] sm:$0xff] %vm2787, %v2770
    %2790 = vst.msk [vmem:[%s67 + $0x10] sm:$0xff] %vm2787, %v2773
    %2791 = vst.msk [vmem:[%s67 + $0x18] sm:$0xff] %vm2787, %v2775
    %2792 = vst.msk [vmem:[%s67 + $0x20] sm:$0xff] %vm2787, %v2778
    %2793 = vst.msk [vmem:[%s67 + $0x28] sm:$0xff] %vm2787, %v2780
    %2794 = vst.msk [vmem:[%s67 + $0x30] sm:$0xff] %vm2787, %v2783
    %2795 = vst.msk [vmem:[%s67 + $0x38] sm:$0xff] %vm2787, %v2785
    // Predicated region
    $region130: #{sde_vae_forward.1} parent=1 // pred_check
      _
    $region131: #{sde_vae_forward.1} parent=1 // pred_check_branch
      %2797 = sbr.rel (0) target = $region133
    $region132: #{sde_vae_forward.1} parent=1 // pred_region
      _
    $region133: #{sde_vae_forward.1} parent=1 // pred_fallthru
      _
    // Predicated region
    $region134: #{sde_vae_forward.1} parent=1 // pred_check
      _
    $region135: #{sde_vae_forward.1} parent=1 // pred_check_branch
      %2799 = sbr.rel (0) target = $region137
    $region136: #{sde_vae_forward.1} parent=1 // pred_region
      _
    $region137: #{sde_vae_forward.1} parent=1 // pred_fallthru
      _
    // Predicated region
    $region138: #{sde_vae_forward.1} parent=1 // pred_check
      _
    $region139: #{sde_vae_forward.1} parent=1 // pred_check_branch
      %2801 = sbr.rel (0) target = $region141
    $region140: #{sde_vae_forward.1} parent=1 // pred_region
      _
    $region141: #{sde_vae_forward.1} parent=1 // pred_fallthru
      _
    // Predicated region
    $region142: #{sde_vae_forward.1} parent=1 // pred_check
      _
    $region143: #{sde_vae_forward.1} parent=1 // pred_check_branch
      %2803 = sbr.rel (0) target = $region145
    $region144: #{sde_vae_forward.1} parent=1 // pred_region
      _
    $region145: #{sde_vae_forward.1} parent=1 // pred_fallthru
      _
    // Predicated region
    $region146: #{sde_vae_forward.1} parent=1 // pred_check
      _
    $region147: #{sde_vae_forward.1} parent=1 // pred_check_branch
      %2805 = sbr.rel (0) target = $region149
    $region148: #{sde_vae_forward.1} parent=1 // pred_region
      _
    $region149: #{sde_vae_forward.1} parent=1 // pred_fallthru
      _
    // Predicated region
    $region150: #{sde_vae_forward.1} parent=1 // pred_check
      _
    $region151: #{sde_vae_forward.1} parent=1 // pred_check_branch
      %2807 = sbr.rel (0) target = $region153
    $region152: #{sde_vae_forward.1} parent=1 // pred_region
      _
    $region153: #{sde_vae_forward.1} parent=1 // pred_fallthru
      _
    // Predicated region
    $region154: #{sde_vae_forward.1} parent=1 // pred_check
      _
    $region155: #{sde_vae_forward.1} parent=1 // pred_check_branch
      %2809 = sbr.rel (0) target = $region157
    $region156: #{sde_vae_forward.1} parent=1 // pred_region
      _
    $region157: #{sde_vae_forward.1} parent=1 // pred_fallthru
      _
    // Predicated region
    $region158: #{sde_vae_forward.1} parent=1 // pred_check
      _
    $region159: #{sde_vae_forward.1} parent=1 // pred_check_branch
      %2811 = sbr.rel (0) target = $region161
    $region160: #{sde_vae_forward.1} parent=1 // pred_region
      _
    $region161: #{sde_vae_forward.1} parent=1 // pred_fallthru
      _
    %2812 = vsyncpa [#allocation4], 1
    %2813 = vsyncpa [#allocation5], 1

</llo_original>
